<compile_context>
chip_gen: v7x
topology: tpu7x:2x2x1
jax: 0.10.0
libtpu: 0.0.40
codegen_flags: <defaults>
</compile_context>

<pallas_src>
import jax
import jax.numpy as jnp
from jax import lax
from jax.experimental import pallas as pl
from jax.experimental.pallas import tpu as pltpu

C_OUT = 16
H = 128           # fixed by the module: LSTM input_size = 16 * 128
HID = 32
D_IN = C_OUT * H  # 2048
G = 4 * HID       # 128 gate lanes (i|f|g|o)


# ----------------------------------------------------------------------------
# Kernel 1: conv(1->16, 3x3, pad=1) + bias + ReLU + input-gate projection.
# Output is the (B, W, 128) gate pre-activation buffer (x @ W_ih^T + b_ih + b_hh).
# ----------------------------------------------------------------------------
def conv_gate_kernel(x_ref, cw_ref, cb_ref, wih_ref, b_ref, gx_ref):
    # x_ref:   (1, W+2, H+2)  padded, (w,h)-transposed input slab for one batch element
    # cw_ref:  (144,)  SMEM   conv weights flattened [c, dh, dw]
    # cb_ref:  (16,)   SMEM   conv bias
    # wih_ref: (2048, 128)    W_ih^T (row c*128+h, gate order i|f|g|o along lanes)
    # b_ref:   (1, 128)       b_ih + b_hh
    # gx_ref:  (1, W, 128)    output: gate pre-activations for this batch element
    Wp2 = x_ref.shape[1]
    W_ = Wp2 - 2
    x = x_ref[0]  # (W+2, H+2)

    # Hoist the 9 shifted windows out of the channel loop (feedback #2):
    # window (dh, dw) = x_pad[h+dh, w+dw] for all (w, h)  ->  x[dw:dw+W, dh:dh+H].
    wins = [x[dw:dw + W_, dh:dh + H] for dh in range(3) for dw in range(3)]

    # TODO(synk): tile W inside this kernel for very large widths (acc/windows are
    # (W, 128) f32 live values); at demo sizes everything fits in vregs/VMEM easily.
    gx = jnp.zeros((W_, G), jnp.float32)
    for c in range(C_OUT):
        acc = jnp.zeros((W_, H), jnp.float32)
        for k in range(9):                       # k = dh*3 + dw, matches cw layout
            acc = acc + cw_ref[c * 9 + k] * wins[k]
        act = jnp.maximum(acc + cb_ref[c], 0.0)  # (W, 128) ReLU'd channel c
        # Contribution of flat features [c*128, (c+1)*128) to the gate projection.
        gx = gx + jnp.dot(act, wih_ref[c * H:(c + 1) * H, :],
                          preferred_element_type=jnp.float32)
    gx_ref[0] = gx + b_ref[...]                  # lane-dense, unmasked (W, 128) store


def conv_gate_proj(x_pad_t, conv_w_flat, conv_b, wih_t, lstm_b):
    B, Wp2, Hp2 = x_pad_t.shape
    W_ = Wp2 - 2
    return pl.pallas_call(
        conv_gate_kernel,
        out_shape=jax.ShapeDtypeStruct((B, W_, G), jnp.float32),
        grid=(B,),
        in_specs=[
            pl.BlockSpec((1, Wp2, Hp2), lambda i: (i, 0, 0)),
            pl.BlockSpec(memory_space=pltpu.MemorySpace.SMEM),
            pl.BlockSpec(memory_space=pltpu.MemorySpace.SMEM),
            pl.BlockSpec((D_IN, G), lambda i: (0, 0)),   # W_ih^T, resident across grid
            pl.BlockSpec((1, G), lambda i: (0, 0)),      # combined LSTM bias
        ],
        out_specs=pl.BlockSpec((1, W_, G), lambda i: (i, 0, 0)),
        compiler_params=pltpu.CompilerParams(
            dimension_semantics=("parallel",)),          # batch elems independent (v7x 2 TCs)
    )(x_pad_t, conv_w_flat, conv_b, wih_t, lstm_b)


# ----------------------------------------------------------------------------
# Kernel 2: LSTM recurrence over pre-projected gate inputs + Linear(32,1) + sigmoid.
# ----------------------------------------------------------------------------
def lstm_fc_kernel(gx_ref, whh_ref, fcw_ref, fcb_ref, o_ref):
    # gx_ref:  (B, T, 128)  x @ W_ih^T + b_ih + b_hh  (gate order i|f|g|o on lanes)
    # whh_ref: (32, 128)    W_hh^T
    # fcw_ref: (32, 1)      fc weight^T
    # fcb_ref: (1, 1)       fc bias
    # o_ref:   (B, 1)
    B, T, _ = gx_ref.shape
    whh = whh_ref[...]

    def step(t, carry):
        h, c = carry
        g_t = gx_ref[:, pl.ds(t, 1), :][:, 0, :]    # (B, 128) pre-projected gate input
        gates = g_t + jnp.dot(h, whh, preferred_element_type=jnp.float32)
        s = jax.nn.sigmoid(gates)                    # full-width EUP pass (feedback #7)
        th = jnp.tanh(gates)                         # full-width EUP pass
        i_g = s[:, 0:HID]
        f_g = s[:, HID:2 * HID]
        g_g = th[:, 2 * HID:3 * HID]
        o_g = s[:, 3 * HID:4 * HID]
        c = f_g * c + i_g * g_g
        h = o_g * jnp.tanh(c)
        return h, c

    h0 = jnp.zeros((B, HID), jnp.float32)
    c0 = jnp.zeros((B, HID), jnp.float32)
    h, _ = lax.fori_loop(0, T, step, (h0, c0),
                         unroll=True if T <= 32 else 8)
    logits = jnp.dot(h, fcw_ref[...], preferred_element_type=jnp.float32) + fcb_ref[...]
    o_ref[...] = jax.nn.sigmoid(logits)


def lstm_fc(gx, whh_t, fcw_t, fcb):
    B = gx.shape[0]
    return pl.pallas_call(
        lstm_fc_kernel,
        out_shape=jax.ShapeDtypeStruct((B, 1), jnp.float32),
        in_specs=[pl.BlockSpec(memory_space=pltpu.MemorySpace.VMEM)] * 4,
        out_specs=pl.BlockSpec(memory_space=pltpu.MemorySpace.VMEM),
    )(gx, whh_t, fcw_t, fcb)


# ----------------------------------------------------------------------------
# Full forward pass
# ----------------------------------------------------------------------------
@jax.jit
def mi_modelo_forward(x, params):
    # x: (B, 1, 128, W) float32 (NCHW, C=1)
    # 1-pixel halo pad + transpose so H=128 sits on the lane axis: (B, W+2, H+2).
    # TODO(synk): fold the pad/transpose halo handling into the conv kernel to skip
    # this small XLA relayout pass over the input.
    x_pad = jnp.pad(x[:, 0], ((0, 0), (1, 1), (1, 1)))   # (B, H+2, W+2)
    x_pad_t = jnp.transpose(x_pad, (0, 2, 1))            # (B, W+2, H+2)

    conv_w_flat = params["conv_w"].reshape(-1)           # [c, dh, dw]
    lstm_b = (params["b_ih"] + params["b_hh"]).reshape(1, G)

    gx = conv_gate_proj(x_pad_t, conv_w_flat, params["conv_b"],
                        params["w_ih"].T, lstm_b)         # (B, W, 128)
    return lstm_fc(gx, params["w_hh"].T, params["fc_w"].T,
                   params["fc_b"].reshape(1, 1))          # (B, 1)


# ----------------------------------------------------------------------------
# Pure-JAX reference (for correctness check)
# ----------------------------------------------------------------------------
def reference_forward(x, params):
    y = lax.conv_general_dilated(
        x, params["conv_w"], window_strides=(1, 1), padding=((1, 1), (1, 1)),
        dimension_numbers=("NCHW", "OIHW", "NCHW"))
    y = jnp.maximum(y + params["conv_b"][None, :, None, None], 0.0)
    y = jnp.transpose(y, (0, 3, 1, 2))                    # (B, W, C, H)
    B, T = y.shape[0], y.shape[1]
    y = y.reshape(B, T, -1)
    h = jnp.zeros((B, HID), jnp.float32)
    c = jnp.zeros((B, HID), jnp.float32)
    for t in range(T):
        gates = y[:, t] @ params["w_ih"].T + params["b_ih"] + h @ params["w_hh"].T + params["b_hh"]
        i_g = jax.nn.sigmoid(gates[:, 0:HID])
        f_g = jax.nn.sigmoid(gates[:, HID:2 * HID])
        g_g = jnp.tanh(gates[:, 2 * HID:3 * HID])
        o_g = jax.nn.sigmoid(gates[:, 3 * HID:4 * HID])
        c = f_g * c + i_g * g_g
        h = o_g * jnp.tanh(c)
    return jax.nn.sigmoid(h @ params["fc_w"].T + params["fc_b"])


if __name__ == "__main__":
    B, W = 2, 8                     # batch=2, seq(width)=8; H=128 is fixed by the module
    key = jax.random.PRNGKey(0)
    ks = jax.random.split(key, 9)

    params = {
        "conv_w": jax.random.normal(ks[0], (C_OUT, 1, 3, 3), jnp.float32) * 0.3,
        "conv_b": jax.random.normal(ks[1], (C_OUT,), jnp.float32) * 0.1,
        "w_ih":   jax.random.normal(ks[2], (4 * HID, D_IN), jnp.float32) * 0.02,
        "w_hh":   jax.random.normal(ks[3], (4 * HID, HID), jnp.float32) * 0.1,
        "b_ih":   jax.random.normal(ks[4], (4 * HID,), jnp.float32) * 0.1,
        "b_hh":   jax.random.normal(ks[5], (4 * HID,), jnp.float32) * 0.1,
        "fc_w":   jax.random.normal(ks[6], (1, HID), jnp.float32) * 0.3,
        "fc_b":   jax.random.normal(ks[7], (1,), jnp.float32) * 0.1,
    }
    x = jax.random.normal(ks[8], (B, 1, H, W), jnp.float32)

    out = jax.block_until_ready(mi_modelo_forward(x, params))
    ref = jax.block_until_ready(reference_forward(x, params))

    assert out.shape == (B, 1), out.shape
    assert jnp.allclose(out, ref, atol=1e-4, rtol=1e-4), (out, ref)
    print("KERNEL_OK")
</pallas_src>

<mosaic_0001>
module attributes {stable_mosaic.version = 11 : i64} {
  func.func @lstm_fc_kernel(%arg0: memref<2x8x128xf32, #tpu.memory_space<vmem>>, %arg1: memref<32x128xf32, #tpu.memory_space<vmem>>, %arg2: memref<32x1xf32, #tpu.memory_space<vmem>>, %arg3: memref<1x1xf32, #tpu.memory_space<vmem>>, %arg4: memref<2x1xf32, #tpu.memory_space<vmem>>) attributes {dimension_semantics = [], scalar_prefetch = 0 : i64, scratch_operands = 0 : i64, tpu.core_type = #tpu.core_type<tc>} {
    %c0 = arith.constant 0 : index
    %c0_0 = arith.constant 0 : index
    %0 = vector.load %arg1[%c0, %c0_0] : memref<32x128xf32, #tpu.memory_space<vmem>>, vector<32x128xf32>
    %cst = arith.constant 0.000000e+00 : f32
    %1 = vector.broadcast %cst : f32 to vector<2x32xf32>
    %cst_1 = arith.constant 0.000000e+00 : f32
    %2 = vector.broadcast %cst_1 : f32 to vector<2x32xf32>
    %c0_i32 = arith.constant 0 : i32
    %c0_2 = arith.constant 0 : index
    %3 = arith.index_cast %c0_i32 : i32 to index
    %c0_3 = arith.constant 0 : index
    %4 = vector.load %arg0[%c0_2, %3, %c0_3] : memref<2x8x128xf32, #tpu.memory_space<vmem>>, vector<2x1x128xf32>
    %5 = vector.shape_cast %4 : vector<2x1x128xf32> to vector<2x128xf32>
    %cst_4 = arith.constant dense<0.000000e+00> : vector<2x128xf32>
    %6 = tpu.matmul %1, %0, %cst_4 {dimension_numbers = #tpu.dot_dimension_numbers<[1], [0], [0], [1], [0, 0, 1, 1], [], []>} : vector<2x32xf32>, vector<32x128xf32>, vector<2x128xf32> -> vector<2x128xf32>
    %7 = arith.addf %5, %6 : vector<2x128xf32>
    %8 = arith.negf %7 : vector<2x128xf32>
    %9 = math.exp %8 : vector<2x128xf32>
    %cst_5 = arith.constant 1.000000e+00 : f32
    %10 = vector.broadcast %cst_5 : f32 to vector<2x128xf32>
    %11 = arith.addf %10, %9 : vector<2x128xf32>
    %12 = arith.divf %10, %11 : vector<2x128xf32>
    %13 = math.tanh %7 : vector<2x128xf32>
    %14 = vector.extract_strided_slice %12 {offsets = [0, 0], sizes = [2, 32], strides = [1, 1]} : vector<2x128xf32> to vector<2x32xf32>
    %15 = vector.extract_strided_slice %12 {offsets = [0, 32], sizes = [2, 32], strides = [1, 1]} : vector<2x128xf32> to vector<2x32xf32>
    %16 = vector.extract_strided_slice %13 {offsets = [0, 64], sizes = [2, 32], strides = [1, 1]} : vector<2x128xf32> to vector<2x32xf32>
    %17 = vector.extract_strided_slice %12 {offsets = [0, 96], sizes = [2, 32], strides = [1, 1]} : vector<2x128xf32> to vector<2x32xf32>
    %18 = arith.mulf %15, %2 : vector<2x32xf32>
    %19 = arith.mulf %14, %16 : vector<2x32xf32>
    %20 = arith.addf %18, %19 : vector<2x32xf32>
    %21 = math.tanh %20 : vector<2x32xf32>
    %22 = arith.mulf %17, %21 : vector<2x32xf32>
    %c1_i32 = arith.constant 1 : i32
    %c0_6 = arith.constant 0 : index
    %23 = arith.index_cast %c1_i32 : i32 to index
    %c0_7 = arith.constant 0 : index
    %24 = vector.load %arg0[%c0_6, %23, %c0_7] : memref<2x8x128xf32, #tpu.memory_space<vmem>>, vector<2x1x128xf32>
    %25 = vector.shape_cast %24 : vector<2x1x128xf32> to vector<2x128xf32>
    %cst_8 = arith.constant dense<0.000000e+00> : vector<2x128xf32>
    %26 = tpu.matmul %22, %0, %cst_8 {dimension_numbers = #tpu.dot_dimension_numbers<[1], [0], [0], [1], [0, 0, 1, 1], [], []>} : vector<2x32xf32>, vector<32x128xf32>, vector<2x128xf32> -> vector<2x128xf32>
    %27 = arith.addf %25, %26 : vector<2x128xf32>
    %28 = arith.negf %27 : vector<2x128xf32>
    %29 = math.exp %28 : vector<2x128xf32>
    %cst_9 = arith.constant 1.000000e+00 : f32
    %30 = vector.broadcast %cst_9 : f32 to vector<2x128xf32>
    %31 = arith.addf %30, %29 : vector<2x128xf32>
    %32 = arith.divf %30, %31 : vector<2x128xf32>
    %33 = math.tanh %27 : vector<2x128xf32>
    %34 = vector.extract_strided_slice %32 {offsets = [0, 0], sizes = [2, 32], strides = [1, 1]} : vector<2x128xf32> to vector<2x32xf32>
    %35 = vector.extract_strided_slice %32 {offsets = [0, 32], sizes = [2, 32], strides = [1, 1]} : vector<2x128xf32> to vector<2x32xf32>
    %36 = vector.extract_strided_slice %33 {offsets = [0, 64], sizes = [2, 32], strides = [1, 1]} : vector<2x128xf32> to vector<2x32xf32>
    %37 = vector.extract_strided_slice %32 {offsets = [0, 96], sizes = [2, 32], strides = [1, 1]} : vector<2x128xf32> to vector<2x32xf32>
    %38 = arith.mulf %35, %20 : vector<2x32xf32>
    %39 = arith.mulf %34, %36 : vector<2x32xf32>
    %40 = arith.addf %38, %39 : vector<2x32xf32>
    %41 = math.tanh %40 : vector<2x32xf32>
    %42 = arith.mulf %37, %41 : vector<2x32xf32>
    %c2_i32 = arith.constant 2 : i32
    %c0_10 = arith.constant 0 : index
    %43 = arith.index_cast %c2_i32 : i32 to index
    %c0_11 = arith.constant 0 : index
    %44 = vector.load %arg0[%c0_10, %43, %c0_11] : memref<2x8x128xf32, #tpu.memory_space<vmem>>, vector<2x1x128xf32>
    %45 = vector.shape_cast %44 : vector<2x1x128xf32> to vector<2x128xf32>
    %cst_12 = arith.constant dense<0.000000e+00> : vector<2x128xf32>
    %46 = tpu.matmul %42, %0, %cst_12 {dimension_numbers = #tpu.dot_dimension_numbers<[1], [0], [0], [1], [0, 0, 1, 1], [], []>} : vector<2x32xf32>, vector<32x128xf32>, vector<2x128xf32> -> vector<2x128xf32>
    %47 = arith.addf %45, %46 : vector<2x128xf32>
    %48 = arith.negf %47 : vector<2x128xf32>
    %49 = math.exp %48 : vector<2x128xf32>
    %cst_13 = arith.constant 1.000000e+00 : f32
    %50 = vector.broadcast %cst_13 : f32 to vector<2x128xf32>
    %51 = arith.addf %50, %49 : vector<2x128xf32>
    %52 = arith.divf %50, %51 : vector<2x128xf32>
    %53 = math.tanh %47 : vector<2x128xf32>
    %54 = vector.extract_strided_slice %52 {offsets = [0, 0], sizes = [2, 32], strides = [1, 1]} : vector<2x128xf32> to vector<2x32xf32>
    %55 = vector.extract_strided_slice %52 {offsets = [0, 32], sizes = [2, 32], strides = [1, 1]} : vector<2x128xf32> to vector<2x32xf32>
    %56 = vector.extract_strided_slice %53 {offsets = [0, 64], sizes = [2, 32], strides = [1, 1]} : vector<2x128xf32> to vector<2x32xf32>
    %57 = vector.extract_strided_slice %52 {offsets = [0, 96], sizes = [2, 32], strides = [1, 1]} : vector<2x128xf32> to vector<2x32xf32>
    %58 = arith.mulf %55, %40 : vector<2x32xf32>
    %59 = arith.mulf %54, %56 : vector<2x32xf32>
    %60 = arith.addf %58, %59 : vector<2x32xf32>
    %61 = math.tanh %60 : vector<2x32xf32>
    %62 = arith.mulf %57, %61 : vector<2x32xf32>
    %c3_i32 = arith.constant 3 : i32
    %c0_14 = arith.constant 0 : index
    %63 = arith.index_cast %c3_i32 : i32 to index
    %c0_15 = arith.constant 0 : index
    %64 = vector.load %arg0[%c0_14, %63, %c0_15] : memref<2x8x128xf32, #tpu.memory_space<vmem>>, vector<2x1x128xf32>
    %65 = vector.shape_cast %64 : vector<2x1x128xf32> to vector<2x128xf32>
    %cst_16 = arith.constant dense<0.000000e+00> : vector<2x128xf32>
    %66 = tpu.matmul %62, %0, %cst_16 {dimension_numbers = #tpu.dot_dimension_numbers<[1], [0], [0], [1], [0, 0, 1, 1], [], []>} : vector<2x32xf32>, vector<32x128xf32>, vector<2x128xf32> -> vector<2x128xf32>
    %67 = arith.addf %65, %66 : vector<2x128xf32>
    %68 = arith.negf %67 : vector<2x128xf32>
    %69 = math.exp %68 : vector<2x128xf32>
    %cst_17 = arith.constant 1.000000e+00 : f32
    %70 = vector.broadcast %cst_17 : f32 to vector<2x128xf32>
    %71 = arith.addf %70, %69 : vector<2x128xf32>
    %72 = arith.divf %70, %71 : vector<2x128xf32>
    %73 = math.tanh %67 : vector<2x128xf32>
    %74 = vector.extract_strided_slice %72 {offsets = [0, 0], sizes = [2, 32], strides = [1, 1]} : vector<2x128xf32> to vector<2x32xf32>
    %75 = vector.extract_strided_slice %72 {offsets = [0, 32], sizes = [2, 32], strides = [1, 1]} : vector<2x128xf32> to vector<2x32xf32>
    %76 = vector.extract_strided_slice %73 {offsets = [0, 64], sizes = [2, 32], strides = [1, 1]} : vector<2x128xf32> to vector<2x32xf32>
    %77 = vector.extract_strided_slice %72 {offsets = [0, 96], sizes = [2, 32], strides = [1, 1]} : vector<2x128xf32> to vector<2x32xf32>
    %78 = arith.mulf %75, %60 : vector<2x32xf32>
    %79 = arith.mulf %74, %76 : vector<2x32xf32>
    %80 = arith.addf %78, %79 : vector<2x32xf32>
    %81 = math.tanh %80 : vector<2x32xf32>
    %82 = arith.mulf %77, %81 : vector<2x32xf32>
    %c4_i32 = arith.constant 4 : i32
    %c0_18 = arith.constant 0 : index
    %83 = arith.index_cast %c4_i32 : i32 to index
    %c0_19 = arith.constant 0 : index
    %84 = vector.load %arg0[%c0_18, %83, %c0_19] : memref<2x8x128xf32, #tpu.memory_space<vmem>>, vector<2x1x128xf32>
    %85 = vector.shape_cast %84 : vector<2x1x128xf32> to vector<2x128xf32>
    %cst_20 = arith.constant dense<0.000000e+00> : vector<2x128xf32>
    %86 = tpu.matmul %82, %0, %cst_20 {dimension_numbers = #tpu.dot_dimension_numbers<[1], [0], [0], [1], [0, 0, 1, 1], [], []>} : vector<2x32xf32>, vector<32x128xf32>, vector<2x128xf32> -> vector<2x128xf32>
    %87 = arith.addf %85, %86 : vector<2x128xf32>
    %88 = arith.negf %87 : vector<2x128xf32>
    %89 = math.exp %88 : vector<2x128xf32>
    %cst_21 = arith.constant 1.000000e+00 : f32
    %90 = vector.broadcast %cst_21 : f32 to vector<2x128xf32>
    %91 = arith.addf %90, %89 : vector<2x128xf32>
    %92 = arith.divf %90, %91 : vector<2x128xf32>
    %93 = math.tanh %87 : vector<2x128xf32>
    %94 = vector.extract_strided_slice %92 {offsets = [0, 0], sizes = [2, 32], strides = [1, 1]} : vector<2x128xf32> to vector<2x32xf32>
    %95 = vector.extract_strided_slice %92 {offsets = [0, 32], sizes = [2, 32], strides = [1, 1]} : vector<2x128xf32> to vector<2x32xf32>
    %96 = vector.extract_strided_slice %93 {offsets = [0, 64], sizes = [2, 32], strides = [1, 1]} : vector<2x128xf32> to vector<2x32xf32>
    %97 = vector.extract_strided_slice %92 {offsets = [0, 96], sizes = [2, 32], strides = [1, 1]} : vector<2x128xf32> to vector<2x32xf32>
    %98 = arith.mulf %95, %80 : vector<2x32xf32>
    %99 = arith.mulf %94, %96 : vector<2x32xf32>
    %100 = arith.addf %98, %99 : vector<2x32xf32>
    %101 = math.tanh %100 : vector<2x32xf32>
    %102 = arith.mulf %97, %101 : vector<2x32xf32>
    %c5_i32 = arith.constant 5 : i32
    %c0_22 = arith.constant 0 : index
    %103 = arith.index_cast %c5_i32 : i32 to index
    %c0_23 = arith.constant 0 : index
    %104 = vector.load %arg0[%c0_22, %103, %c0_23] : memref<2x8x128xf32, #tpu.memory_space<vmem>>, vector<2x1x128xf32>
    %105 = vector.shape_cast %104 : vector<2x1x128xf32> to vector<2x128xf32>
    %cst_24 = arith.constant dense<0.000000e+00> : vector<2x128xf32>
    %106 = tpu.matmul %102, %0, %cst_24 {dimension_numbers = #tpu.dot_dimension_numbers<[1], [0], [0], [1], [0, 0, 1, 1], [], []>} : vector<2x32xf32>, vector<32x128xf32>, vector<2x128xf32> -> vector<2x128xf32>
    %107 = arith.addf %105, %106 : vector<2x128xf32>
    %108 = arith.negf %107 : vector<2x128xf32>
    %109 = math.exp %108 : vector<2x128xf32>
    %cst_25 = arith.constant 1.000000e+00 : f32
    %110 = vector.broadcast %cst_25 : f32 to vector<2x128xf32>
    %111 = arith.addf %110, %109 : vector<2x128xf32>
    %112 = arith.divf %110, %111 : vector<2x128xf32>
    %113 = math.tanh %107 : vector<2x128xf32>
    %114 = vector.extract_strided_slice %112 {offsets = [0, 0], sizes = [2, 32], strides = [1, 1]} : vector<2x128xf32> to vector<2x32xf32>
    %115 = vector.extract_strided_slice %112 {offsets = [0, 32], sizes = [2, 32], strides = [1, 1]} : vector<2x128xf32> to vector<2x32xf32>
    %116 = vector.extract_strided_slice %113 {offsets = [0, 64], sizes = [2, 32], strides = [1, 1]} : vector<2x128xf32> to vector<2x32xf32>
    %117 = vector.extract_strided_slice %112 {offsets = [0, 96], sizes = [2, 32], strides = [1, 1]} : vector<2x128xf32> to vector<2x32xf32>
    %118 = arith.mulf %115, %100 : vector<2x32xf32>
    %119 = arith.mulf %114, %116 : vector<2x32xf32>
    %120 = arith.addf %118, %119 : vector<2x32xf32>
    %121 = math.tanh %120 : vector<2x32xf32>
    %122 = arith.mulf %117, %121 : vector<2x32xf32>
    %c6_i32 = arith.constant 6 : i32
    %c0_26 = arith.constant 0 : index
    %123 = arith.index_cast %c6_i32 : i32 to index
    %c0_27 = arith.constant 0 : index
    %124 = vector.load %arg0[%c0_26, %123, %c0_27] : memref<2x8x128xf32, #tpu.memory_space<vmem>>, vector<2x1x128xf32>
    %125 = vector.shape_cast %124 : vector<2x1x128xf32> to vector<2x128xf32>
    %cst_28 = arith.constant dense<0.000000e+00> : vector<2x128xf32>
    %126 = tpu.matmul %122, %0, %cst_28 {dimension_numbers = #tpu.dot_dimension_numbers<[1], [0], [0], [1], [0, 0, 1, 1], [], []>} : vector<2x32xf32>, vector<32x128xf32>, vector<2x128xf32> -> vector<2x128xf32>
    %127 = arith.addf %125, %126 : vector<2x128xf32>
    %128 = arith.negf %127 : vector<2x128xf32>
    %129 = math.exp %128 : vector<2x128xf32>
    %cst_29 = arith.constant 1.000000e+00 : f32
    %130 = vector.broadcast %cst_29 : f32 to vector<2x128xf32>
    %131 = arith.addf %130, %129 : vector<2x128xf32>
    %132 = arith.divf %130, %131 : vector<2x128xf32>
    %133 = math.tanh %127 : vector<2x128xf32>
    %134 = vector.extract_strided_slice %132 {offsets = [0, 0], sizes = [2, 32], strides = [1, 1]} : vector<2x128xf32> to vector<2x32xf32>
    %135 = vector.extract_strided_slice %132 {offsets = [0, 32], sizes = [2, 32], strides = [1, 1]} : vector<2x128xf32> to vector<2x32xf32>
    %136 = vector.extract_strided_slice %133 {offsets = [0, 64], sizes = [2, 32], strides = [1, 1]} : vector<2x128xf32> to vector<2x32xf32>
    %137 = vector.extract_strided_slice %132 {offsets = [0, 96], sizes = [2, 32], strides = [1, 1]} : vector<2x128xf32> to vector<2x32xf32>
    %138 = arith.mulf %135, %120 : vector<2x32xf32>
    %139 = arith.mulf %134, %136 : vector<2x32xf32>
    %140 = arith.addf %138, %139 : vector<2x32xf32>
    %141 = math.tanh %140 : vector<2x32xf32>
    %142 = arith.mulf %137, %141 : vector<2x32xf32>
    %c7_i32 = arith.constant 7 : i32
    %c0_30 = arith.constant 0 : index
    %143 = arith.index_cast %c7_i32 : i32 to index
    %c0_31 = arith.constant 0 : index
    %144 = vector.load %arg0[%c0_30, %143, %c0_31] : memref<2x8x128xf32, #tpu.memory_space<vmem>>, vector<2x1x128xf32>
    %145 = vector.shape_cast %144 : vector<2x1x128xf32> to vector<2x128xf32>
    %cst_32 = arith.constant dense<0.000000e+00> : vector<2x128xf32>
    %146 = tpu.matmul %142, %0, %cst_32 {dimension_numbers = #tpu.dot_dimension_numbers<[1], [0], [0], [1], [0, 0, 1, 1], [], []>} : vector<2x32xf32>, vector<32x128xf32>, vector<2x128xf32> -> vector<2x128xf32>
    %147 = arith.addf %145, %146 : vector<2x128xf32>
    %148 = arith.negf %147 : vector<2x128xf32>
    %149 = math.exp %148 : vector<2x128xf32>
    %cst_33 = arith.constant 1.000000e+00 : f32
    %150 = vector.broadcast %cst_33 : f32 to vector<2x128xf32>
    %151 = arith.addf %150, %149 : vector<2x128xf32>
    %152 = arith.divf %150, %151 : vector<2x128xf32>
    %153 = math.tanh %147 : vector<2x128xf32>
    %154 = vector.extract_strided_slice %152 {offsets = [0, 0], sizes = [2, 32], strides = [1, 1]} : vector<2x128xf32> to vector<2x32xf32>
    %155 = vector.extract_strided_slice %152 {offsets = [0, 32], sizes = [2, 32], strides = [1, 1]} : vector<2x128xf32> to vector<2x32xf32>
    %156 = vector.extract_strided_slice %153 {offsets = [0, 64], sizes = [2, 32], strides = [1, 1]} : vector<2x128xf32> to vector<2x32xf32>
    %157 = vector.extract_strided_slice %152 {offsets = [0, 96], sizes = [2, 32], strides = [1, 1]} : vector<2x128xf32> to vector<2x32xf32>
    %158 = arith.mulf %155, %140 : vector<2x32xf32>
    %159 = arith.mulf %154, %156 : vector<2x32xf32>
    %160 = arith.addf %158, %159 : vector<2x32xf32>
    %161 = math.tanh %160 : vector<2x32xf32>
    %162 = arith.mulf %157, %161 : vector<2x32xf32>
    %c8_i32 = arith.constant 8 : i32
    %c0_34 = arith.constant 0 : index
    %c0_35 = arith.constant 0 : index
    %163 = vector.load %arg2[%c0_34, %c0_35] : memref<32x1xf32, #tpu.memory_space<vmem>>, vector<32x1xf32>
    %cst_36 = arith.constant dense<0.000000e+00> : vector<2x1xf32>
    %164 = tpu.matmul %162, %163, %cst_36 {dimension_numbers = #tpu.dot_dimension_numbers<[1], [0], [0], [1], [0, 0, 1, 1], [], []>} : vector<2x32xf32>, vector<32x1xf32>, vector<2x1xf32> -> vector<2x1xf32>
    %c0_37 = arith.constant 0 : index
    %c0_38 = arith.constant 0 : index
    %165 = vector.load %arg3[%c0_37, %c0_38] : memref<1x1xf32, #tpu.memory_space<vmem>>, vector<1x1xf32>
    %166 = vector.broadcast %165 : vector<1x1xf32> to vector<2x1xf32>
    %167 = arith.addf %164, %166 : vector<2x1xf32>
    %168 = arith.negf %167 : vector<2x1xf32>
    %169 = math.exp %168 : vector<2x1xf32>
    %cst_39 = arith.constant 1.000000e+00 : f32
    %170 = vector.broadcast %cst_39 : f32 to vector<2x1xf32>
    %171 = arith.addf %170, %169 : vector<2x1xf32>
    %172 = arith.divf %170, %171 : vector<2x1xf32>
    %c0_40 = arith.constant 0 : index
    %c0_41 = arith.constant 0 : index
    %173 = vector.load %arg4[%c0_40, %c0_41] : memref<2x1xf32, #tpu.memory_space<vmem>>, vector<2x1xf32>
    tpu.vector_store %arg4[%c0_40, %c0_41], %172 {strides = array<i32>} : memref<2x1xf32, #tpu.memory_space<vmem>>, vector<2x1xf32>,
    return
  }
}

module attributes {stable_mosaic.version = 11 : i64} {
  func.func @conv_gate_kernel(%arg0: i32, %arg1: memref<1x10x130xf32, #tpu.memory_space<vmem>>, %arg2: memref<144xf32, #tpu.memory_space<smem>>, %arg3: memref<16xf32, #tpu.memory_space<smem>>, %arg4: memref<2048x128xf32, #tpu.memory_space<vmem>>, %arg5: memref<1x128xf32, #tpu.memory_space<vmem>>, %arg6: memref<1x8x128xf32, #tpu.memory_space<vmem>>) attributes {dimension_semantics = [#tpu.dimension_semantics<parallel>], iteration_bounds = array<i64: 2>, scalar_prefetch = 0 : i64, scratch_operands = 0 : i64, tpu.core_type = #tpu.core_type<tc>, window_params = [{transform_indices = @transform_0, window_bounds = array<i64: 1, 10, 130>}, {transform_indices = @transform_1, window_bounds = array<i64: 144>}, {transform_indices = @transform_2, window_bounds = array<i64: 16>}, {pipeline_mode = #tpu.pipeline_mode<synchronous>, transform_indices = @transform_3, window_bounds = array<i64: 2048, 128>}, {pipeline_mode = #tpu.pipeline_mode<synchronous>, transform_indices = @transform_4, window_bounds = array<i64: 1, 128>}, {transform_indices = @transform_5, window_bounds = array<i64: 1, 8, 128>}]} {
    %c0 = arith.constant 0 : index
    %c0_0 = arith.constant 0 : index
    %c0_1 = arith.constant 0 : index
    %0 = vector.load %arg1[%c0, %c0_0, %c0_1] : memref<1x10x130xf32, #tpu.memory_space<vmem>>, vector<1x10x130xf32>
    %1 = vector.shape_cast %0 : vector<1x10x130xf32> to vector<10x130xf32>
    %2 = vector.extract_strided_slice %1 {offsets = [0, 0], sizes = [8, 128], strides = [1, 1]} : vector<10x130xf32> to vector<8x128xf32>
    %3 = vector.extract_strided_slice %1 {offsets = [1, 0], sizes = [8, 128], strides = [1, 1]} : vector<10x130xf32> to vector<8x128xf32>
    %4 = vector.extract_strided_slice %1 {offsets = [2, 0], sizes = [8, 128], strides = [1, 1]} : vector<10x130xf32> to vector<8x128xf32>
    %5 = vector.extract_strided_slice %1 {offsets = [0, 1], sizes = [8, 128], strides = [1, 1]} : vector<10x130xf32> to vector<8x128xf32>
    %6 = vector.extract_strided_slice %1 {offsets = [1, 1], sizes = [8, 128], strides = [1, 1]} : vector<10x130xf32> to vector<8x128xf32>
    %7 = vector.extract_strided_slice %1 {offsets = [2, 1], sizes = [8, 128], strides = [1, 1]} : vector<10x130xf32> to vector<8x128xf32>
    %8 = vector.extract_strided_slice %1 {offsets = [0, 2], sizes = [8, 128], strides = [1, 1]} : vector<10x130xf32> to vector<8x128xf32>
    %9 = vector.extract_strided_slice %1 {offsets = [1, 2], sizes = [8, 128], strides = [1, 1]} : vector<10x130xf32> to vector<8x128xf32>
    %10 = vector.extract_strided_slice %1 {offsets = [2, 2], sizes = [8, 128], strides = [1, 1]} : vector<10x130xf32> to vector<8x128xf32>
    %cst = arith.constant 0.000000e+00 : f32
    %11 = vector.broadcast %cst : f32 to vector<8x128xf32>
    %cst_2 = arith.constant 0.000000e+00 : f32
    %12 = vector.broadcast %cst_2 : f32 to vector<8x128xf32>
    %c0_3 = arith.constant 0 : index
    %13 = memref.load %arg2[%c0_3] : memref<144xf32, #tpu.memory_space<smem>>
    %14 = vector.broadcast %13 : f32 to vector<8x128xf32>
    %15 = arith.mulf %14, %2 : vector<8x128xf32>
    %16 = arith.addf %12, %15 : vector<8x128xf32>
    %c1 = arith.constant 1 : index
    %17 = memref.load %arg2[%c1] : memref<144xf32, #tpu.memory_space<smem>>
    %18 = vector.broadcast %17 : f32 to vector<8x128xf32>
    %19 = arith.mulf %18, %3 : vector<8x128xf32>
    %20 = arith.addf %16, %19 : vector<8x128xf32>
    %c2 = arith.constant 2 : index
    %21 = memref.load %arg2[%c2] : memref<144xf32, #tpu.memory_space<smem>>
    %22 = vector.broadcast %21 : f32 to vector<8x128xf32>
    %23 = arith.mulf %22, %4 : vector<8x128xf32>
    %24 = arith.addf %20, %23 : vector<8x128xf32>
    %c3 = arith.constant 3 : index
    %25 = memref.load %arg2[%c3] : memref<144xf32, #tpu.memory_space<smem>>
    %26 = vector.broadcast %25 : f32 to vector<8x128xf32>
    %27 = arith.mulf %26, %5 : vector<8x128xf32>
    %28 = arith.addf %24, %27 : vector<8x128xf32>
    %c4 = arith.constant 4 : index
    %29 = memref.load %arg2[%c4] : memref<144xf32, #tpu.memory_space<smem>>
    %30 = vector.broadcast %29 : f32 to vector<8x128xf32>
    %31 = arith.mulf %30, %6 : vector<8x128xf32>
    %32 = arith.addf %28, %31 : vector<8x128xf32>
    %c5 = arith.constant 5 : index
    %33 = memref.load %arg2[%c5] : memref<144xf32, #tpu.memory_space<smem>>
    %34 = vector.broadcast %33 : f32 to vector<8x128xf32>
    %35 = arith.mulf %34, %7 : vector<8x128xf32>
    %36 = arith.addf %32, %35 : vector<8x128xf32>
    %c6 = arith.constant 6 : index
    %37 = memref.load %arg2[%c6] : memref<144xf32, #tpu.memory_space<smem>>
    %38 = vector.broadcast %37 : f32 to vector<8x128xf32>
    %39 = arith.mulf %38, %8 : vector<8x128xf32>
    %40 = arith.addf %36, %39 : vector<8x128xf32>
    %c7 = arith.constant 7 : index
    %41 = memref.load %arg2[%c7] : memref<144xf32, #tpu.memory_space<smem>>
    %42 = vector.broadcast %41 : f32 to vector<8x128xf32>
    %43 = arith.mulf %42, %9 : vector<8x128xf32>
    %44 = arith.addf %40, %43 : vector<8x128xf32>
    %c8 = arith.constant 8 : index
    %45 = memref.load %arg2[%c8] : memref<144xf32, #tpu.memory_space<smem>>
    %46 = vector.broadcast %45 : f32 to vector<8x128xf32>
    %47 = arith.mulf %46, %10 : vector<8x128xf32>
    %48 = arith.addf %44, %47 : vector<8x128xf32>
    %c0_4 = arith.constant 0 : index
    %49 = memref.load %arg3[%c0_4] : memref<16xf32, #tpu.memory_space<smem>>
    %50 = vector.broadcast %49 : f32 to vector<8x128xf32>
    %51 = arith.addf %48, %50 : vector<8x128xf32>
    %cst_5 = arith.constant 0.000000e+00 : f32
    %52 = vector.broadcast %cst_5 : f32 to vector<8x128xf32>
    %53 = arith.maximumf %51, %52 : vector<8x128xf32>
    %c0_6 = arith.constant 0 : index
    %c0_7 = arith.constant 0 : index
    %54 = vector.load %arg4[%c0_6, %c0_7] : memref<2048x128xf32, #tpu.memory_space<vmem>>, vector<128x128xf32>
    %cst_8 = arith.constant dense<0.000000e+00> : vector<8x128xf32>
    %55 = tpu.matmul %53, %54, %cst_8 {dimension_numbers = #tpu.dot_dimension_numbers<[1], [0], [0], [1], [0, 0, 1, 1], [], []>} : vector<8x128xf32>, vector<128x128xf32>, vector<8x128xf32> -> vector<8x128xf32>
    %56 = arith.addf %11, %55 : vector<8x128xf32>
    %cst_9 = arith.constant 0.000000e+00 : f32
    %57 = vector.broadcast %cst_9 : f32 to vector<8x128xf32>
    %c9 = arith.constant 9 : index
    %58 = memref.load %arg2[%c9] : memref<144xf32, #tpu.memory_space<smem>>
    %59 = vector.broadcast %58 : f32 to vector<8x128xf32>
    %60 = arith.mulf %59, %2 : vector<8x128xf32>
    %61 = arith.addf %57, %60 : vector<8x128xf32>
    %c10 = arith.constant 10 : index
    %62 = memref.load %arg2[%c10] : memref<144xf32, #tpu.memory_space<smem>>
    %63 = vector.broadcast %62 : f32 to vector<8x128xf32>
    %64 = arith.mulf %63, %3 : vector<8x128xf32>
    %65 = arith.addf %61, %64 : vector<8x128xf32>
    %c11 = arith.constant 11 : index
    %66 = memref.load %arg2[%c11] : memref<144xf32, #tpu.memory_space<smem>>
    %67 = vector.broadcast %66 : f32 to vector<8x128xf32>
    %68 = arith.mulf %67, %4 : vector<8x128xf32>
    %69 = arith.addf %65, %68 : vector<8x128xf32>
    %c12 = arith.constant 12 : index
    %70 = memref.load %arg2[%c12] : memref<144xf32, #tpu.memory_space<smem>>
    %71 = vector.broadcast %70 : f32 to vector<8x128xf32>
    %72 = arith.mulf %71, %5 : vector<8x128xf32>
    %73 = arith.addf %69, %72 : vector<8x128xf32>
    %c13 = arith.constant 13 : index
    %74 = memref.load %arg2[%c13] : memref<144xf32, #tpu.memory_space<smem>>
    %75 = vector.broadcast %74 : f32 to vector<8x128xf32>
    %76 = arith.mulf %75, %6 : vector<8x128xf32>
    %77 = arith.addf %73, %76 : vector<8x128xf32>
    %c14 = arith.constant 14 : index
    %78 = memref.load %arg2[%c14] : memref<144xf32, #tpu.memory_space<smem>>
    %79 = vector.broadcast %78 : f32 to vector<8x128xf32>
    %80 = arith.mulf %79, %7 : vector<8x128xf32>
    %81 = arith.addf %77, %80 : vector<8x128xf32>
    %c15 = arith.constant 15 : index
    %82 = memref.load %arg2[%c15] : memref<144xf32, #tpu.memory_space<smem>>
    %83 = vector.broadcast %82 : f32 to vector<8x128xf32>
    %84 = arith.mulf %83, %8 : vector<8x128xf32>
    %85 = arith.addf %81, %84 : vector<8x128xf32>
    %c16 = arith.constant 16 : index
    %86 = memref.load %arg2[%c16] : memref<144xf32, #tpu.memory_space<smem>>
    %87 = vector.broadcast %86 : f32 to vector<8x128xf32>
    %88 = arith.mulf %87, %9 : vector<8x128xf32>
    %89 = arith.addf %85, %88 : vector<8x128xf32>
    %c17 = arith.constant 17 : index
    %90 = memref.load %arg2[%c17] : memref<144xf32, #tpu.memory_space<smem>>
    %91 = vector.broadcast %90 : f32 to vector<8x128xf32>
    %92 = arith.mulf %91, %10 : vector<8x128xf32>
    %93 = arith.addf %89, %92 : vector<8x128xf32>
    %c1_10 = arith.constant 1 : index
    %94 = memref.load %arg3[%c1_10] : memref<16xf32, #tpu.memory_space<smem>>
    %95 = vector.broadcast %94 : f32 to vector<8x128xf32>
    %96 = arith.addf %93, %95 : vector<8x128xf32>
    %cst_11 = arith.constant 0.000000e+00 : f32
    %97 = vector.broadcast %cst_11 : f32 to vector<8x128xf32>
    %98 = arith.maximumf %96, %97 : vector<8x128xf32>
    %c128 = arith.constant 128 : index
    %c0_12 = arith.constant 0 : index
    %99 = vector.load %arg4[%c128, %c0_12] : memref<2048x128xf32, #tpu.memory_space<vmem>>, vector<128x128xf32>
    %cst_13 = arith.constant dense<0.000000e+00> : vector<8x128xf32>
    %100 = tpu.matmul %98, %99, %cst_13 {dimension_numbers = #tpu.dot_dimension_numbers<[1], [0], [0], [1], [0, 0, 1, 1], [], []>} : vector<8x128xf32>, vector<128x128xf32>, vector<8x128xf32> -> vector<8x128xf32>
    %101 = arith.addf %56, %100 : vector<8x128xf32>
    %cst_14 = arith.constant 0.000000e+00 : f32
    %102 = vector.broadcast %cst_14 : f32 to vector<8x128xf32>
    %c18 = arith.constant 18 : index
    %103 = memref.load %arg2[%c18] : memref<144xf32, #tpu.memory_space<smem>>
    %104 = vector.broadcast %103 : f32 to vector<8x128xf32>
    %105 = arith.mulf %104, %2 : vector<8x128xf32>
    %106 = arith.addf %102, %105 : vector<8x128xf32>
    %c19 = arith.constant 19 : index
    %107 = memref.load %arg2[%c19] : memref<144xf32, #tpu.memory_space<smem>>
    %108 = vector.broadcast %107 : f32 to vector<8x128xf32>
    %109 = arith.mulf %108, %3 : vector<8x128xf32>
    %110 = arith.addf %106, %109 : vector<8x128xf32>
    %c20 = arith.constant 20 : index
    %111 = memref.load %arg2[%c20] : memref<144xf32, #tpu.memory_space<smem>>
    %112 = vector.broadcast %111 : f32 to vector<8x128xf32>
    %113 = arith.mulf %112, %4 : vector<8x128xf32>
    %114 = arith.addf %110, %113 : vector<8x128xf32>
    %c21 = arith.constant 21 : index
    %115 = memref.load %arg2[%c21] : memref<144xf32, #tpu.memory_space<smem>>
    %116 = vector.broadcast %115 : f32 to vector<8x128xf32>
    %117 = arith.mulf %116, %5 : vector<8x128xf32>
    %118 = arith.addf %114, %117 : vector<8x128xf32>
    %c22 = arith.constant 22 : index
    %119 = memref.load %arg2[%c22] : memref<144xf32, #tpu.memory_space<smem>>
    %120 = vector.broadcast %119 : f32 to vector<8x128xf32>
    %121 = arith.mulf %120, %6 : vector<8x128xf32>
    %122 = arith.addf %118, %121 : vector<8x128xf32>
    %c23 = arith.constant 23 : index
    %123 = memref.load %arg2[%c23] : memref<144xf32, #tpu.memory_space<smem>>
    %124 = vector.broadcast %123 : f32 to vector<8x128xf32>
    %125 = arith.mulf %124, %7 : vector<8x128xf32>
    %126 = arith.addf %122, %125 : vector<8x128xf32>
    %c24 = arith.constant 24 : index
    %127 = memref.load %arg2[%c24] : memref<144xf32, #tpu.memory_space<smem>>
    %128 = vector.broadcast %127 : f32 to vector<8x128xf32>
    %129 = arith.mulf %128, %8 : vector<8x128xf32>
    %130 = arith.addf %126, %129 : vector<8x128xf32>
    %c25 = arith.constant 25 : index
    %131 = memref.load %arg2[%c25] : memref<144xf32, #tpu.memory_space<smem>>
    %132 = vector.broadcast %131 : f32 to vector<8x128xf32>
    %133 = arith.mulf %132, %9 : vector<8x128xf32>
    %134 = arith.addf %130, %133 : vector<8x128xf32>
    %c26 = arith.constant 26 : index
    %135 = memref.load %arg2[%c26] : memref<144xf32, #tpu.memory_space<smem>>
    %136 = vector.broadcast %135 : f32 to vector<8x128xf32>
    %137 = arith.mulf %136, %10 : vector<8x128xf32>
    %138 = arith.addf %134, %137 : vector<8x128xf32>
    %c2_15 = arith.constant 2 : index
    %139 = memref.load %arg3[%c2_15] : memref<16xf32, #tpu.memory_space<smem>>
    %140 = vector.broadcast %139 : f32 to vector<8x128xf32>
    %141 = arith.addf %138, %140 : vector<8x128xf32>
    %cst_16 = arith.constant 0.000000e+00 : f32
    %142 = vector.broadcast %cst_16 : f32 to vector<8x128xf32>
    %143 = arith.maximumf %141, %142 : vector<8x128xf32>
    %c256 = arith.constant 256 : index
    %c0_17 = arith.constant 0 : index
    %144 = vector.load %arg4[%c256, %c0_17] : memref<2048x128xf32, #tpu.memory_space<vmem>>, vector<128x128xf32>
    %cst_18 = arith.constant dense<0.000000e+00> : vector<8x128xf32>
    %145 = tpu.matmul %143, %144, %cst_18 {dimension_numbers = #tpu.dot_dimension_numbers<[1], [0], [0], [1], [0, 0, 1, 1], [], []>} : vector<8x128xf32>, vector<128x128xf32>, vector<8x128xf32> -> vector<8x128xf32>
    %146 = arith.addf %101, %145 : vector<8x128xf32>
    %cst_19 = arith.constant 0.000000e+00 : f32
    %147 = vector.broadcast %cst_19 : f32 to vector<8x128xf32>
    %c27 = arith.constant 27 : index
    %148 = memref.load %arg2[%c27] : memref<144xf32, #tpu.memory_space<smem>>
    %149 = vector.broadcast %148 : f32 to vector<8x128xf32>
    %150 = arith.mulf %149, %2 : vector<8x128xf32>
    %151 = arith.addf %147, %150 : vector<8x128xf32>
    %c28 = arith.constant 28 : index
    %152 = memref.load %arg2[%c28] : memref<144xf32, #tpu.memory_space<smem>>
    %153 = vector.broadcast %152 : f32 to vector<8x128xf32>
    %154 = arith.mulf %153, %3 : vector<8x128xf32>
    %155 = arith.addf %151, %154 : vector<8x128xf32>
    %c29 = arith.constant 29 : index
    %156 = memref.load %arg2[%c29] : memref<144xf32, #tpu.memory_space<smem>>
    %157 = vector.broadcast %156 : f32 to vector<8x128xf32>
    %158 = arith.mulf %157, %4 : vector<8x128xf32>
    %159 = arith.addf %155, %158 : vector<8x128xf32>
    %c30 = arith.constant 30 : index
    %160 = memref.load %arg2[%c30] : memref<144xf32, #tpu.memory_space<smem>>
    %161 = vector.broadcast %160 : f32 to vector<8x128xf32>
    %162 = arith.mulf %161, %5 : vector<8x128xf32>
    %163 = arith.addf %159, %162 : vector<8x128xf32>
    %c31 = arith.constant 31 : index
    %164 = memref.load %arg2[%c31] : memref<144xf32, #tpu.memory_space<smem>>
    %165 = vector.broadcast %164 : f32 to vector<8x128xf32>
    %166 = arith.mulf %165, %6 : vector<8x128xf32>
    %167 = arith.addf %163, %166 : vector<8x128xf32>
    %c32 = arith.constant 32 : index
    %168 = memref.load %arg2[%c32] : memref<144xf32, #tpu.memory_space<smem>>
    %169 = vector.broadcast %168 : f32 to vector<8x128xf32>
    %170 = arith.mulf %169, %7 : vector<8x128xf32>
    %171 = arith.addf %167, %170 : vector<8x128xf32>
    %c33 = arith.constant 33 : index
    %172 = memref.load %arg2[%c33] : memref<144xf32, #tpu.memory_space<smem>>
    %173 = vector.broadcast %172 : f32 to vector<8x128xf32>
    %174 = arith.mulf %173, %8 : vector<8x128xf32>
    %175 = arith.addf %171, %174 : vector<8x128xf32>
    %c34 = arith.constant 34 : index
    %176 = memref.load %arg2[%c34] : memref<144xf32, #tpu.memory_space<smem>>
    %177 = vector.broadcast %176 : f32 to vector<8x128xf32>
    %178 = arith.mulf %177, %9 : vector<8x128xf32>
    %179 = arith.addf %175, %178 : vector<8x128xf32>
    %c35 = arith.constant 35 : index
    %180 = memref.load %arg2[%c35] : memref<144xf32, #tpu.memory_space<smem>>
    %181 = vector.broadcast %180 : f32 to vector<8x128xf32>
    %182 = arith.mulf %181, %10 : vector<8x128xf32>
    %183 = arith.addf %179, %182 : vector<8x128xf32>
    %c3_20 = arith.constant 3 : index
    %184 = memref.load %arg3[%c3_20] : memref<16xf32, #tpu.memory_space<smem>>
    %185 = vector.broadcast %184 : f32 to vector<8x128xf32>
    %186 = arith.addf %183, %185 : vector<8x128xf32>
    %cst_21 = arith.constant 0.000000e+00 : f32
    %187 = vector.broadcast %cst_21 : f32 to vector<8x128xf32>
    %188 = arith.maximumf %186, %187 : vector<8x128xf32>
    %c384 = arith.constant 384 : index
    %c0_22 = arith.constant 0 : index
    %189 = vector.load %arg4[%c384, %c0_22] : memref<2048x128xf32, #tpu.memory_space<vmem>>, vector<128x128xf32>
    %cst_23 = arith.constant dense<0.000000e+00> : vector<8x128xf32>
    %190 = tpu.matmul %188, %189, %cst_23 {dimension_numbers = #tpu.dot_dimension_numbers<[1], [0], [0], [1], [0, 0, 1, 1], [], []>} : vector<8x128xf32>, vector<128x128xf32>, vector<8x128xf32> -> vector<8x128xf32>
    %191 = arith.addf %146, %190 : vector<8x128xf32>
    %cst_24 = arith.constant 0.000000e+00 : f32
    %192 = vector.broadcast %cst_24 : f32 to vector<8x128xf32>
    %c36 = arith.constant 36 : index
    %193 = memref.load %arg2[%c36] : memref<144xf32, #tpu.memory_space<smem>>
    %194 = vector.broadcast %193 : f32 to vector<8x128xf32>
    %195 = arith.mulf %194, %2 : vector<8x128xf32>
    %196 = arith.addf %192, %195 : vector<8x128xf32>
    %c37 = arith.constant 37 : index
    %197 = memref.load %arg2[%c37] : memref<144xf32, #tpu.memory_space<smem>>
    %198 = vector.broadcast %197 : f32 to vector<8x128xf32>
    %199 = arith.mulf %198, %3 : vector<8x128xf32>
    %200 = arith.addf %196, %199 : vector<8x128xf32>
    %c38 = arith.constant 38 : index
    %201 = memref.load %arg2[%c38] : memref<144xf32, #tpu.memory_space<smem>>
    %202 = vector.broadcast %201 : f32 to vector<8x128xf32>
    %203 = arith.mulf %202, %4 : vector<8x128xf32>
    %204 = arith.addf %200, %203 : vector<8x128xf32>
    %c39 = arith.constant 39 : index
    %205 = memref.load %arg2[%c39] : memref<144xf32, #tpu.memory_space<smem>>
    %206 = vector.broadcast %205 : f32 to vector<8x128xf32>
    %207 = arith.mulf %206, %5 : vector<8x128xf32>
    %208 = arith.addf %204, %207 : vector<8x128xf32>
    %c40 = arith.constant 40 : index
    %209 = memref.load %arg2[%c40] : memref<144xf32, #tpu.memory_space<smem>>
    %210 = vector.broadcast %209 : f32 to vector<8x128xf32>
    %211 = arith.mulf %210, %6 : vector<8x128xf32>
    %212 = arith.addf %208, %211 : vector<8x128xf32>
    %c41 = arith.constant 41 : index
    %213 = memref.load %arg2[%c41] : memref<144xf32, #tpu.memory_space<smem>>
    %214 = vector.broadcast %213 : f32 to vector<8x128xf32>
    %215 = arith.mulf %214, %7 : vector<8x128xf32>
    %216 = arith.addf %212, %215 : vector<8x128xf32>
    %c42 = arith.constant 42 : index
    %217 = memref.load %arg2[%c42] : memref<144xf32, #tpu.memory_space<smem>>
    %218 = vector.broadcast %217 : f32 to vector<8x128xf32>
    %219 = arith.mulf %218, %8 : vector<8x128xf32>
    %220 = arith.addf %216, %219 : vector<8x128xf32>
    %c43 = arith.constant 43 : index
    %221 = memref.load %arg2[%c43] : memref<144xf32, #tpu.memory_space<smem>>
    %222 = vector.broadcast %221 : f32 to vector<8x128xf32>
    %223 = arith.mulf %222, %9 : vector<8x128xf32>
    %224 = arith.addf %220, %223 : vector<8x128xf32>
    %c44 = arith.constant 44 : index
    %225 = memref.load %arg2[%c44] : memref<144xf32, #tpu.memory_space<smem>>
    %226 = vector.broadcast %225 : f32 to vector<8x128xf32>
    %227 = arith.mulf %226, %10 : vector<8x128xf32>
    %228 = arith.addf %224, %227 : vector<8x128xf32>
    %c4_25 = arith.constant 4 : index
    %229 = memref.load %arg3[%c4_25] : memref<16xf32, #tpu.memory_space<smem>>
    %230 = vector.broadcast %229 : f32 to vector<8x128xf32>
    %231 = arith.addf %228, %230 : vector<8x128xf32>
    %cst_26 = arith.constant 0.000000e+00 : f32
    %232 = vector.broadcast %cst_26 : f32 to vector<8x128xf32>
    %233 = arith.maximumf %231, %232 : vector<8x128xf32>
    %c512 = arith.constant 512 : index
    %c0_27 = arith.constant 0 : index
    %234 = vector.load %arg4[%c512, %c0_27] : memref<2048x128xf32, #tpu.memory_space<vmem>>, vector<128x128xf32>
    %cst_28 = arith.constant dense<0.000000e+00> : vector<8x128xf32>
    %235 = tpu.matmul %233, %234, %cst_28 {dimension_numbers = #tpu.dot_dimension_numbers<[1], [0], [0], [1], [0, 0, 1, 1], [], []>} : vector<8x128xf32>, vector<128x128xf32>, vector<8x128xf32> -> vector<8x128xf32>
    %236 = arith.addf %191, %235 : vector<8x128xf32>
    %cst_29 = arith.constant 0.000000e+00 : f32
    %237 = vector.broadcast %cst_29 : f32 to vector<8x128xf32>
    %c45 = arith.constant 45 : index
    %238 = memref.load %arg2[%c45] : memref<144xf32, #tpu.memory_space<smem>>
    %239 = vector.broadcast %238 : f32 to vector<8x128xf32>
    %240 = arith.mulf %239, %2 : vector<8x128xf32>
    %241 = arith.addf %237, %240 : vector<8x128xf32>
    %c46 = arith.constant 46 : index
    %242 = memref.load %arg2[%c46] : memref<144xf32, #tpu.memory_space<smem>>
    %243 = vector.broadcast %242 : f32 to vector<8x128xf32>
    %244 = arith.mulf %243, %3 : vector<8x128xf32>
    %245 = arith.addf %241, %244 : vector<8x128xf32>
    %c47 = arith.constant 47 : index
    %246 = memref.load %arg2[%c47] : memref<144xf32, #tpu.memory_space<smem>>
    %247 = vector.broadcast %246 : f32 to vector<8x128xf32>
    %248 = arith.mulf %247, %4 : vector<8x128xf32>
    %249 = arith.addf %245, %248 : vector<8x128xf32>
    %c48 = arith.constant 48 : index
    %250 = memref.load %arg2[%c48] : memref<144xf32, #tpu.memory_space<smem>>
    %251 = vector.broadcast %250 : f32 to vector<8x128xf32>
    %252 = arith.mulf %251, %5 : vector<8x128xf32>
    %253 = arith.addf %249, %252 : vector<8x128xf32>
    %c49 = arith.constant 49 : index
    %254 = memref.load %arg2[%c49] : memref<144xf32, #tpu.memory_space<smem>>
    %255 = vector.broadcast %254 : f32 to vector<8x128xf32>
    %256 = arith.mulf %255, %6 : vector<8x128xf32>
    %257 = arith.addf %253, %256 : vector<8x128xf32>
    %c50 = arith.constant 50 : index
    %258 = memref.load %arg2[%c50] : memref<144xf32, #tpu.memory_space<smem>>
    %259 = vector.broadcast %258 : f32 to vector<8x128xf32>
    %260 = arith.mulf %259, %7 : vector<8x128xf32>
    %261 = arith.addf %257, %260 : vector<8x128xf32>
    %c51 = arith.constant 51 : index
    %262 = memref.load %arg2[%c51] : memref<144xf32, #tpu.memory_space<smem>>
    %263 = vector.broadcast %262 : f32 to vector<8x128xf32>
    %264 = arith.mulf %263, %8 : vector<8x128xf32>
    %265 = arith.addf %261, %264 : vector<8x128xf32>
    %c52 = arith.constant 52 : index
    %266 = memref.load %arg2[%c52] : memref<144xf32, #tpu.memory_space<smem>>
    %267 = vector.broadcast %266 : f32 to vector<8x128xf32>
    %268 = arith.mulf %267, %9 : vector<8x128xf32>
    %269 = arith.addf %265, %268 : vector<8x128xf32>
    %c53 = arith.constant 53 : index
    %270 = memref.load %arg2[%c53] : memref<144xf32, #tpu.memory_space<smem>>
    %271 = vector.broadcast %270 : f32 to vector<8x128xf32>
    %272 = arith.mulf %271, %10 : vector<8x128xf32>
    %273 = arith.addf %269, %272 : vector<8x128xf32>
    %c5_30 = arith.constant 5 : index
    %274 = memref.load %arg3[%c5_30] : memref<16xf32, #tpu.memory_space<smem>>
    %275 = vector.broadcast %274 : f32 to vector<8x128xf32>
    %276 = arith.addf %273, %275 : vector<8x128xf32>
    %cst_31 = arith.constant 0.000000e+00 : f32
    %277 = vector.broadcast %cst_31 : f32 to vector<8x128xf32>
    %278 = arith.maximumf %276, %277 : vector<8x128xf32>
    %c640 = arith.constant 640 : index
    %c0_32 = arith.constant 0 : index
    %279 = vector.load %arg4[%c640, %c0_32] : memref<2048x128xf32, #tpu.memory_space<vmem>>, vector<128x128xf32>
    %cst_33 = arith.constant dense<0.000000e+00> : vector<8x128xf32>
    %280 = tpu.matmul %278, %279, %cst_33 {dimension_numbers = #tpu.dot_dimension_numbers<[1], [0], [0], [1], [0, 0, 1, 1], [], []>} : vector<8x128xf32>, vector<128x128xf32>, vector<8x128xf32> -> vector<8x128xf32>
    %281 = arith.addf %236, %280 : vector<8x128xf32>
    %cst_34 = arith.constant 0.000000e+00 : f32
    %282 = vector.broadcast %cst_34 : f32 to vector<8x128xf32>
    %c54 = arith.constant 54 : index
    %283 = memref.load %arg2[%c54] : memref<144xf32, #tpu.memory_space<smem>>
    %284 = vector.broadcast %283 : f32 to vector<8x128xf32>
    %285 = arith.mulf %284, %2 : vector<8x128xf32>
    %286 = arith.addf %282, %285 : vector<8x128xf32>
    %c55 = arith.constant 55 : index
    %287 = memref.load %arg2[%c55] : memref<144xf32, #tpu.memory_space<smem>>
    %288 = vector.broadcast %287 : f32 to vector<8x128xf32>
    %289 = arith.mulf %288, %3 : vector<8x128xf32>
    %290 = arith.addf %286, %289 : vector<8x128xf32>
    %c56 = arith.constant 56 : index
    %291 = memref.load %arg2[%c56] : memref<144xf32, #tpu.memory_space<smem>>
    %292 = vector.broadcast %291 : f32 to vector<8x128xf32>
    %293 = arith.mulf %292, %4 : vector<8x128xf32>
    %294 = arith.addf %290, %293 : vector<8x128xf32>
    %c57 = arith.constant 57 : index
    %295 = memref.load %arg2[%c57] : memref<144xf32, #tpu.memory_space<smem>>
    %296 = vector.broadcast %295 : f32 to vector<8x128xf32>
    %297 = arith.mulf %296, %5 : vector<8x128xf32>
    %298 = arith.addf %294, %297 : vector<8x128xf32>
    %c58 = arith.constant 58 : index
    %299 = memref.load %arg2[%c58] : memref<144xf32, #tpu.memory_space<smem>>
    %300 = vector.broadcast %299 : f32 to vector<8x128xf32>
    %301 = arith.mulf %300, %6 : vector<8x128xf32>
    %302 = arith.addf %298, %301 : vector<8x128xf32>
    %c59 = arith.constant 59 : index
    %303 = memref.load %arg2[%c59] : memref<144xf32, #tpu.memory_space<smem>>
    %304 = vector.broadcast %303 : f32 to vector<8x128xf32>
    %305 = arith.mulf %304, %7 : vector<8x128xf32>
    %306 = arith.addf %302, %305 : vector<8x128xf32>
    %c60 = arith.constant 60 : index
    %307 = memref.load %arg2[%c60] : memref<144xf32, #tpu.memory_space<smem>>
    %308 = vector.broadcast %307 : f32 to vector<8x128xf32>
    %309 = arith.mulf %308, %8 : vector<8x128xf32>
    %310 = arith.addf %306, %309 : vector<8x128xf32>
    %c61 = arith.constant 61 : index
    %311 = memref.load %arg2[%c61] : memref<144xf32, #tpu.memory_space<smem>>
    %312 = vector.broadcast %311 : f32 to vector<8x128xf32>
    %313 = arith.mulf %312, %9 : vector<8x128xf32>
    %314 = arith.addf %310, %313 : vector<8x128xf32>
    %c62 = arith.constant 62 : index
    %315 = memref.load %arg2[%c62] : memref<144xf32, #tpu.memory_space<smem>>
    %316 = vector.broadcast %315 : f32 to vector<8x128xf32>
    %317 = arith.mulf %316, %10 : vector<8x128xf32>
    %318 = arith.addf %314, %317 : vector<8x128xf32>
    %c6_35 = arith.constant 6 : index
    %319 = memref.load %arg3[%c6_35] : memref<16xf32, #tpu.memory_space<smem>>
    %320 = vector.broadcast %319 : f32 to vector<8x128xf32>
    %321 = arith.addf %318, %320 : vector<8x128xf32>
    %cst_36 = arith.constant 0.000000e+00 : f32
    %322 = vector.broadcast %cst_36 : f32 to vector<8x128xf32>
    %323 = arith.maximumf %321, %322 : vector<8x128xf32>
    %c768 = arith.constant 768 : index
    %c0_37 = arith.constant 0 : index
    %324 = vector.load %arg4[%c768, %c0_37] : memref<2048x128xf32, #tpu.memory_space<vmem>>, vector<128x128xf32>
    %cst_38 = arith.constant dense<0.000000e+00> : vector<8x128xf32>
    %325 = tpu.matmul %323, %324, %cst_38 {dimension_numbers = #tpu.dot_dimension_numbers<[1], [0], [0], [1], [0, 0, 1, 1], [], []>} : vector<8x128xf32>, vector<128x128xf32>, vector<8x128xf32> -> vector<8x128xf32>
    %326 = arith.addf %281, %325 : vector<8x128xf32>
    %cst_39 = arith.constant 0.000000e+00 : f32
    %327 = vector.broadcast %cst_39 : f32 to vector<8x128xf32>
    %c63 = arith.constant 63 : index
    %328 = memref.load %arg2[%c63] : memref<144xf32, #tpu.memory_space<smem>>
    %329 = vector.broadcast %328 : f32 to vector<8x128xf32>
    %330 = arith.mulf %329, %2 : vector<8x128xf32>
    %331 = arith.addf %327, %330 : vector<8x128xf32>
    %c64 = arith.constant 64 : index
    %332 = memref.load %arg2[%c64] : memref<144xf32, #tpu.memory_space<smem>>
    %333 = vector.broadcast %332 : f32 to vector<8x128xf32>
    %334 = arith.mulf %333, %3 : vector<8x128xf32>
    %335 = arith.addf %331, %334 : vector<8x128xf32>
    %c65 = arith.constant 65 : index
    %336 = memref.load %arg2[%c65] : memref<144xf32, #tpu.memory_space<smem>>
    %337 = vector.broadcast %336 : f32 to vector<8x128xf32>
    %338 = arith.mulf %337, %4 : vector<8x128xf32>
    %339 = arith.addf %335, %338 : vector<8x128xf32>
    %c66 = arith.constant 66 : index
    %340 = memref.load %arg2[%c66] : memref<144xf32, #tpu.memory_space<smem>>
    %341 = vector.broadcast %340 : f32 to vector<8x128xf32>
    %342 = arith.mulf %341, %5 : vector<8x128xf32>
    %343 = arith.addf %339, %342 : vector<8x128xf32>
    %c67 = arith.constant 67 : index
    %344 = memref.load %arg2[%c67] : memref<144xf32, #tpu.memory_space<smem>>
    %345 = vector.broadcast %344 : f32 to vector<8x128xf32>
    %346 = arith.mulf %345, %6 : vector<8x128xf32>
    %347 = arith.addf %343, %346 : vector<8x128xf32>
    %c68 = arith.constant 68 : index
    %348 = memref.load %arg2[%c68] : memref<144xf32, #tpu.memory_space<smem>>
    %349 = vector.broadcast %348 : f32 to vector<8x128xf32>
    %350 = arith.mulf %349, %7 : vector<8x128xf32>
    %351 = arith.addf %347, %350 : vector<8x128xf32>
    %c69 = arith.constant 69 : index
    %352 = memref.load %arg2[%c69] : memref<144xf32, #tpu.memory_space<smem>>
    %353 = vector.broadcast %352 : f32 to vector<8x128xf32>
    %354 = arith.mulf %353, %8 : vector<8x128xf32>
    %355 = arith.addf %351, %354 : vector<8x128xf32>
    %c70 = arith.constant 70 : index
    %356 = memref.load %arg2[%c70] : memref<144xf32, #tpu.memory_space<smem>>
    %357 = vector.broadcast %356 : f32 to vector<8x128xf32>
    %358 = arith.mulf %357, %9 : vector<8x128xf32>
    %359 = arith.addf %355, %358 : vector<8x128xf32>
    %c71 = arith.constant 71 : index
    %360 = memref.load %arg2[%c71] : memref<144xf32, #tpu.memory_space<smem>>
    %361 = vector.broadcast %360 : f32 to vector<8x128xf32>
    %362 = arith.mulf %361, %10 : vector<8x128xf32>
    %363 = arith.addf %359, %362 : vector<8x128xf32>
    %c7_40 = arith.constant 7 : index
    %364 = memref.load %arg3[%c7_40] : memref<16xf32, #tpu.memory_space<smem>>
    %365 = vector.broadcast %364 : f32 to vector<8x128xf32>
    %366 = arith.addf %363, %365 : vector<8x128xf32>
    %cst_41 = arith.constant 0.000000e+00 : f32
    %367 = vector.broadcast %cst_41 : f32 to vector<8x128xf32>
    %368 = arith.maximumf %366, %367 : vector<8x128xf32>
    %c896 = arith.constant 896 : index
    %c0_42 = arith.constant 0 : index
    %369 = vector.load %arg4[%c896, %c0_42] : memref<2048x128xf32, #tpu.memory_space<vmem>>, vector<128x128xf32>
    %cst_43 = arith.constant dense<0.000000e+00> : vector<8x128xf32>
    %370 = tpu.matmul %368, %369, %cst_43 {dimension_numbers = #tpu.dot_dimension_numbers<[1], [0], [0], [1], [0, 0, 1, 1], [], []>} : vector<8x128xf32>, vector<128x128xf32>, vector<8x128xf32> -> vector<8x128xf32>
    %371 = arith.addf %326, %370 : vector<8x128xf32>
    %cst_44 = arith.constant 0.000000e+00 : f32
    %372 = vector.broadcast %cst_44 : f32 to vector<8x128xf32>
    %c72 = arith.constant 72 : index
    %373 = memref.load %arg2[%c72] : memref<144xf32, #tpu.memory_space<smem>>
    %374 = vector.broadcast %373 : f32 to vector<8x128xf32>
    %375 = arith.mulf %374, %2 : vector<8x128xf32>
    %376 = arith.addf %372, %375 : vector<8x128xf32>
    %c73 = arith.constant 73 : index
    %377 = memref.load %arg2[%c73] : memref<144xf32, #tpu.memory_space<smem>>
    %378 = vector.broadcast %377 : f32 to vector<8x128xf32>
    %379 = arith.mulf %378, %3 : vector<8x128xf32>
    %380 = arith.addf %376, %379 : vector<8x128xf32>
    %c74 = arith.constant 74 : index
    %381 = memref.load %arg2[%c74] : memref<144xf32, #tpu.memory_space<smem>>
    %382 = vector.broadcast %381 : f32 to vector<8x128xf32>
    %383 = arith.mulf %382, %4 : vector<8x128xf32>
    %384 = arith.addf %380, %383 : vector<8x128xf32>
    %c75 = arith.constant 75 : index
    %385 = memref.load %arg2[%c75] : memref<144xf32, #tpu.memory_space<smem>>
    %386 = vector.broadcast %385 : f32 to vector<8x128xf32>
    %387 = arith.mulf %386, %5 : vector<8x128xf32>
    %388 = arith.addf %384, %387 : vector<8x128xf32>
    %c76 = arith.constant 76 : index
    %389 = memref.load %arg2[%c76] : memref<144xf32, #tpu.memory_space<smem>>
    %390 = vector.broadcast %389 : f32 to vector<8x128xf32>
    %391 = arith.mulf %390, %6 : vector<8x128xf32>
    %392 = arith.addf %388, %391 : vector<8x128xf32>
    %c77 = arith.constant 77 : index
    %393 = memref.load %arg2[%c77] : memref<144xf32, #tpu.memory_space<smem>>
    %394 = vector.broadcast %393 : f32 to vector<8x128xf32>
    %395 = arith.mulf %394, %7 : vector<8x128xf32>
    %396 = arith.addf %392, %395 : vector<8x128xf32>
    %c78 = arith.constant 78 : index
    %397 = memref.load %arg2[%c78] : memref<144xf32, #tpu.memory_space<smem>>
    %398 = vector.broadcast %397 : f32 to vector<8x128xf32>
    %399 = arith.mulf %398, %8 : vector<8x128xf32>
    %400 = arith.addf %396, %399 : vector<8x128xf32>
    %c79 = arith.constant 79 : index
    %401 = memref.load %arg2[%c79] : memref<144xf32, #tpu.memory_space<smem>>
    %402 = vector.broadcast %401 : f32 to vector<8x128xf32>
    %403 = arith.mulf %402, %9 : vector<8x128xf32>
    %404 = arith.addf %400, %403 : vector<8x128xf32>
    %c80 = arith.constant 80 : index
    %405 = memref.load %arg2[%c80] : memref<144xf32, #tpu.memory_space<smem>>
    %406 = vector.broadcast %405 : f32 to vector<8x128xf32>
    %407 = arith.mulf %406, %10 : vector<8x128xf32>
    %408 = arith.addf %404, %407 : vector<8x128xf32>
    %c8_45 = arith.constant 8 : index
    %409 = memref.load %arg3[%c8_45] : memref<16xf32, #tpu.memory_space<smem>>
    %410 = vector.broadcast %409 : f32 to vector<8x128xf32>
    %411 = arith.addf %408, %410 : vector<8x128xf32>
    %cst_46 = arith.constant 0.000000e+00 : f32
    %412 = vector.broadcast %cst_46 : f32 to vector<8x128xf32>
    %413 = arith.maximumf %411, %412 : vector<8x128xf32>
    %c1024 = arith.constant 1024 : index
    %c0_47 = arith.constant 0 : index
    %414 = vector.load %arg4[%c1024, %c0_47] : memref<2048x128xf32, #tpu.memory_space<vmem>>, vector<128x128xf32>
    %cst_48 = arith.constant dense<0.000000e+00> : vector<8x128xf32>
    %415 = tpu.matmul %413, %414, %cst_48 {dimension_numbers = #tpu.dot_dimension_numbers<[1], [0], [0], [1], [0, 0, 1, 1], [], []>} : vector<8x128xf32>, vector<128x128xf32>, vector<8x128xf32> -> vector<8x128xf32>
    %416 = arith.addf %371, %415 : vector<8x128xf32>
    %cst_49 = arith.constant 0.000000e+00 : f32
    %417 = vector.broadcast %cst_49 : f32 to vector<8x128xf32>
    %c81 = arith.constant 81 : index
    %418 = memref.load %arg2[%c81] : memref<144xf32, #tpu.memory_space<smem>>
    %419 = vector.broadcast %418 : f32 to vector<8x128xf32>
    %420 = arith.mulf %419, %2 : vector<8x128xf32>
    %421 = arith.addf %417, %420 : vector<8x128xf32>
    %c82 = arith.constant 82 : index
    %422 = memref.load %arg2[%c82] : memref<144xf32, #tpu.memory_space<smem>>
    %423 = vector.broadcast %422 : f32 to vector<8x128xf32>
    %424 = arith.mulf %423, %3 : vector<8x128xf32>
    %425 = arith.addf %421, %424 : vector<8x128xf32>
    %c83 = arith.constant 83 : index
    %426 = memref.load %arg2[%c83] : memref<144xf32, #tpu.memory_space<smem>>
    %427 = vector.broadcast %426 : f32 to vector<8x128xf32>
    %428 = arith.mulf %427, %4 : vector<8x128xf32>
    %429 = arith.addf %425, %428 : vector<8x128xf32>
    %c84 = arith.constant 84 : index
    %430 = memref.load %arg2[%c84] : memref<144xf32, #tpu.memory_space<smem>>
    %431 = vector.broadcast %430 : f32 to vector<8x128xf32>
    %432 = arith.mulf %431, %5 : vector<8x128xf32>
    %433 = arith.addf %429, %432 : vector<8x128xf32>
    %c85 = arith.constant 85 : index
    %434 = memref.load %arg2[%c85] : memref<144xf32, #tpu.memory_space<smem>>
    %435 = vector.broadcast %434 : f32 to vector<8x128xf32>
    %436 = arith.mulf %435, %6 : vector<8x128xf32>
    %437 = arith.addf %433, %436 : vector<8x128xf32>
    %c86 = arith.constant 86 : index
    %438 = memref.load %arg2[%c86] : memref<144xf32, #tpu.memory_space<smem>>
    %439 = vector.broadcast %438 : f32 to vector<8x128xf32>
    %440 = arith.mulf %439, %7 : vector<8x128xf32>
    %441 = arith.addf %437, %440 : vector<8x128xf32>
    %c87 = arith.constant 87 : index
    %442 = memref.load %arg2[%c87] : memref<144xf32, #tpu.memory_space<smem>>
    %443 = vector.broadcast %442 : f32 to vector<8x128xf32>
    %444 = arith.mulf %443, %8 : vector<8x128xf32>
    %445 = arith.addf %441, %444 : vector<8x128xf32>
    %c88 = arith.constant 88 : index
    %446 = memref.load %arg2[%c88] : memref<144xf32, #tpu.memory_space<smem>>
    %447 = vector.broadcast %446 : f32 to vector<8x128xf32>
    %448 = arith.mulf %447, %9 : vector<8x128xf32>
    %449 = arith.addf %445, %448 : vector<8x128xf32>
    %c89 = arith.constant 89 : index
    %450 = memref.load %arg2[%c89] : memref<144xf32, #tpu.memory_space<smem>>
    %451 = vector.broadcast %450 : f32 to vector<8x128xf32>
    %452 = arith.mulf %451, %10 : vector<8x128xf32>
    %453 = arith.addf %449, %452 : vector<8x128xf32>
    %c9_50 = arith.constant 9 : index
    %454 = memref.load %arg3[%c9_50] : memref<16xf32, #tpu.memory_space<smem>>
    %455 = vector.broadcast %454 : f32 to vector<8x128xf32>
    %456 = arith.addf %453, %455 : vector<8x128xf32>
    %cst_51 = arith.constant 0.000000e+00 : f32
    %457 = vector.broadcast %cst_51 : f32 to vector<8x128xf32>
    %458 = arith.maximumf %456, %457 : vector<8x128xf32>
    %c1152 = arith.constant 1152 : index
    %c0_52 = arith.constant 0 : index
    %459 = vector.load %arg4[%c1152, %c0_52] : memref<2048x128xf32, #tpu.memory_space<vmem>>, vector<128x128xf32>
    %cst_53 = arith.constant dense<0.000000e+00> : vector<8x128xf32>
    %460 = tpu.matmul %458, %459, %cst_53 {dimension_numbers = #tpu.dot_dimension_numbers<[1], [0], [0], [1], [0, 0, 1, 1], [], []>} : vector<8x128xf32>, vector<128x128xf32>, vector<8x128xf32> -> vector<8x128xf32>
    %461 = arith.addf %416, %460 : vector<8x128xf32>
    %cst_54 = arith.constant 0.000000e+00 : f32
    %462 = vector.broadcast %cst_54 : f32 to vector<8x128xf32>
    %c90 = arith.constant 90 : index
    %463 = memref.load %arg2[%c90] : memref<144xf32, #tpu.memory_space<smem>>
    %464 = vector.broadcast %463 : f32 to vector<8x128xf32>
    %465 = arith.mulf %464, %2 : vector<8x128xf32>
    %466 = arith.addf %462, %465 : vector<8x128xf32>
    %c91 = arith.constant 91 : index
    %467 = memref.load %arg2[%c91] : memref<144xf32, #tpu.memory_space<smem>>
    %468 = vector.broadcast %467 : f32 to vector<8x128xf32>
    %469 = arith.mulf %468, %3 : vector<8x128xf32>
    %470 = arith.addf %466, %469 : vector<8x128xf32>
    %c92 = arith.constant 92 : index
    %471 = memref.load %arg2[%c92] : memref<144xf32, #tpu.memory_space<smem>>
    %472 = vector.broadcast %471 : f32 to vector<8x128xf32>
    %473 = arith.mulf %472, %4 : vector<8x128xf32>
    %474 = arith.addf %470, %473 : vector<8x128xf32>
    %c93 = arith.constant 93 : index
    %475 = memref.load %arg2[%c93] : memref<144xf32, #tpu.memory_space<smem>>
    %476 = vector.broadcast %475 : f32 to vector<8x128xf32>
    %477 = arith.mulf %476, %5 : vector<8x128xf32>
    %478 = arith.addf %474, %477 : vector<8x128xf32>
    %c94 = arith.constant 94 : index
    %479 = memref.load %arg2[%c94] : memref<144xf32, #tpu.memory_space<smem>>
    %480 = vector.broadcast %479 : f32 to vector<8x128xf32>
    %481 = arith.mulf %480, %6 : vector<8x128xf32>
    %482 = arith.addf %478, %481 : vector<8x128xf32>
    %c95 = arith.constant 95 : index
    %483 = memref.load %arg2[%c95] : memref<144xf32, #tpu.memory_space<smem>>
    %484 = vector.broadcast %483 : f32 to vector<8x128xf32>
    %485 = arith.mulf %484, %7 : vector<8x128xf32>
    %486 = arith.addf %482, %485 : vector<8x128xf32>
    %c96 = arith.constant 96 : index
    %487 = memref.load %arg2[%c96] : memref<144xf32, #tpu.memory_space<smem>>
    %488 = vector.broadcast %487 : f32 to vector<8x128xf32>
    %489 = arith.mulf %488, %8 : vector<8x128xf32>
    %490 = arith.addf %486, %489 : vector<8x128xf32>
    %c97 = arith.constant 97 : index
    %491 = memref.load %arg2[%c97] : memref<144xf32, #tpu.memory_space<smem>>
    %492 = vector.broadcast %491 : f32 to vector<8x128xf32>
    %493 = arith.mulf %492, %9 : vector<8x128xf32>
    %494 = arith.addf %490, %493 : vector<8x128xf32>
    %c98 = arith.constant 98 : index
    %495 = memref.load %arg2[%c98] : memref<144xf32, #tpu.memory_space<smem>>
    %496 = vector.broadcast %495 : f32 to vector<8x128xf32>
    %497 = arith.mulf %496, %10 : vector<8x128xf32>
    %498 = arith.addf %494, %497 : vector<8x128xf32>
    %c10_55 = arith.constant 10 : index
    %499 = memref.load %arg3[%c10_55] : memref<16xf32, #tpu.memory_space<smem>>
    %500 = vector.broadcast %499 : f32 to vector<8x128xf32>
    %501 = arith.addf %498, %500 : vector<8x128xf32>
    %cst_56 = arith.constant 0.000000e+00 : f32
    %502 = vector.broadcast %cst_56 : f32 to vector<8x128xf32>
    %503 = arith.maximumf %501, %502 : vector<8x128xf32>
    %c1280 = arith.constant 1280 : index
    %c0_57 = arith.constant 0 : index
    %504 = vector.load %arg4[%c1280, %c0_57] : memref<2048x128xf32, #tpu.memory_space<vmem>>, vector<128x128xf32>
    %cst_58 = arith.constant dense<0.000000e+00> : vector<8x128xf32>
    %505 = tpu.matmul %503, %504, %cst_58 {dimension_numbers = #tpu.dot_dimension_numbers<[1], [0], [0], [1], [0, 0, 1, 1], [], []>} : vector<8x128xf32>, vector<128x128xf32>, vector<8x128xf32> -> vector<8x128xf32>
    %506 = arith.addf %461, %505 : vector<8x128xf32>
    %cst_59 = arith.constant 0.000000e+00 : f32
    %507 = vector.broadcast %cst_59 : f32 to vector<8x128xf32>
    %c99 = arith.constant 99 : index
    %508 = memref.load %arg2[%c99] : memref<144xf32, #tpu.memory_space<smem>>
    %509 = vector.broadcast %508 : f32 to vector<8x128xf32>
    %510 = arith.mulf %509, %2 : vector<8x128xf32>
    %511 = arith.addf %507, %510 : vector<8x128xf32>
    %c100 = arith.constant 100 : index
    %512 = memref.load %arg2[%c100] : memref<144xf32, #tpu.memory_space<smem>>
    %513 = vector.broadcast %512 : f32 to vector<8x128xf32>
    %514 = arith.mulf %513, %3 : vector<8x128xf32>
    %515 = arith.addf %511, %514 : vector<8x128xf32>
    %c101 = arith.constant 101 : index
    %516 = memref.load %arg2[%c101] : memref<144xf32, #tpu.memory_space<smem>>
    %517 = vector.broadcast %516 : f32 to vector<8x128xf32>
    %518 = arith.mulf %517, %4 : vector<8x128xf32>
    %519 = arith.addf %515, %518 : vector<8x128xf32>
    %c102 = arith.constant 102 : index
    %520 = memref.load %arg2[%c102] : memref<144xf32, #tpu.memory_space<smem>>
    %521 = vector.broadcast %520 : f32 to vector<8x128xf32>
    %522 = arith.mulf %521, %5 : vector<8x128xf32>
    %523 = arith.addf %519, %522 : vector<8x128xf32>
    %c103 = arith.constant 103 : index
    %524 = memref.load %arg2[%c103] : memref<144xf32, #tpu.memory_space<smem>>
    %525 = vector.broadcast %524 : f32 to vector<8x128xf32>
    %526 = arith.mulf %525, %6 : vector<8x128xf32>
    %527 = arith.addf %523, %526 : vector<8x128xf32>
    %c104 = arith.constant 104 : index
    %528 = memref.load %arg2[%c104] : memref<144xf32, #tpu.memory_space<smem>>
    %529 = vector.broadcast %528 : f32 to vector<8x128xf32>
    %530 = arith.mulf %529, %7 : vector<8x128xf32>
    %531 = arith.addf %527, %530 : vector<8x128xf32>
    %c105 = arith.constant 105 : index
    %532 = memref.load %arg2[%c105] : memref<144xf32, #tpu.memory_space<smem>>
    %533 = vector.broadcast %532 : f32 to vector<8x128xf32>
    %534 = arith.mulf %533, %8 : vector<8x128xf32>
    %535 = arith.addf %531, %534 : vector<8x128xf32>
    %c106 = arith.constant 106 : index
    %536 = memref.load %arg2[%c106] : memref<144xf32, #tpu.memory_space<smem>>
    %537 = vector.broadcast %536 : f32 to vector<8x128xf32>
    %538 = arith.mulf %537, %9 : vector<8x128xf32>
    %539 = arith.addf %535, %538 : vector<8x128xf32>
    %c107 = arith.constant 107 : index
    %540 = memref.load %arg2[%c107] : memref<144xf32, #tpu.memory_space<smem>>
    %541 = vector.broadcast %540 : f32 to vector<8x128xf32>
    %542 = arith.mulf %541, %10 : vector<8x128xf32>
    %543 = arith.addf %539, %542 : vector<8x128xf32>
    %c11_60 = arith.constant 11 : index
    %544 = memref.load %arg3[%c11_60] : memref<16xf32, #tpu.memory_space<smem>>
    %545 = vector.broadcast %544 : f32 to vector<8x128xf32>
    %546 = arith.addf %543, %545 : vector<8x128xf32>
    %cst_61 = arith.constant 0.000000e+00 : f32
    %547 = vector.broadcast %cst_61 : f32 to vector<8x128xf32>
    %548 = arith.maximumf %546, %547 : vector<8x128xf32>
    %c1408 = arith.constant 1408 : index
    %c0_62 = arith.constant 0 : index
    %549 = vector.load %arg4[%c1408, %c0_62] : memref<2048x128xf32, #tpu.memory_space<vmem>>, vector<128x128xf32>
    %cst_63 = arith.constant dense<0.000000e+00> : vector<8x128xf32>
    %550 = tpu.matmul %548, %549, %cst_63 {dimension_numbers = #tpu.dot_dimension_numbers<[1], [0], [0], [1], [0, 0, 1, 1], [], []>} : vector<8x128xf32>, vector<128x128xf32>, vector<8x128xf32> -> vector<8x128xf32>
    %551 = arith.addf %506, %550 : vector<8x128xf32>
    %cst_64 = arith.constant 0.000000e+00 : f32
    %552 = vector.broadcast %cst_64 : f32 to vector<8x128xf32>
    %c108 = arith.constant 108 : index
    %553 = memref.load %arg2[%c108] : memref<144xf32, #tpu.memory_space<smem>>
    %554 = vector.broadcast %553 : f32 to vector<8x128xf32>
    %555 = arith.mulf %554, %2 : vector<8x128xf32>
    %556 = arith.addf %552, %555 : vector<8x128xf32>
    %c109 = arith.constant 109 : index
    %557 = memref.load %arg2[%c109] : memref<144xf32, #tpu.memory_space<smem>>
    %558 = vector.broadcast %557 : f32 to vector<8x128xf32>
    %559 = arith.mulf %558, %3 : vector<8x128xf32>
    %560 = arith.addf %556, %559 : vector<8x128xf32>
    %c110 = arith.constant 110 : index
    %561 = memref.load %arg2[%c110] : memref<144xf32, #tpu.memory_space<smem>>
    %562 = vector.broadcast %561 : f32 to vector<8x128xf32>
    %563 = arith.mulf %562, %4 : vector<8x128xf32>
    %564 = arith.addf %560, %563 : vector<8x128xf32>
    %c111 = arith.constant 111 : index
    %565 = memref.load %arg2[%c111] : memref<144xf32, #tpu.memory_space<smem>>
    %566 = vector.broadcast %565 : f32 to vector<8x128xf32>
    %567 = arith.mulf %566, %5 : vector<8x128xf32>
    %568 = arith.addf %564, %567 : vector<8x128xf32>
    %c112 = arith.constant 112 : index
    %569 = memref.load %arg2[%c112] : memref<144xf32, #tpu.memory_space<smem>>
    %570 = vector.broadcast %569 : f32 to vector<8x128xf32>
    %571 = arith.mulf %570, %6 : vector<8x128xf32>
    %572 = arith.addf %568, %571 : vector<8x128xf32>
    %c113 = arith.constant 113 : index
    %573 = memref.load %arg2[%c113] : memref<144xf32, #tpu.memory_space<smem>>
    %574 = vector.broadcast %573 : f32 to vector<8x128xf32>
    %575 = arith.mulf %574, %7 : vector<8x128xf32>
    %576 = arith.addf %572, %575 : vector<8x128xf32>
    %c114 = arith.constant 114 : index
    %577 = memref.load %arg2[%c114] : memref<144xf32, #tpu.memory_space<smem>>
    %578 = vector.broadcast %577 : f32 to vector<8x128xf32>
    %579 = arith.mulf %578, %8 : vector<8x128xf32>
    %580 = arith.addf %576, %579 : vector<8x128xf32>
    %c115 = arith.constant 115 : index
    %581 = memref.load %arg2[%c115] : memref<144xf32, #tpu.memory_space<smem>>
    %582 = vector.broadcast %581 : f32 to vector<8x128xf32>
    %583 = arith.mulf %582, %9 : vector<8x128xf32>
    %584 = arith.addf %580, %583 : vector<8x128xf32>
    %c116 = arith.constant 116 : index
    %585 = memref.load %arg2[%c116] : memref<144xf32, #tpu.memory_space<smem>>
    %586 = vector.broadcast %585 : f32 to vector<8x128xf32>
    %587 = arith.mulf %586, %10 : vector<8x128xf32>
    %588 = arith.addf %584, %587 : vector<8x128xf32>
    %c12_65 = arith.constant 12 : index
    %589 = memref.load %arg3[%c12_65] : memref<16xf32, #tpu.memory_space<smem>>
    %590 = vector.broadcast %589 : f32 to vector<8x128xf32>
    %591 = arith.addf %588, %590 : vector<8x128xf32>
    %cst_66 = arith.constant 0.000000e+00 : f32
    %592 = vector.broadcast %cst_66 : f32 to vector<8x128xf32>
    %593 = arith.maximumf %591, %592 : vector<8x128xf32>
    %c1536 = arith.constant 1536 : index
    %c0_67 = arith.constant 0 : index
    %594 = vector.load %arg4[%c1536, %c0_67] : memref<2048x128xf32, #tpu.memory_space<vmem>>, vector<128x128xf32>
    %cst_68 = arith.constant dense<0.000000e+00> : vector<8x128xf32>
    %595 = tpu.matmul %593, %594, %cst_68 {dimension_numbers = #tpu.dot_dimension_numbers<[1], [0], [0], [1], [0, 0, 1, 1], [], []>} : vector<8x128xf32>, vector<128x128xf32>, vector<8x128xf32> -> vector<8x128xf32>
    %596 = arith.addf %551, %595 : vector<8x128xf32>
    %cst_69 = arith.constant 0.000000e+00 : f32
    %597 = vector.broadcast %cst_69 : f32 to vector<8x128xf32>
    %c117 = arith.constant 117 : index
    %598 = memref.load %arg2[%c117] : memref<144xf32, #tpu.memory_space<smem>>
    %599 = vector.broadcast %598 : f32 to vector<8x128xf32>
    %600 = arith.mulf %599, %2 : vector<8x128xf32>
    %601 = arith.addf %597, %600 : vector<8x128xf32>
    %c118 = arith.constant 118 : index
    %602 = memref.load %arg2[%c118] : memref<144xf32, #tpu.memory_space<smem>>
    %603 = vector.broadcast %602 : f32 to vector<8x128xf32>
    %604 = arith.mulf %603, %3 : vector<8x128xf32>
    %605 = arith.addf %601, %604 : vector<8x128xf32>
    %c119 = arith.constant 119 : index
    %606 = memref.load %arg2[%c119] : memref<144xf32, #tpu.memory_space<smem>>
    %607 = vector.broadcast %606 : f32 to vector<8x128xf32>
    %608 = arith.mulf %607, %4 : vector<8x128xf32>
    %609 = arith.addf %605, %608 : vector<8x128xf32>
    %c120 = arith.constant 120 : index
    %610 = memref.load %arg2[%c120] : memref<144xf32, #tpu.memory_space<smem>>
    %611 = vector.broadcast %610 : f32 to vector<8x128xf32>
    %612 = arith.mulf %611, %5 : vector<8x128xf32>
    %613 = arith.addf %609, %612 : vector<8x128xf32>
    %c121 = arith.constant 121 : index
    %614 = memref.load %arg2[%c121] : memref<144xf32, #tpu.memory_space<smem>>
    %615 = vector.broadcast %614 : f32 to vector<8x128xf32>
    %616 = arith.mulf %615, %6 : vector<8x128xf32>
    %617 = arith.addf %613, %616 : vector<8x128xf32>
    %c122 = arith.constant 122 : index
    %618 = memref.load %arg2[%c122] : memref<144xf32, #tpu.memory_space<smem>>
    %619 = vector.broadcast %618 : f32 to vector<8x128xf32>
    %620 = arith.mulf %619, %7 : vector<8x128xf32>
    %621 = arith.addf %617, %620 : vector<8x128xf32>
    %c123 = arith.constant 123 : index
    %622 = memref.load %arg2[%c123] : memref<144xf32, #tpu.memory_space<smem>>
    %623 = vector.broadcast %622 : f32 to vector<8x128xf32>
    %624 = arith.mulf %623, %8 : vector<8x128xf32>
    %625 = arith.addf %621, %624 : vector<8x128xf32>
    %c124 = arith.constant 124 : index
    %626 = memref.load %arg2[%c124] : memref<144xf32, #tpu.memory_space<smem>>
    %627 = vector.broadcast %626 : f32 to vector<8x128xf32>
    %628 = arith.mulf %627, %9 : vector<8x128xf32>
    %629 = arith.addf %625, %628 : vector<8x128xf32>
    %c125 = arith.constant 125 : index
    %630 = memref.load %arg2[%c125] : memref<144xf32, #tpu.memory_space<smem>>
    %631 = vector.broadcast %630 : f32 to vector<8x128xf32>
    %632 = arith.mulf %631, %10 : vector<8x128xf32>
    %633 = arith.addf %629, %632 : vector<8x128xf32>
    %c13_70 = arith.constant 13 : index
    %634 = memref.load %arg3[%c13_70] : memref<16xf32, #tpu.memory_space<smem>>
    %635 = vector.broadcast %634 : f32 to vector<8x128xf32>
    %636 = arith.addf %633, %635 : vector<8x128xf32>
    %cst_71 = arith.constant 0.000000e+00 : f32
    %637 = vector.broadcast %cst_71 : f32 to vector<8x128xf32>
    %638 = arith.maximumf %636, %637 : vector<8x128xf32>
    %c1664 = arith.constant 1664 : index
    %c0_72 = arith.constant 0 : index
    %639 = vector.load %arg4[%c1664, %c0_72] : memref<2048x128xf32, #tpu.memory_space<vmem>>, vector<128x128xf32>
    %cst_73 = arith.constant dense<0.000000e+00> : vector<8x128xf32>
    %640 = tpu.matmul %638, %639, %cst_73 {dimension_numbers = #tpu.dot_dimension_numbers<[1], [0], [0], [1], [0, 0, 1, 1], [], []>} : vector<8x128xf32>, vector<128x128xf32>, vector<8x128xf32> -> vector<8x128xf32>
    %641 = arith.addf %596, %640 : vector<8x128xf32>
    %cst_74 = arith.constant 0.000000e+00 : f32
    %642 = vector.broadcast %cst_74 : f32 to vector<8x128xf32>
    %c126 = arith.constant 126 : index
    %643 = memref.load %arg2[%c126] : memref<144xf32, #tpu.memory_space<smem>>
    %644 = vector.broadcast %643 : f32 to vector<8x128xf32>
    %645 = arith.mulf %644, %2 : vector<8x128xf32>
    %646 = arith.addf %642, %645 : vector<8x128xf32>
    %c127 = arith.constant 127 : index
    %647 = memref.load %arg2[%c127] : memref<144xf32, #tpu.memory_space<smem>>
    %648 = vector.broadcast %647 : f32 to vector<8x128xf32>
    %649 = arith.mulf %648, %3 : vector<8x128xf32>
    %650 = arith.addf %646, %649 : vector<8x128xf32>
    %c128_75 = arith.constant 128 : index
    %651 = memref.load %arg2[%c128_75] : memref<144xf32, #tpu.memory_space<smem>>
    %652 = vector.broadcast %651 : f32 to vector<8x128xf32>
    %653 = arith.mulf %652, %4 : vector<8x128xf32>
    %654 = arith.addf %650, %653 : vector<8x128xf32>
    %c129 = arith.constant 129 : index
    %655 = memref.load %arg2[%c129] : memref<144xf32, #tpu.memory_space<smem>>
    %656 = vector.broadcast %655 : f32 to vector<8x128xf32>
    %657 = arith.mulf %656, %5 : vector<8x128xf32>
    %658 = arith.addf %654, %657 : vector<8x128xf32>
    %c130 = arith.constant 130 : index
    %659 = memref.load %arg2[%c130] : memref<144xf32, #tpu.memory_space<smem>>
    %660 = vector.broadcast %659 : f32 to vector<8x128xf32>
    %661 = arith.mulf %660, %6 : vector<8x128xf32>
    %662 = arith.addf %658, %661 : vector<8x128xf32>
    %c131 = arith.constant 131 : index
    %663 = memref.load %arg2[%c131] : memref<144xf32, #tpu.memory_space<smem>>
    %664 = vector.broadcast %663 : f32 to vector<8x128xf32>
    %665 = arith.mulf %664, %7 : vector<8x128xf32>
    %666 = arith.addf %662, %665 : vector<8x128xf32>
    %c132 = arith.constant 132 : index
    %667 = memref.load %arg2[%c132] : memref<144xf32, #tpu.memory_space<smem>>
    %668 = vector.broadcast %667 : f32 to vector<8x128xf32>
    %669 = arith.mulf %668, %8 : vector<8x128xf32>
    %670 = arith.addf %666, %669 : vector<8x128xf32>
    %c133 = arith.constant 133 : index
    %671 = memref.load %arg2[%c133] : memref<144xf32, #tpu.memory_space<smem>>
    %672 = vector.broadcast %671 : f32 to vector<8x128xf32>
    %673 = arith.mulf %672, %9 : vector<8x128xf32>
    %674 = arith.addf %670, %673 : vector<8x128xf32>
    %c134 = arith.constant 134 : index
    %675 = memref.load %arg2[%c134] : memref<144xf32, #tpu.memory_space<smem>>
    %676 = vector.broadcast %675 : f32 to vector<8x128xf32>
    %677 = arith.mulf %676, %10 : vector<8x128xf32>
    %678 = arith.addf %674, %677 : vector<8x128xf32>
    %c14_76 = arith.constant 14 : index
    %679 = memref.load %arg3[%c14_76] : memref<16xf32, #tpu.memory_space<smem>>
    %680 = vector.broadcast %679 : f32 to vector<8x128xf32>
    %681 = arith.addf %678, %680 : vector<8x128xf32>
    %cst_77 = arith.constant 0.000000e+00 : f32
    %682 = vector.broadcast %cst_77 : f32 to vector<8x128xf32>
    %683 = arith.maximumf %681, %682 : vector<8x128xf32>
    %c1792 = arith.constant 1792 : index
    %c0_78 = arith.constant 0 : index
    %684 = vector.load %arg4[%c1792, %c0_78] : memref<2048x128xf32, #tpu.memory_space<vmem>>, vector<128x128xf32>
    %cst_79 = arith.constant dense<0.000000e+00> : vector<8x128xf32>
    %685 = tpu.matmul %683, %684, %cst_79 {dimension_numbers = #tpu.dot_dimension_numbers<[1], [0], [0], [1], [0, 0, 1, 1], [], []>} : vector<8x128xf32>, vector<128x128xf32>, vector<8x128xf32> -> vector<8x128xf32>
    %686 = arith.addf %641, %685 : vector<8x128xf32>
    %cst_80 = arith.constant 0.000000e+00 : f32
    %687 = vector.broadcast %cst_80 : f32 to vector<8x128xf32>
    %c135 = arith.constant 135 : index
    %688 = memref.load %arg2[%c135] : memref<144xf32, #tpu.memory_space<smem>>
    %689 = vector.broadcast %688 : f32 to vector<8x128xf32>
    %690 = arith.mulf %689, %2 : vector<8x128xf32>
    %691 = arith.addf %687, %690 : vector<8x128xf32>
    %c136 = arith.constant 136 : index
    %692 = memref.load %arg2[%c136] : memref<144xf32, #tpu.memory_space<smem>>
    %693 = vector.broadcast %692 : f32 to vector<8x128xf32>
    %694 = arith.mulf %693, %3 : vector<8x128xf32>
    %695 = arith.addf %691, %694 : vector<8x128xf32>
    %c137 = arith.constant 137 : index
    %696 = memref.load %arg2[%c137] : memref<144xf32, #tpu.memory_space<smem>>
    %697 = vector.broadcast %696 : f32 to vector<8x128xf32>
    %698 = arith.mulf %697, %4 : vector<8x128xf32>
    %699 = arith.addf %695, %698 : vector<8x128xf32>
    %c138 = arith.constant 138 : index
    %700 = memref.load %arg2[%c138] : memref<144xf32, #tpu.memory_space<smem>>
    %701 = vector.broadcast %700 : f32 to vector<8x128xf32>
    %702 = arith.mulf %701, %5 : vector<8x128xf32>
    %703 = arith.addf %699, %702 : vector<8x128xf32>
    %c139 = arith.constant 139 : index
    %704 = memref.load %arg2[%c139] : memref<144xf32, #tpu.memory_space<smem>>
    %705 = vector.broadcast %704 : f32 to vector<8x128xf32>
    %706 = arith.mulf %705, %6 : vector<8x128xf32>
    %707 = arith.addf %703, %706 : vector<8x128xf32>
    %c140 = arith.constant 140 : index
    %708 = memref.load %arg2[%c140] : memref<144xf32, #tpu.memory_space<smem>>
    %709 = vector.broadcast %708 : f32 to vector<8x128xf32>
    %710 = arith.mulf %709, %7 : vector<8x128xf32>
    %711 = arith.addf %707, %710 : vector<8x128xf32>
    %c141 = arith.constant 141 : index
    %712 = memref.load %arg2[%c141] : memref<144xf32, #tpu.memory_space<smem>>
    %713 = vector.broadcast %712 : f32 to vector<8x128xf32>
    %714 = arith.mulf %713, %8 : vector<8x128xf32>
    %715 = arith.addf %711, %714 : vector<8x128xf32>
    %c142 = arith.constant 142 : index
    %716 = memref.load %arg2[%c142] : memref<144xf32, #tpu.memory_space<smem>>
    %717 = vector.broadcast %716 : f32 to vector<8x128xf32>
    %718 = arith.mulf %717, %9 : vector<8x128xf32>
    %719 = arith.addf %715, %718 : vector<8x128xf32>
    %c143 = arith.constant 143 : index
    %720 = memref.load %arg2[%c143] : memref<144xf32, #tpu.memory_space<smem>>
    %721 = vector.broadcast %720 : f32 to vector<8x128xf32>
    %722 = arith.mulf %721, %10 : vector<8x128xf32>
    %723 = arith.addf %719, %722 : vector<8x128xf32>
    %c15_81 = arith.constant 15 : index
    %724 = memref.load %arg3[%c15_81] : memref<16xf32, #tpu.memory_space<smem>>
    %725 = vector.broadcast %724 : f32 to vector<8x128xf32>
    %726 = arith.addf %723, %725 : vector<8x128xf32>
    %cst_82 = arith.constant 0.000000e+00 : f32
    %727 = vector.broadcast %cst_82 : f32 to vector<8x128xf32>
    %728 = arith.maximumf %726, %727 : vector<8x128xf32>
    %c1920 = arith.constant 1920 : index
    %c0_83 = arith.constant 0 : index
    %729 = vector.load %arg4[%c1920, %c0_83] : memref<2048x128xf32, #tpu.memory_space<vmem>>, vector<128x128xf32>
    %cst_84 = arith.constant dense<0.000000e+00> : vector<8x128xf32>
    %730 = tpu.matmul %728, %729, %cst_84 {dimension_numbers = #tpu.dot_dimension_numbers<[1], [0], [0], [1], [0, 0, 1, 1], [], []>} : vector<8x128xf32>, vector<128x128xf32>, vector<8x128xf32> -> vector<8x128xf32>
    %731 = arith.addf %686, %730 : vector<8x128xf32>
    %c0_85 = arith.constant 0 : index
    %c0_86 = arith.constant 0 : index
    %732 = vector.load %arg5[%c0_85, %c0_86] : memref<1x128xf32, #tpu.memory_space<vmem>>, vector<1x128xf32>
    %733 = vector.broadcast %732 : vector<1x128xf32> to vector<8x128xf32>
    %734 = arith.addf %731, %733 : vector<8x128xf32>
    %c0_87 = arith.constant 0 : index
    %c0_88 = arith.constant 0 : index
    %c0_89 = arith.constant 0 : index
    %735 = vector.load %arg6[%c0_87, %c0_88, %c0_89] : memref<1x8x128xf32, #tpu.memory_space<vmem>>, vector<1x8x128xf32>
    %736 = vector.shape_cast %735 : vector<1x8x128xf32> to vector<8x128xf32>
    %737 = vector.shape_cast %734 : vector<8x128xf32> to vector<1x8x128xf32>
    tpu.vector_store %arg6[%c0_87, %c0_88, %c0_89], %737 {strides = array<i32>} : memref<1x8x128xf32, #tpu.memory_space<vmem>>, vector<1x8x128xf32>,
    return
  }
  func.func @transform_0(%arg0: i32) -> (i32, i32, i32) {
    %c0_i32 = arith.constant 0 : i32
    %c0_i32_0 = arith.constant 0 : i32
    %c0_i32_1 = arith.constant 0 : i32
    return %arg0, %c0_i32, %c0_i32_0 : i32, i32, i32
  }
  func.func @transform_1(%arg0: i32) -> i32 {
    %c0_i32 = arith.constant 0 : i32
    %c0_i32_0 = arith.constant 0 : i32
    return %c0_i32 : i32
  }
  func.func @transform_2(%arg0: i32) -> i32 {
    %c0_i32 = arith.constant 0 : i32
    %c0_i32_0 = arith.constant 0 : i32
    return %c0_i32 : i32
  }
  func.func @transform_3(%arg0: i32) -> (i32, i32) {
    %c0_i32 = arith.constant 0 : i32
    %c0_i32_0 = arith.constant 0 : i32
    %c0_i32_1 = arith.constant 0 : i32
    return %c0_i32, %c0_i32_0 : i32, i32
  }
  func.func @transform_4(%arg0: i32) -> (i32, i32) {
    %c0_i32 = arith.constant 0 : i32
    %c0_i32_0 = arith.constant 0 : i32
    %c0_i32_1 = arith.constant 0 : i32
    return %c0_i32, %c0_i32_0 : i32, i32
  }
  func.func @transform_5(%arg0: i32) -> (i32, i32, i32) {
    %c0_i32 = arith.constant 0 : i32
    %c0_i32_0 = arith.constant 0 : i32
    %c0_i32_1 = arith.constant 0 : i32
    return %arg0, %c0_i32, %c0_i32_0 : i32, i32, i32
  }
}

</mosaic_0001>

<llo_original>
// kernel: mi_modelo_forward.3
$region0: #{mi_modelo_forward.3}
  #allocation0 [shape = 'u32[]', space=smem, size = 0x4, offset = 0x4, fixed_abs, tag = 'smem constant byte address 0x4 - core index']
  #allocation1 [shape = 'u32[144,128]{1,0:T(1,128)}', space=vmem, size = 0x12000, scoped, tag = 'internal scratch']
  #allocation2 [shape = 'f32[1,1]{1,0:T(1,128)S(1)}', space=vmem, size = 0x200, scoped, tag = 'scoped memory for mi_modelo_forward.3']
  %s0 = inlined_call_operand.vmem [shape: f32[2,8,128], index: 0, kind: input, shape index: {}]
  %s1 = inlined_call_operand.vmem [shape: f32[32,128], index: 1, kind: input, shape index: {}]
  %s2 = inlined_call_operand.vmem [shape: f32[32,1], index: 2, kind: input, shape index: {}]
  %s3 = inlined_call_operand.<no memory space> [shape: f32[1,1], index: 3, kind: input, shape index: {}]
  %s4 = inlined_call_operand.vmem [shape: f32[2,1], index: 4, kind: output, shape index: {}]
  %s5 = sld [smem:[#allocation0]]
  $region26: #{mi_modelo_forward.3} parent=0
    _
  %s7 = ssub.s32 1, %s5
  %s8 = scalar_select 0, %s7, %s5
  %v9 = vstv %s3
  %10 = vst [vmem:[#allocation2] sm:$0x1] %v9
  // Predicated region
  $region2: #{mi_modelo_forward.3} parent=0 // pred_check
    _
  $region3: #{mi_modelo_forward.3} parent=0 // pred_check_branch
    %12 = sbr.rel (0) target = $region5
  $region4: #{mi_modelo_forward.3} parent=0 // pred_region
    _
  $region5: #{mi_modelo_forward.3} parent=0 // pred_fallthru
    _
  // Predicated region
  $region6: #{mi_modelo_forward.3} parent=0 // pred_check
    _
  $region7: #{mi_modelo_forward.3} parent=0 // pred_check_branch
    %14 = sbr.rel (0) target = $region9
  $region8: #{mi_modelo_forward.3} parent=0 // pred_region
    _
  $region9: #{mi_modelo_forward.3} parent=0 // pred_fallthru
    _
  // Predicated region
  $region10: #{mi_modelo_forward.3} parent=0 // pred_check
    _
  $region11: #{mi_modelo_forward.3} parent=0 // pred_check_branch
    %16 = sbr.rel (0) target = $region13
  $region12: #{mi_modelo_forward.3} parent=0 // pred_region
    _
  $region13: #{mi_modelo_forward.3} parent=0 // pred_fallthru
    _
  // Predicated region
  $region14: #{mi_modelo_forward.3} parent=0 // pred_check
    _
  $region15: #{mi_modelo_forward.3} parent=0 // pred_check_branch
    %18 = sbr.rel (0) target = $region17
  $region16: #{mi_modelo_forward.3} parent=0 // pred_region
    _
  $region17: #{mi_modelo_forward.3} parent=0 // pred_fallthru
    _
  %v19 = vld [vmem:[%s1] sm:$0xff]
  %v20 = vld [vmem:[%s1 + $0x8] sm:$0xff]
  %v21 = vld [vmem:[%s1 + $0x10] sm:$0xff]
  %v22 = vld [vmem:[%s1 + $0x18] sm:$0xff]
  %v23 = vld [vmem:[%s0] sm:$0x1]
  %v24 = vld [vmem:[%s0 + $0x8] sm:$0x1]
  %vm25 = vcmask 261120
  %v27 = vsel %vm25, 0.0, 0
  %29 = vmatprep.subr.mxu0 0.0
  %30 = vmatpush1.msra.mxu0 %v19
  %31 = vmatprep.subr.mxu0 0.0
  %32 = vmatpush1.msra.mxu0 %v20
  %33 = vmatprep.subr.mxu0 0.0
  %34 = vmatpush1.msra.mxu0 %v21
  %35 = vmatprep.subr.mxu0 0.0
  %36 = vmatpush1.msra.mxu0 %v22
  %37 = vmatprep.subr.mxu0 0.0
  %38 = vmatpush1.msra.mxu0 0.0
  %39 = vmatprep.subr.mxu0 0.0
  %40 = vmatpush1.msra.mxu0 0.0
  %41 = vmatprep.subr.mxu0 0.0
  %42 = vmatpush1.msra.mxu0 0.0
  %43 = vmatprep.subr.mxu0 0.0
  %44 = vmatpush1.msra.mxu0 0.0
  %45 = vmatprep.subr.mxu0 0.0
  %46 = vmatpush1.msra.mxu0 0.0
  %47 = vmatprep.subr.mxu0 0.0
  %48 = vmatpush1.msra.mxu0 0.0
  %49 = vmatprep.subr.mxu0 0.0
  %50 = vmatpush1.msra.mxu0 0.0
  %51 = vmatprep.subr.mxu0 0.0
  %52 = vmatpush1.msra.mxu0 0.0
  %53 = vmatprep.subr.mxu0 0.0
  %54 = vmatpush1.msra.mxu0 0.0
  %55 = vmatprep.subr.mxu0 0.0
  %56 = vmatpush1.msra.mxu0 0.0
  %57 = vmatprep.subr.mxu0 0.0
  %58 = vmatpush1.msra.mxu0 0.0
  %59 = vmatprep.subr.mxu0 0.0
  %60 = vmatpush1.msra.mxu0 0.0
  %61 = vmatprep.subr.mxu0 0.0
  %62 = vmatpush1.msra.mxu0 0.0
  %63 = vmatprep.subr.mxu0 0.0
  %64 = vmatpush1.msra.mxu0 0.0
  %65 = vmatprep.subr.mxu0 0.0
  %66 = vmatpush1.msra.mxu0 0.0
  %67 = vmatprep.subr.mxu0 0.0
  %68 = vmatpush1.msra.mxu0 0.0
  %69 = vmatprep.subr.mxu0 0.0
  %70 = vmatpush1.msra.mxu0 0.0
  %71 = vmatprep.subr.mxu0 0.0
  %72 = vmatpush1.msra.mxu0 0.0
  %73 = vmatprep.subr.mxu0 0.0
  %74 = vmatpush1.msra.mxu0 0.0
  %75 = vmatprep.subr.mxu0 0.0
  %76 = vmatpush1.msra.mxu0 0.0
  %77 = vmatprep.subr.mxu0 0.0
  %78 = vmatpush1.msra.mxu0 0.0
  %79 = vmatprep.subr.mxu0 0.0
  %80 = vmatpush1.msra.mxu0 0.0
  %81 = vmatprep.subr.mxu0 0.0
  %82 = vmatpush1.msra.mxu0 0.0
  %83 = vmatprep.subr.mxu0 0.0
  %84 = vmatpush1.msra.mxu0 0.0
  %85 = vmatprep.subr.mxu0 0.0
  %86 = vmatpush1.msra.mxu0 0.0
  %87 = vmatprep.subr.mxu0 0.0
  %88 = vmatpush1.msra.mxu0 0.0
  %89 = vmatprep.subr.mxu0 0.0
  %90 = vmatpush1.msra.mxu0 0.0
  %91 = vmatprep.subr.mxu0 0.0
  %92 = vmatpush1.msra.mxu0 0.0
  %93 = vmatprep.mubr.f32.mxu0 0.0
  %94 = vmatmul.mubr.f32.gmra.mrb[0].mxu0 %v27
  %v95 = vpop.f32.mrb[0].mxu0
  %v96 = vadd.f32 0.0, %v95
  %v97 = vpop.f32.mrb[0].mxu0
  %98 = vdwg.mxu0
  %v100 = vrot.slane %v96, 1
  %v103 = vadd.f32 %v23, %v96
  %v104 = vadd.f32 %v24, %v100
  %v105 = vxor.u32 %v103, 2147483648
  %v106 = vxor.u32 %v104, 2147483648
  %v107 = vmul.f32 %v105, 1.442695
  %v108 = vpow.pop %v107
  %v109 = vmul.f32 %v106, 1.442695
  %v110 = vpow.pop %v109
  %v111 = vadd.f32 %v108, 1.0
  %v112 = vadd.f32 %v110, 1.0
  %v113 = vrcp.pop %v111
  %v114 = vmul.f32 1.0, %v113
  %v115 = vrcp.pop %v112
  %v116 = vmul.f32 1.0, %v115
  %v117 = vtanh.pop %v103
  %v118 = vtanh.pop %v104
  %v119 = vmul.f32 %v114, 0.0
  %v120 = vmul.f32 %v116, 0.0
  %123 = vrot.lane.b32.xlu0 %v117, 64
  %v124 = vpop.permute.xlu0 %123
  %125 = vrot.lane.b32.xlu0 %v118, 64
  %v126 = vpop.permute.xlu0 %125
  %v129 = vmul.f32 %v114, %v124
  %v130 = vmul.f32 %v116, %v126
  %133 = vrot.lane.b32.xlu0 %v129, 32
  %v134 = vpop.permute.xlu0 %133
  %135 = vrot.lane.b32.xlu0 %v130, 32
  %v136 = vpop.permute.xlu0 %135
  %v139 = vadd.f32 %v119, %v134
  %v140 = vadd.f32 %v120, %v136
  %v141 = vtanh.pop %v139
  %v142 = vtanh.pop %v140
  %145 = vrot.lane.b32.xlu0 %v141, 64
  %v146 = vpop.permute.xlu0 %145
  %147 = vrot.lane.b32.xlu0 %v142, 64
  %v148 = vpop.permute.xlu0 %147
  %v151 = vmul.f32 %v114, %v146
  %v152 = vmul.f32 %v116, %v148
  %v153 = vld [vmem:[%s0 + $0x1] sm:$0x1]
  %v154 = vld [vmem:[%s0 + $0x9] sm:$0x1]
  %v157 = vrot.slane %v152, 7
  %vm158 = vcmask 1041409
  %v159 = vsel %vm158, %v157, %v151
  %160 = vrot.lane.b32.xlu0 %v159, 32
  %v161 = vpop.permute.xlu0 %160
  %v162 = vsel %vm25, %v161, 0
  %164 = vmatprep.subr.mxu0 0.0
  %165 = vmatpush1.msra.mxu0 %v19
  %166 = vmatprep.subr.mxu0 0.0
  %167 = vmatpush1.msra.mxu0 %v20
  %168 = vmatprep.subr.mxu0 0.0
  %169 = vmatpush1.msra.mxu0 %v21
  %170 = vmatprep.subr.mxu0 0.0
  %171 = vmatpush1.msra.mxu0 %v22
  %172 = vmatprep.subr.mxu0 0.0
  %173 = vmatpush1.msra.mxu0 0.0
  %174 = vmatprep.subr.mxu0 0.0
  %175 = vmatpush1.msra.mxu0 0.0
  %176 = vmatprep.subr.mxu0 0.0
  %177 = vmatpush1.msra.mxu0 0.0
  %178 = vmatprep.subr.mxu0 0.0
  %179 = vmatpush1.msra.mxu0 0.0
  %180 = vmatprep.subr.mxu0 0.0
  %181 = vmatpush1.msra.mxu0 0.0
  %182 = vmatprep.subr.mxu0 0.0
  %183 = vmatpush1.msra.mxu0 0.0
  %184 = vmatprep.subr.mxu0 0.0
  %185 = vmatpush1.msra.mxu0 0.0
  %186 = vmatprep.subr.mxu0 0.0
  %187 = vmatpush1.msra.mxu0 0.0
  %188 = vmatprep.subr.mxu0 0.0
  %189 = vmatpush1.msra.mxu0 0.0
  %190 = vmatprep.subr.mxu0 0.0
  %191 = vmatpush1.msra.mxu0 0.0
  %192 = vmatprep.subr.mxu0 0.0
  %193 = vmatpush1.msra.mxu0 0.0
  %194 = vmatprep.subr.mxu0 0.0
  %195 = vmatpush1.msra.mxu0 0.0
  %196 = vmatprep.subr.mxu0 0.0
  %197 = vmatpush1.msra.mxu0 0.0
  %198 = vmatprep.subr.mxu0 0.0
  %199 = vmatpush1.msra.mxu0 0.0
  %200 = vmatprep.subr.mxu0 0.0
  %201 = vmatpush1.msra.mxu0 0.0
  %202 = vmatprep.subr.mxu0 0.0
  %203 = vmatpush1.msra.mxu0 0.0
  %204 = vmatprep.subr.mxu0 0.0
  %205 = vmatpush1.msra.mxu0 0.0
  %206 = vmatprep.subr.mxu0 0.0
  %207 = vmatpush1.msra.mxu0 0.0
  %208 = vmatprep.subr.mxu0 0.0
  %209 = vmatpush1.msra.mxu0 0.0
  %210 = vmatprep.subr.mxu0 0.0
  %211 = vmatpush1.msra.mxu0 0.0
  %212 = vmatprep.subr.mxu0 0.0
  %213 = vmatpush1.msra.mxu0 0.0
  %214 = vmatprep.subr.mxu0 0.0
  %215 = vmatpush1.msra.mxu0 0.0
  %216 = vmatprep.subr.mxu0 0.0
  %217 = vmatpush1.msra.mxu0 0.0
  %218 = vmatprep.subr.mxu0 0.0
  %219 = vmatpush1.msra.mxu0 0.0
  %220 = vmatprep.subr.mxu0 0.0
  %221 = vmatpush1.msra.mxu0 0.0
  %222 = vmatprep.subr.mxu0 0.0
  %223 = vmatpush1.msra.mxu0 0.0
  %224 = vmatprep.subr.mxu0 0.0
  %225 = vmatpush1.msra.mxu0 0.0
  %226 = vmatprep.subr.mxu0 0.0
  %227 = vmatpush1.msra.mxu0 0.0
  %228 = vmatprep.mubr.f32.mxu0 0.0
  %229 = vmatmul.mubr.f32.gmra.mrb[0].mxu0 %v162
  %v230 = vpop.f32.mrb[0].mxu0
  %v231 = vadd.f32 0.0, %v230
  %v232 = vpop.f32.mrb[0].mxu0
  %233 = vdwg.mxu0
  %v235 = vrot.slane %v231, 1
  %v238 = vadd.f32 %v153, %v231
  %v239 = vadd.f32 %v154, %v235
  %v240 = vxor.u32 %v238, 2147483648
  %v241 = vxor.u32 %v239, 2147483648
  %v242 = vmul.f32 %v240, 1.442695
  %v243 = vpow.pop %v242
  %v244 = vmul.f32 %v241, 1.442695
  %v245 = vpow.pop %v244
  %v246 = vadd.f32 %v243, 1.0
  %v247 = vadd.f32 %v245, 1.0
  %v248 = vrcp.pop %v246
  %v249 = vmul.f32 1.0, %v248
  %v250 = vrcp.pop %v247
  %v251 = vmul.f32 1.0, %v250
  %v252 = vtanh.pop %v238
  %v253 = vtanh.pop %v239
  %v254 = vmul.f32 %v249, %v139
  %v255 = vmul.f32 %v251, %v140
  %258 = vrot.lane.b32.xlu0 %v252, 64
  %v259 = vpop.permute.xlu0 %258
  %260 = vrot.lane.b32.xlu0 %v253, 64
  %v261 = vpop.permute.xlu0 %260
  %v264 = vmul.f32 %v249, %v259
  %v265 = vmul.f32 %v251, %v261
  %268 = vrot.lane.b32.xlu0 %v264, 32
  %v269 = vpop.permute.xlu0 %268
  %270 = vrot.lane.b32.xlu0 %v265, 32
  %v271 = vpop.permute.xlu0 %270
  %v274 = vadd.f32 %v254, %v269
  %v275 = vadd.f32 %v255, %v271
  %v276 = vtanh.pop %v274
  %v277 = vtanh.pop %v275
  %280 = vrot.lane.b32.xlu0 %v276, 64
  %v281 = vpop.permute.xlu0 %280
  %282 = vrot.lane.b32.xlu0 %v277, 64
  %v283 = vpop.permute.xlu0 %282
  %v286 = vmul.f32 %v249, %v281
  %v287 = vmul.f32 %v251, %v283
  %v288 = vld [vmem:[%s0 + $0x2] sm:$0x1]
  %v289 = vld [vmem:[%s0 + $0xa] sm:$0x1]
  %v292 = vrot.slane %v287, 7
  %v293 = vsel %vm158, %v292, %v286
  %294 = vrot.lane.b32.xlu0 %v293, 32
  %v295 = vpop.permute.xlu0 %294
  %v296 = vsel %vm25, %v295, 0
  %298 = vmatprep.subr.mxu0 0.0
  %299 = vmatpush1.msra.mxu0 %v19
  %300 = vmatprep.subr.mxu0 0.0
  %301 = vmatpush1.msra.mxu0 %v20
  %302 = vmatprep.subr.mxu0 0.0
  %303 = vmatpush1.msra.mxu0 %v21
  %304 = vmatprep.subr.mxu0 0.0
  %305 = vmatpush1.msra.mxu0 %v22
  %306 = vmatprep.subr.mxu0 0.0
  %307 = vmatpush1.msra.mxu0 0.0
  %308 = vmatprep.subr.mxu0 0.0
  %309 = vmatpush1.msra.mxu0 0.0
  %310 = vmatprep.subr.mxu0 0.0
  %311 = vmatpush1.msra.mxu0 0.0
  %312 = vmatprep.subr.mxu0 0.0
  %313 = vmatpush1.msra.mxu0 0.0
  %314 = vmatprep.subr.mxu0 0.0
  %315 = vmatpush1.msra.mxu0 0.0
  %316 = vmatprep.subr.mxu0 0.0
  %317 = vmatpush1.msra.mxu0 0.0
  %318 = vmatprep.subr.mxu0 0.0
  %319 = vmatpush1.msra.mxu0 0.0
  %320 = vmatprep.subr.mxu0 0.0
  %321 = vmatpush1.msra.mxu0 0.0
  %322 = vmatprep.subr.mxu0 0.0
  %323 = vmatpush1.msra.mxu0 0.0
  %324 = vmatprep.subr.mxu0 0.0
  %325 = vmatpush1.msra.mxu0 0.0
  %326 = vmatprep.subr.mxu0 0.0
  %327 = vmatpush1.msra.mxu0 0.0
  %328 = vmatprep.subr.mxu0 0.0
  %329 = vmatpush1.msra.mxu0 0.0
  %330 = vmatprep.subr.mxu0 0.0
  %331 = vmatpush1.msra.mxu0 0.0
  %332 = vmatprep.subr.mxu0 0.0
  %333 = vmatpush1.msra.mxu0 0.0
  %334 = vmatprep.subr.mxu0 0.0
  %335 = vmatpush1.msra.mxu0 0.0
  %336 = vmatprep.subr.mxu0 0.0
  %337 = vmatpush1.msra.mxu0 0.0
  %338 = vmatprep.subr.mxu0 0.0
  %339 = vmatpush1.msra.mxu0 0.0
  %340 = vmatprep.subr.mxu0 0.0
  %341 = vmatpush1.msra.mxu0 0.0
  %342 = vmatprep.subr.mxu0 0.0
  %343 = vmatpush1.msra.mxu0 0.0
  %344 = vmatprep.subr.mxu0 0.0
  %345 = vmatpush1.msra.mxu0 0.0
  %346 = vmatprep.subr.mxu0 0.0
  %347 = vmatpush1.msra.mxu0 0.0
  %348 = vmatprep.subr.mxu0 0.0
  %349 = vmatpush1.msra.mxu0 0.0
  %350 = vmatprep.subr.mxu0 0.0
  %351 = vmatpush1.msra.mxu0 0.0
  %352 = vmatprep.subr.mxu0 0.0
  %353 = vmatpush1.msra.mxu0 0.0
  %354 = vmatprep.subr.mxu0 0.0
  %355 = vmatpush1.msra.mxu0 0.0
  %356 = vmatprep.subr.mxu0 0.0
  %357 = vmatpush1.msra.mxu0 0.0
  %358 = vmatprep.subr.mxu0 0.0
  %359 = vmatpush1.msra.mxu0 0.0
  %360 = vmatprep.subr.mxu0 0.0
  %361 = vmatpush1.msra.mxu0 0.0
  %362 = vmatprep.mubr.f32.mxu0 0.0
  %363 = vmatmul.mubr.f32.gmra.mrb[0].mxu0 %v296
  %v364 = vpop.f32.mrb[0].mxu0
  %v365 = vadd.f32 0.0, %v364
  %v366 = vpop.f32.mrb[0].mxu0
  %367 = vdwg.mxu0
  %v369 = vrot.slane %v365, 1
  %v372 = vadd.f32 %v288, %v365
  %v373 = vadd.f32 %v289, %v369
  %v374 = vxor.u32 %v372, 2147483648
  %v375 = vxor.u32 %v373, 2147483648
  %v376 = vmul.f32 %v374, 1.442695
  %v377 = vpow.pop %v376
  %v378 = vmul.f32 %v375, 1.442695
  %v379 = vpow.pop %v378
  %v380 = vadd.f32 %v377, 1.0
  %v381 = vadd.f32 %v379, 1.0
  %v382 = vrcp.pop %v380
  %v383 = vmul.f32 1.0, %v382
  %v384 = vrcp.pop %v381
  %v385 = vmul.f32 1.0, %v384
  %v386 = vtanh.pop %v372
  %v387 = vtanh.pop %v373
  %v388 = vmul.f32 %v383, %v274
  %v389 = vmul.f32 %v385, %v275
  %392 = vrot.lane.b32.xlu0 %v386, 64
  %v393 = vpop.permute.xlu0 %392
  %394 = vrot.lane.b32.xlu0 %v387, 64
  %v395 = vpop.permute.xlu0 %394
  %v398 = vmul.f32 %v383, %v393
  %v399 = vmul.f32 %v385, %v395
  %402 = vrot.lane.b32.xlu0 %v398, 32
  %v403 = vpop.permute.xlu0 %402
  %404 = vrot.lane.b32.xlu0 %v399, 32
  %v405 = vpop.permute.xlu0 %404
  %v408 = vadd.f32 %v388, %v403
  %v409 = vadd.f32 %v389, %v405
  %v410 = vtanh.pop %v408
  %v411 = vtanh.pop %v409
  %414 = vrot.lane.b32.xlu0 %v410, 64
  %v415 = vpop.permute.xlu0 %414
  %416 = vrot.lane.b32.xlu0 %v411, 64
  %v417 = vpop.permute.xlu0 %416
  %v420 = vmul.f32 %v383, %v415
  %v421 = vmul.f32 %v385, %v417
  %v422 = vld [vmem:[%s0 + $0x3] sm:$0x1]
  %v423 = vld [vmem:[%s0 + $0xb] sm:$0x1]
  %v426 = vrot.slane %v421, 7
  %v427 = vsel %vm158, %v426, %v420
  %428 = vrot.lane.b32.xlu0 %v427, 32
  %v429 = vpop.permute.xlu0 %428
  %v430 = vsel %vm25, %v429, 0
  %432 = vmatprep.subr.mxu0 0.0
  %433 = vmatpush1.msra.mxu0 %v19
  %434 = vmatprep.subr.mxu0 0.0
  %435 = vmatpush1.msra.mxu0 %v20
  %436 = vmatprep.subr.mxu0 0.0
  %437 = vmatpush1.msra.mxu0 %v21
  %438 = vmatprep.subr.mxu0 0.0
  %439 = vmatpush1.msra.mxu0 %v22
  %440 = vmatprep.subr.mxu0 0.0
  %441 = vmatpush1.msra.mxu0 0.0
  %442 = vmatprep.subr.mxu0 0.0
  %443 = vmatpush1.msra.mxu0 0.0
  %444 = vmatprep.subr.mxu0 0.0
  %445 = vmatpush1.msra.mxu0 0.0
  %446 = vmatprep.subr.mxu0 0.0
  %447 = vmatpush1.msra.mxu0 0.0
  %448 = vmatprep.subr.mxu0 0.0
  %449 = vmatpush1.msra.mxu0 0.0
  %450 = vmatprep.subr.mxu0 0.0
  %451 = vmatpush1.msra.mxu0 0.0
  %452 = vmatprep.subr.mxu0 0.0
  %453 = vmatpush1.msra.mxu0 0.0
  %454 = vmatprep.subr.mxu0 0.0
  %455 = vmatpush1.msra.mxu0 0.0
  %456 = vmatprep.subr.mxu0 0.0
  %457 = vmatpush1.msra.mxu0 0.0
  %458 = vmatprep.subr.mxu0 0.0
  %459 = vmatpush1.msra.mxu0 0.0
  %460 = vmatprep.subr.mxu0 0.0
  %461 = vmatpush1.msra.mxu0 0.0
  %462 = vmatprep.subr.mxu0 0.0
  %463 = vmatpush1.msra.mxu0 0.0
  %464 = vmatprep.subr.mxu0 0.0
  %465 = vmatpush1.msra.mxu0 0.0
  %466 = vmatprep.subr.mxu0 0.0
  %467 = vmatpush1.msra.mxu0 0.0
  %468 = vmatprep.subr.mxu0 0.0
  %469 = vmatpush1.msra.mxu0 0.0
  %470 = vmatprep.subr.mxu0 0.0
  %471 = vmatpush1.msra.mxu0 0.0
  %472 = vmatprep.subr.mxu0 0.0
  %473 = vmatpush1.msra.mxu0 0.0
  %474 = vmatprep.subr.mxu0 0.0
  %475 = vmatpush1.msra.mxu0 0.0
  %476 = vmatprep.subr.mxu0 0.0
  %477 = vmatpush1.msra.mxu0 0.0
  %478 = vmatprep.subr.mxu0 0.0
  %479 = vmatpush1.msra.mxu0 0.0
  %480 = vmatprep.subr.mxu0 0.0
  %481 = vmatpush1.msra.mxu0 0.0
  %482 = vmatprep.subr.mxu0 0.0
  %483 = vmatpush1.msra.mxu0 0.0
  %484 = vmatprep.subr.mxu0 0.0
  %485 = vmatpush1.msra.mxu0 0.0
  %486 = vmatprep.subr.mxu0 0.0
  %487 = vmatpush1.msra.mxu0 0.0
  %488 = vmatprep.subr.mxu0 0.0
  %489 = vmatpush1.msra.mxu0 0.0
  %490 = vmatprep.subr.mxu0 0.0
  %491 = vmatpush1.msra.mxu0 0.0
  %492 = vmatprep.subr.mxu0 0.0
  %493 = vmatpush1.msra.mxu0 0.0
  %494 = vmatprep.subr.mxu0 0.0
  %495 = vmatpush1.msra.mxu0 0.0
  %496 = vmatprep.mubr.f32.mxu0 0.0
  %497 = vmatmul.mubr.f32.gmra.mrb[0].mxu0 %v430
  %v498 = vpop.f32.mrb[0].mxu0
  %v499 = vadd.f32 0.0, %v498
  %v500 = vpop.f32.mrb[0].mxu0
  %501 = vdwg.mxu0
  %v503 = vrot.slane %v499, 1
  %v506 = vadd.f32 %v422, %v499
  %v507 = vadd.f32 %v423, %v503
  %v508 = vxor.u32 %v506, 2147483648
  %v509 = vxor.u32 %v507, 2147483648
  %v510 = vmul.f32 %v508, 1.442695
  %v511 = vpow.pop %v510
  %v512 = vmul.f32 %v509, 1.442695
  %v513 = vpow.pop %v512
  %v514 = vadd.f32 %v511, 1.0
  %v515 = vadd.f32 %v513, 1.0
  %v516 = vrcp.pop %v514
  %v517 = vmul.f32 1.0, %v516
  %v518 = vrcp.pop %v515
  %v519 = vmul.f32 1.0, %v518
  %v520 = vtanh.pop %v506
  %v521 = vtanh.pop %v507
  %v522 = vmul.f32 %v517, %v408
  %v523 = vmul.f32 %v519, %v409
  %526 = vrot.lane.b32.xlu0 %v520, 64
  %v527 = vpop.permute.xlu0 %526
  %528 = vrot.lane.b32.xlu0 %v521, 64
  %v529 = vpop.permute.xlu0 %528
  %v532 = vmul.f32 %v517, %v527
  %v533 = vmul.f32 %v519, %v529
  %536 = vrot.lane.b32.xlu0 %v532, 32
  %v537 = vpop.permute.xlu0 %536
  %538 = vrot.lane.b32.xlu0 %v533, 32
  %v539 = vpop.permute.xlu0 %538
  %v542 = vadd.f32 %v522, %v537
  %v543 = vadd.f32 %v523, %v539
  %v544 = vtanh.pop %v542
  %v545 = vtanh.pop %v543
  %548 = vrot.lane.b32.xlu0 %v544, 64
  %v549 = vpop.permute.xlu0 %548
  %550 = vrot.lane.b32.xlu0 %v545, 64
  %v551 = vpop.permute.xlu0 %550
  %v554 = vmul.f32 %v517, %v549
  %v555 = vmul.f32 %v519, %v551
  %v556 = vld [vmem:[%s0 + $0x4] sm:$0x1]
  %v557 = vld [vmem:[%s0 + $0xc] sm:$0x1]
  %v560 = vrot.slane %v555, 7
  %v561 = vsel %vm158, %v560, %v554
  %562 = vrot.lane.b32.xlu0 %v561, 32
  %v563 = vpop.permute.xlu0 %562
  %v564 = vsel %vm25, %v563, 0
  %566 = vmatprep.subr.mxu0 0.0
  %567 = vmatpush1.msra.mxu0 %v19
  %568 = vmatprep.subr.mxu0 0.0
  %569 = vmatpush1.msra.mxu0 %v20
  %570 = vmatprep.subr.mxu0 0.0
  %571 = vmatpush1.msra.mxu0 %v21
  %572 = vmatprep.subr.mxu0 0.0
  %573 = vmatpush1.msra.mxu0 %v22
  %574 = vmatprep.subr.mxu0 0.0
  %575 = vmatpush1.msra.mxu0 0.0
  %576 = vmatprep.subr.mxu0 0.0
  %577 = vmatpush1.msra.mxu0 0.0
  %578 = vmatprep.subr.mxu0 0.0
  %579 = vmatpush1.msra.mxu0 0.0
  %580 = vmatprep.subr.mxu0 0.0
  %581 = vmatpush1.msra.mxu0 0.0
  %582 = vmatprep.subr.mxu0 0.0
  %583 = vmatpush1.msra.mxu0 0.0
  %584 = vmatprep.subr.mxu0 0.0
  %585 = vmatpush1.msra.mxu0 0.0
  %586 = vmatprep.subr.mxu0 0.0
  %587 = vmatpush1.msra.mxu0 0.0
  %588 = vmatprep.subr.mxu0 0.0
  %589 = vmatpush1.msra.mxu0 0.0
  %590 = vmatprep.subr.mxu0 0.0
  %591 = vmatpush1.msra.mxu0 0.0
  %592 = vmatprep.subr.mxu0 0.0
  %593 = vmatpush1.msra.mxu0 0.0
  %594 = vmatprep.subr.mxu0 0.0
  %595 = vmatpush1.msra.mxu0 0.0
  %596 = vmatprep.subr.mxu0 0.0
  %597 = vmatpush1.msra.mxu0 0.0
  %598 = vmatprep.subr.mxu0 0.0
  %599 = vmatpush1.msra.mxu0 0.0
  %600 = vmatprep.subr.mxu0 0.0
  %601 = vmatpush1.msra.mxu0 0.0
  %602 = vmatprep.subr.mxu0 0.0
  %603 = vmatpush1.msra.mxu0 0.0
  %604 = vmatprep.subr.mxu0 0.0
  %605 = vmatpush1.msra.mxu0 0.0
  %606 = vmatprep.subr.mxu0 0.0
  %607 = vmatpush1.msra.mxu0 0.0
  %608 = vmatprep.subr.mxu0 0.0
  %609 = vmatpush1.msra.mxu0 0.0
  %610 = vmatprep.subr.mxu0 0.0
  %611 = vmatpush1.msra.mxu0 0.0
  %612 = vmatprep.subr.mxu0 0.0
  %613 = vmatpush1.msra.mxu0 0.0
  %614 = vmatprep.subr.mxu0 0.0
  %615 = vmatpush1.msra.mxu0 0.0
  %616 = vmatprep.subr.mxu0 0.0
  %617 = vmatpush1.msra.mxu0 0.0
  %618 = vmatprep.subr.mxu0 0.0
  %619 = vmatpush1.msra.mxu0 0.0
  %620 = vmatprep.subr.mxu0 0.0
  %621 = vmatpush1.msra.mxu0 0.0
  %622 = vmatprep.subr.mxu0 0.0
  %623 = vmatpush1.msra.mxu0 0.0
  %624 = vmatprep.subr.mxu0 0.0
  %625 = vmatpush1.msra.mxu0 0.0
  %626 = vmatprep.subr.mxu0 0.0
  %627 = vmatpush1.msra.mxu0 0.0
  %628 = vmatprep.subr.mxu0 0.0
  %629 = vmatpush1.msra.mxu0 0.0
  %630 = vmatprep.mubr.f32.mxu0 0.0
  %631 = vmatmul.mubr.f32.gmra.mrb[0].mxu0 %v564
  %v632 = vpop.f32.mrb[0].mxu0
  %v633 = vadd.f32 0.0, %v632
  %v634 = vpop.f32.mrb[0].mxu0
  %635 = vdwg.mxu0
  %v637 = vrot.slane %v633, 1
  %v640 = vadd.f32 %v556, %v633
  %v641 = vadd.f32 %v557, %v637
  %v642 = vxor.u32 %v640, 2147483648
  %v643 = vxor.u32 %v641, 2147483648
  %v644 = vmul.f32 %v642, 1.442695
  %v645 = vpow.pop %v644
  %v646 = vmul.f32 %v643, 1.442695
  %v647 = vpow.pop %v646
  %v648 = vadd.f32 %v645, 1.0
  %v649 = vadd.f32 %v647, 1.0
  %v650 = vrcp.pop %v648
  %v651 = vmul.f32 1.0, %v650
  %v652 = vrcp.pop %v649
  %v653 = vmul.f32 1.0, %v652
  %v654 = vtanh.pop %v640
  %v655 = vtanh.pop %v641
  %v656 = vmul.f32 %v651, %v542
  %v657 = vmul.f32 %v653, %v543
  %660 = vrot.lane.b32.xlu0 %v654, 64
  %v661 = vpop.permute.xlu0 %660
  %662 = vrot.lane.b32.xlu0 %v655, 64
  %v663 = vpop.permute.xlu0 %662
  %v666 = vmul.f32 %v651, %v661
  %v667 = vmul.f32 %v653, %v663
  %670 = vrot.lane.b32.xlu0 %v666, 32
  %v671 = vpop.permute.xlu0 %670
  %672 = vrot.lane.b32.xlu0 %v667, 32
  %v673 = vpop.permute.xlu0 %672
  %v676 = vadd.f32 %v656, %v671
  %v677 = vadd.f32 %v657, %v673
  %v678 = vtanh.pop %v676
  %v679 = vtanh.pop %v677
  %682 = vrot.lane.b32.xlu0 %v678, 64
  %v683 = vpop.permute.xlu0 %682
  %684 = vrot.lane.b32.xlu0 %v679, 64
  %v685 = vpop.permute.xlu0 %684
  %v688 = vmul.f32 %v651, %v683
  %v689 = vmul.f32 %v653, %v685
  %v690 = vld [vmem:[%s0 + $0x5] sm:$0x1]
  %v691 = vld [vmem:[%s0 + $0xd] sm:$0x1]
  %v694 = vrot.slane %v689, 7
  %v695 = vsel %vm158, %v694, %v688
  %696 = vrot.lane.b32.xlu0 %v695, 32
  %v697 = vpop.permute.xlu0 %696
  %v698 = vsel %vm25, %v697, 0
  %700 = vmatprep.subr.mxu0 0.0
  %701 = vmatpush1.msra.mxu0 %v19
  %702 = vmatprep.subr.mxu0 0.0
  %703 = vmatpush1.msra.mxu0 %v20
  %704 = vmatprep.subr.mxu0 0.0
  %705 = vmatpush1.msra.mxu0 %v21
  %706 = vmatprep.subr.mxu0 0.0
  %707 = vmatpush1.msra.mxu0 %v22
  %708 = vmatprep.subr.mxu0 0.0
  %709 = vmatpush1.msra.mxu0 0.0
  %710 = vmatprep.subr.mxu0 0.0
  %711 = vmatpush1.msra.mxu0 0.0
  %712 = vmatprep.subr.mxu0 0.0
  %713 = vmatpush1.msra.mxu0 0.0
  %714 = vmatprep.subr.mxu0 0.0
  %715 = vmatpush1.msra.mxu0 0.0
  %716 = vmatprep.subr.mxu0 0.0
  %717 = vmatpush1.msra.mxu0 0.0
  %718 = vmatprep.subr.mxu0 0.0
  %719 = vmatpush1.msra.mxu0 0.0
  %720 = vmatprep.subr.mxu0 0.0
  %721 = vmatpush1.msra.mxu0 0.0
  %722 = vmatprep.subr.mxu0 0.0
  %723 = vmatpush1.msra.mxu0 0.0
  %724 = vmatprep.subr.mxu0 0.0
  %725 = vmatpush1.msra.mxu0 0.0
  %726 = vmatprep.subr.mxu0 0.0
  %727 = vmatpush1.msra.mxu0 0.0
  %728 = vmatprep.subr.mxu0 0.0
  %729 = vmatpush1.msra.mxu0 0.0
  %730 = vmatprep.subr.mxu0 0.0
  %731 = vmatpush1.msra.mxu0 0.0
  %732 = vmatprep.subr.mxu0 0.0
  %733 = vmatpush1.msra.mxu0 0.0
  %734 = vmatprep.subr.mxu0 0.0
  %735 = vmatpush1.msra.mxu0 0.0
  %736 = vmatprep.subr.mxu0 0.0
  %737 = vmatpush1.msra.mxu0 0.0
  %738 = vmatprep.subr.mxu0 0.0
  %739 = vmatpush1.msra.mxu0 0.0
  %740 = vmatprep.subr.mxu0 0.0
  %741 = vmatpush1.msra.mxu0 0.0
  %742 = vmatprep.subr.mxu0 0.0
  %743 = vmatpush1.msra.mxu0 0.0
  %744 = vmatprep.subr.mxu0 0.0
  %745 = vmatpush1.msra.mxu0 0.0
  %746 = vmatprep.subr.mxu0 0.0
  %747 = vmatpush1.msra.mxu0 0.0
  %748 = vmatprep.subr.mxu0 0.0
  %749 = vmatpush1.msra.mxu0 0.0
  %750 = vmatprep.subr.mxu0 0.0
  %751 = vmatpush1.msra.mxu0 0.0
  %752 = vmatprep.subr.mxu0 0.0
  %753 = vmatpush1.msra.mxu0 0.0
  %754 = vmatprep.subr.mxu0 0.0
  %755 = vmatpush1.msra.mxu0 0.0
  %756 = vmatprep.subr.mxu0 0.0
  %757 = vmatpush1.msra.mxu0 0.0
  %758 = vmatprep.subr.mxu0 0.0
  %759 = vmatpush1.msra.mxu0 0.0
  %760 = vmatprep.subr.mxu0 0.0
  %761 = vmatpush1.msra.mxu0 0.0
  %762 = vmatprep.subr.mxu0 0.0
  %763 = vmatpush1.msra.mxu0 0.0
  %764 = vmatprep.mubr.f32.mxu0 0.0
  %765 = vmatmul.mubr.f32.gmra.mrb[0].mxu0 %v698
  %v766 = vpop.f32.mrb[0].mxu0
  %v767 = vadd.f32 0.0, %v766
  %v768 = vpop.f32.mrb[0].mxu0
  %769 = vdwg.mxu0
  %v771 = vrot.slane %v767, 1
  %v774 = vadd.f32 %v690, %v767
  %v775 = vadd.f32 %v691, %v771
  %v776 = vxor.u32 %v774, 2147483648
  %v777 = vxor.u32 %v775, 2147483648
  %v778 = vmul.f32 %v776, 1.442695
  %v779 = vpow.pop %v778
  %v780 = vmul.f32 %v777, 1.442695
  %v781 = vpow.pop %v780
  %v782 = vadd.f32 %v779, 1.0
  %v783 = vadd.f32 %v781, 1.0
  %v784 = vrcp.pop %v782
  %v785 = vmul.f32 1.0, %v784
  %v786 = vrcp.pop %v783
  %v787 = vmul.f32 1.0, %v786
  %v788 = vtanh.pop %v774
  %v789 = vtanh.pop %v775
  %v790 = vmul.f32 %v785, %v676
  %v791 = vmul.f32 %v787, %v677
  %794 = vrot.lane.b32.xlu0 %v788, 64
  %v795 = vpop.permute.xlu0 %794
  %796 = vrot.lane.b32.xlu0 %v789, 64
  %v797 = vpop.permute.xlu0 %796
  %v800 = vmul.f32 %v785, %v795
  %v801 = vmul.f32 %v787, %v797
  %804 = vrot.lane.b32.xlu0 %v800, 32
  %v805 = vpop.permute.xlu0 %804
  %806 = vrot.lane.b32.xlu0 %v801, 32
  %v807 = vpop.permute.xlu0 %806
  %v810 = vadd.f32 %v790, %v805
  %v811 = vadd.f32 %v791, %v807
  %v812 = vtanh.pop %v810
  %v813 = vtanh.pop %v811
  %816 = vrot.lane.b32.xlu0 %v812, 64
  %v817 = vpop.permute.xlu0 %816
  %818 = vrot.lane.b32.xlu0 %v813, 64
  %v819 = vpop.permute.xlu0 %818
  %v822 = vmul.f32 %v785, %v817
  %v823 = vmul.f32 %v787, %v819
  %v824 = vld [vmem:[%s0 + $0x6] sm:$0x1]
  %v825 = vld [vmem:[%s0 + $0xe] sm:$0x1]
  %v828 = vrot.slane %v823, 7
  %v829 = vsel %vm158, %v828, %v822
  %830 = vrot.lane.b32.xlu0 %v829, 32
  %v831 = vpop.permute.xlu0 %830
  %v832 = vsel %vm25, %v831, 0
  %834 = vmatprep.subr.mxu0 0.0
  %835 = vmatpush1.msra.mxu0 %v19
  %836 = vmatprep.subr.mxu0 0.0
  %837 = vmatpush1.msra.mxu0 %v20
  %838 = vmatprep.subr.mxu0 0.0
  %839 = vmatpush1.msra.mxu0 %v21
  %840 = vmatprep.subr.mxu0 0.0
  %841 = vmatpush1.msra.mxu0 %v22
  %842 = vmatprep.subr.mxu0 0.0
  %843 = vmatpush1.msra.mxu0 0.0
  %844 = vmatprep.subr.mxu0 0.0
  %845 = vmatpush1.msra.mxu0 0.0
  %846 = vmatprep.subr.mxu0 0.0
  %847 = vmatpush1.msra.mxu0 0.0
  %848 = vmatprep.subr.mxu0 0.0
  %849 = vmatpush1.msra.mxu0 0.0
  %850 = vmatprep.subr.mxu0 0.0
  %851 = vmatpush1.msra.mxu0 0.0
  %852 = vmatprep.subr.mxu0 0.0
  %853 = vmatpush1.msra.mxu0 0.0
  %854 = vmatprep.subr.mxu0 0.0
  %855 = vmatpush1.msra.mxu0 0.0
  %856 = vmatprep.subr.mxu0 0.0
  %857 = vmatpush1.msra.mxu0 0.0
  %858 = vmatprep.subr.mxu0 0.0
  %859 = vmatpush1.msra.mxu0 0.0
  %860 = vmatprep.subr.mxu0 0.0
  %861 = vmatpush1.msra.mxu0 0.0
  %862 = vmatprep.subr.mxu0 0.0
  %863 = vmatpush1.msra.mxu0 0.0
  %864 = vmatprep.subr.mxu0 0.0
  %865 = vmatpush1.msra.mxu0 0.0
  %866 = vmatprep.subr.mxu0 0.0
  %867 = vmatpush1.msra.mxu0 0.0
  %868 = vmatprep.subr.mxu0 0.0
  %869 = vmatpush1.msra.mxu0 0.0
  %870 = vmatprep.subr.mxu0 0.0
  %871 = vmatpush1.msra.mxu0 0.0
  %872 = vmatprep.subr.mxu0 0.0
  %873 = vmatpush1.msra.mxu0 0.0
  %874 = vmatprep.subr.mxu0 0.0
  %875 = vmatpush1.msra.mxu0 0.0
  %876 = vmatprep.subr.mxu0 0.0
  %877 = vmatpush1.msra.mxu0 0.0
  %878 = vmatprep.subr.mxu0 0.0
  %879 = vmatpush1.msra.mxu0 0.0
  %880 = vmatprep.subr.mxu0 0.0
  %881 = vmatpush1.msra.mxu0 0.0
  %882 = vmatprep.subr.mxu0 0.0
  %883 = vmatpush1.msra.mxu0 0.0
  %884 = vmatprep.subr.mxu0 0.0
  %885 = vmatpush1.msra.mxu0 0.0
  %886 = vmatprep.subr.mxu0 0.0
  %887 = vmatpush1.msra.mxu0 0.0
  %888 = vmatprep.subr.mxu0 0.0
  %889 = vmatpush1.msra.mxu0 0.0
  %890 = vmatprep.subr.mxu0 0.0
  %891 = vmatpush1.msra.mxu0 0.0
  %892 = vmatprep.subr.mxu0 0.0
  %893 = vmatpush1.msra.mxu0 0.0
  %894 = vmatprep.subr.mxu0 0.0
  %895 = vmatpush1.msra.mxu0 0.0
  %896 = vmatprep.subr.mxu0 0.0
  %897 = vmatpush1.msra.mxu0 0.0
  %898 = vmatprep.mubr.f32.mxu0 0.0
  %899 = vmatmul.mubr.f32.gmra.mrb[0].mxu0 %v832
  %v900 = vpop.f32.mrb[0].mxu0
  %v901 = vadd.f32 0.0, %v900
  %v902 = vpop.f32.mrb[0].mxu0
  %903 = vdwg.mxu0
  %v905 = vrot.slane %v901, 1
  %v908 = vadd.f32 %v824, %v901
  %v909 = vadd.f32 %v825, %v905
  %v910 = vxor.u32 %v908, 2147483648
  %v911 = vxor.u32 %v909, 2147483648
  %v912 = vmul.f32 %v910, 1.442695
  %v913 = vpow.pop %v912
  %v914 = vmul.f32 %v911, 1.442695
  %v915 = vpow.pop %v914
  %v916 = vadd.f32 %v913, 1.0
  %v917 = vadd.f32 %v915, 1.0
  %v918 = vrcp.pop %v916
  %v919 = vmul.f32 1.0, %v918
  %v920 = vrcp.pop %v917
  %v921 = vmul.f32 1.0, %v920
  %v922 = vtanh.pop %v908
  %v923 = vtanh.pop %v909
  %v924 = vmul.f32 %v919, %v810
  %v925 = vmul.f32 %v921, %v811
  %928 = vrot.lane.b32.xlu0 %v922, 64
  %v929 = vpop.permute.xlu0 %928
  %930 = vrot.lane.b32.xlu0 %v923, 64
  %v931 = vpop.permute.xlu0 %930
  %v934 = vmul.f32 %v919, %v929
  %v935 = vmul.f32 %v921, %v931
  %938 = vrot.lane.b32.xlu0 %v934, 32
  %v939 = vpop.permute.xlu0 %938
  %940 = vrot.lane.b32.xlu0 %v935, 32
  %v941 = vpop.permute.xlu0 %940
  %v944 = vadd.f32 %v924, %v939
  %v945 = vadd.f32 %v925, %v941
  %v946 = vtanh.pop %v944
  %v947 = vtanh.pop %v945
  %950 = vrot.lane.b32.xlu0 %v946, 64
  %v951 = vpop.permute.xlu0 %950
  %952 = vrot.lane.b32.xlu0 %v947, 64
  %v953 = vpop.permute.xlu0 %952
  %v956 = vmul.f32 %v919, %v951
  %v957 = vmul.f32 %v921, %v953
  %v958 = vld [vmem:[%s0 + $0x7] sm:$0x1]
  %v959 = vld [vmem:[%s0 + $0xf] sm:$0x1]
  %v962 = vrot.slane %v957, 7
  %v963 = vsel %vm158, %v962, %v956
  %964 = vrot.lane.b32.xlu0 %v963, 32
  %v965 = vpop.permute.xlu0 %964
  %v966 = vsel %vm25, %v965, 0
  %968 = vmatprep.subr.mxu0 0.0
  %969 = vmatpush1.msra.mxu0 %v19
  %970 = vmatprep.subr.mxu0 0.0
  %971 = vmatpush1.msra.mxu0 %v20
  %972 = vmatprep.subr.mxu0 0.0
  %973 = vmatpush1.msra.mxu0 %v21
  %974 = vmatprep.subr.mxu0 0.0
  %975 = vmatpush1.msra.mxu0 %v22
  %976 = vmatprep.subr.mxu0 0.0
  %977 = vmatpush1.msra.mxu0 0.0
  %978 = vmatprep.subr.mxu0 0.0
  %979 = vmatpush1.msra.mxu0 0.0
  %980 = vmatprep.subr.mxu0 0.0
  %981 = vmatpush1.msra.mxu0 0.0
  %982 = vmatprep.subr.mxu0 0.0
  %983 = vmatpush1.msra.mxu0 0.0
  %984 = vmatprep.subr.mxu0 0.0
  %985 = vmatpush1.msra.mxu0 0.0
  %986 = vmatprep.subr.mxu0 0.0
  %987 = vmatpush1.msra.mxu0 0.0
  %988 = vmatprep.subr.mxu0 0.0
  %989 = vmatpush1.msra.mxu0 0.0
  %990 = vmatprep.subr.mxu0 0.0
  %991 = vmatpush1.msra.mxu0 0.0
  %992 = vmatprep.subr.mxu0 0.0
  %993 = vmatpush1.msra.mxu0 0.0
  %994 = vmatprep.subr.mxu0 0.0
  %995 = vmatpush1.msra.mxu0 0.0
  %996 = vmatprep.subr.mxu0 0.0
  %997 = vmatpush1.msra.mxu0 0.0
  %998 = vmatprep.subr.mxu0 0.0
  %999 = vmatpush1.msra.mxu0 0.0
  %1000 = vmatprep.subr.mxu0 0.0
  %1001 = vmatpush1.msra.mxu0 0.0
  %1002 = vmatprep.subr.mxu0 0.0
  %1003 = vmatpush1.msra.mxu0 0.0
  %1004 = vmatprep.subr.mxu0 0.0
  %1005 = vmatpush1.msra.mxu0 0.0
  %1006 = vmatprep.subr.mxu0 0.0
  %1007 = vmatpush1.msra.mxu0 0.0
  %1008 = vmatprep.subr.mxu0 0.0
  %1009 = vmatpush1.msra.mxu0 0.0
  %1010 = vmatprep.subr.mxu0 0.0
  %1011 = vmatpush1.msra.mxu0 0.0
  %1012 = vmatprep.subr.mxu0 0.0
  %1013 = vmatpush1.msra.mxu0 0.0
  %1014 = vmatprep.subr.mxu0 0.0
  %1015 = vmatpush1.msra.mxu0 0.0
  %1016 = vmatprep.subr.mxu0 0.0
  %1017 = vmatpush1.msra.mxu0 0.0
  %1018 = vmatprep.subr.mxu0 0.0
  %1019 = vmatpush1.msra.mxu0 0.0
  %1020 = vmatprep.subr.mxu0 0.0
  %1021 = vmatpush1.msra.mxu0 0.0
  %1022 = vmatprep.subr.mxu0 0.0
  %1023 = vmatpush1.msra.mxu0 0.0
  %1024 = vmatprep.subr.mxu0 0.0
  %1025 = vmatpush1.msra.mxu0 0.0
  %1026 = vmatprep.subr.mxu0 0.0
  %1027 = vmatpush1.msra.mxu0 0.0
  %1028 = vmatprep.subr.mxu0 0.0
  %1029 = vmatpush1.msra.mxu0 0.0
  %1030 = vmatprep.subr.mxu0 0.0
  %1031 = vmatpush1.msra.mxu0 0.0
  %1032 = vmatprep.mubr.f32.mxu0 0.0
  %1033 = vmatmul.mubr.f32.gmra.mrb[0].mxu0 %v966
  %v1034 = vpop.f32.mrb[0].mxu0
  %v1035 = vadd.f32 0.0, %v1034
  %v1036 = vpop.f32.mrb[0].mxu0
  %1037 = vdwg.mxu0
  %v1039 = vrot.slane %v1035, 1
  %v1042 = vadd.f32 %v958, %v1035
  %v1043 = vadd.f32 %v959, %v1039
  %v1044 = vxor.u32 %v1042, 2147483648
  %v1045 = vxor.u32 %v1043, 2147483648
  %v1046 = vmul.f32 %v1044, 1.442695
  %v1047 = vpow.pop %v1046
  %v1048 = vmul.f32 %v1045, 1.442695
  %v1049 = vpow.pop %v1048
  %v1050 = vadd.f32 %v1047, 1.0
  %v1051 = vadd.f32 %v1049, 1.0
  %v1052 = vrcp.pop %v1050
  %v1053 = vmul.f32 1.0, %v1052
  %v1054 = vrcp.pop %v1051
  %v1055 = vmul.f32 1.0, %v1054
  %v1056 = vtanh.pop %v1042
  %v1057 = vtanh.pop %v1043
  %v1058 = vmul.f32 %v1053, %v944
  %v1059 = vmul.f32 %v1055, %v945
  %1062 = vrot.lane.b32.xlu0 %v1056, 64
  %v1063 = vpop.permute.xlu0 %1062
  %1064 = vrot.lane.b32.xlu0 %v1057, 64
  %v1065 = vpop.permute.xlu0 %1064
  %v1068 = vmul.f32 %v1053, %v1063
  %v1069 = vmul.f32 %v1055, %v1065
  %1072 = vrot.lane.b32.xlu0 %v1068, 32
  %v1073 = vpop.permute.xlu0 %1072
  %1074 = vrot.lane.b32.xlu0 %v1069, 32
  %v1075 = vpop.permute.xlu0 %1074
  %v1078 = vadd.f32 %v1058, %v1073
  %v1079 = vadd.f32 %v1059, %v1075
  %v1080 = vtanh.pop %v1078
  %v1081 = vtanh.pop %v1079
  %1084 = vrot.lane.b32.xlu0 %v1080, 64
  %v1085 = vpop.permute.xlu0 %1084
  %1086 = vrot.lane.b32.xlu0 %v1081, 64
  %v1087 = vpop.permute.xlu0 %1086
  %v1090 = vmul.f32 %v1053, %v1085
  %v1091 = vmul.f32 %v1055, %v1087
  %v1092 = vld [vmem:[%s2] sm:$0xff]
  %v1093 = vld [vmem:[%s2 + $0x8] sm:$0xff]
  %v1094 = vld [vmem:[%s2 + $0x10] sm:$0xff]
  %v1095 = vld [vmem:[%s2 + $0x18] sm:$0xff]
  %v1096 = vld [vmem:[#allocation2] sm:$0x1]
  %v1098 = vlaneseq
  %v1099 = vshrl.u32 %v1098, 7
  %v1100 = vsub.s32 0, %v1099
  %v1101 = vrot.slane %v1096, %v1100
  %v1105 = vrot.slane %v1091, 7
  %v1106 = vsel %vm158, %v1105, %v1090
  %1107 = vrot.lane.b32.xlu0 %v1106, 32
  %v1108 = vpop.permute.xlu0 %1107
  %v1109 = vsel %vm25, %v1108, 0
  %1111 = vmatprep.subr.mxu0 0.0
  %1112 = vmatpush1.msra.mxu0 %v1092
  %1113 = vmatprep.subr.mxu0 0.0
  %1114 = vmatpush1.msra.mxu0 %v1093
  %1115 = vmatprep.subr.mxu0 0.0
  %1116 = vmatpush1.msra.mxu0 %v1094
  %1117 = vmatprep.subr.mxu0 0.0
  %1118 = vmatpush1.msra.mxu0 %v1095
  %1119 = vmatprep.subr.mxu0 0.0
  %1120 = vmatpush1.msra.mxu0 0.0
  %1121 = vmatprep.subr.mxu0 0.0
  %1122 = vmatpush1.msra.mxu0 0.0
  %1123 = vmatprep.subr.mxu0 0.0
  %1124 = vmatpush1.msra.mxu0 0.0
  %1125 = vmatprep.subr.mxu0 0.0
  %1126 = vmatpush1.msra.mxu0 0.0
  %1127 = vmatprep.subr.mxu0 0.0
  %1128 = vmatpush1.msra.mxu0 0.0
  %1129 = vmatprep.subr.mxu0 0.0
  %1130 = vmatpush1.msra.mxu0 0.0
  %1131 = vmatprep.subr.mxu0 0.0
  %1132 = vmatpush1.msra.mxu0 0.0
  %1133 = vmatprep.subr.mxu0 0.0
  %1134 = vmatpush1.msra.mxu0 0.0
  %1135 = vmatprep.subr.mxu0 0.0
  %1136 = vmatpush1.msra.mxu0 0.0
  %1137 = vmatprep.subr.mxu0 0.0
  %1138 = vmatpush1.msra.mxu0 0.0
  %1139 = vmatprep.subr.mxu0 0.0
  %1140 = vmatpush1.msra.mxu0 0.0
  %1141 = vmatprep.subr.mxu0 0.0
  %1142 = vmatpush1.msra.mxu0 0.0
  %1143 = vmatprep.subr.mxu0 0.0
  %1144 = vmatpush1.msra.mxu0 0.0
  %1145 = vmatprep.subr.mxu0 0.0
  %1146 = vmatpush1.msra.mxu0 0.0
  %1147 = vmatprep.subr.mxu0 0.0
  %1148 = vmatpush1.msra.mxu0 0.0
  %1149 = vmatprep.subr.mxu0 0.0
  %1150 = vmatpush1.msra.mxu0 0.0
  %1151 = vmatprep.subr.mxu0 0.0
  %1152 = vmatpush1.msra.mxu0 0.0
  %1153 = vmatprep.subr.mxu0 0.0
  %1154 = vmatpush1.msra.mxu0 0.0
  %1155 = vmatprep.subr.mxu0 0.0
  %1156 = vmatpush1.msra.mxu0 0.0
  %1157 = vmatprep.subr.mxu0 0.0
  %1158 = vmatpush1.msra.mxu0 0.0
  %1159 = vmatprep.subr.mxu0 0.0
  %1160 = vmatpush1.msra.mxu0 0.0
  %1161 = vmatprep.subr.mxu0 0.0
  %1162 = vmatpush1.msra.mxu0 0.0
  %1163 = vmatprep.subr.mxu0 0.0
  %1164 = vmatpush1.msra.mxu0 0.0
  %1165 = vmatprep.subr.mxu0 0.0
  %1166 = vmatpush1.msra.mxu0 0.0
  %1167 = vmatprep.subr.mxu0 0.0
  %1168 = vmatpush1.msra.mxu0 0.0
  %1169 = vmatprep.subr.mxu0 0.0
  %1170 = vmatpush1.msra.mxu0 0.0
  %1171 = vmatprep.subr.mxu0 0.0
  %1172 = vmatpush1.msra.mxu0 0.0
  %1173 = vmatprep.subr.mxu0 0.0
  %1174 = vmatpush1.msra.mxu0 0.0
  %1175 = vmatprep.mubr.f32.mxu0 0.0
  %1176 = vmatmul.mubr.f32.gmra.mrb[0].mxu0 %v1109
  %v1177 = vpop.f32.mrb[0].mxu0
  %v1178 = vadd.f32 %v1101, %v1177
  %v1179 = vpop.f32.mrb[0].mxu0
  %1180 = vdwg.mxu0
  %v1181 = vxor.u32 %v1178, 2147483648
  %v1182 = vmul.f32 %v1181, 1.442695
  %v1183 = vpow.pop %v1182
  %v1184 = vadd.f32 %v1183, 1.0
  %v1185 = vrcp.pop %v1184
  %v1186 = vmul.f32 1.0, %v1185
  %vm1187 = vcmask 1024
  %1188 = vst.msk [vmem:[%s4] sm:$0x3] %vm1187, %v1186
  // Predicated region
  $region18: #{mi_modelo_forward.3} parent=0 // pred_check
    _
  $region19: #{mi_modelo_forward.3} parent=0 // pred_check_branch
    %1190 = sbr.rel (0) target = $region21
  $region20: #{mi_modelo_forward.3} parent=0 // pred_region
    _
  $region21: #{mi_modelo_forward.3} parent=0 // pred_fallthru
    _
  // Predicated region
  $region22: #{mi_modelo_forward.3} parent=0 // pred_check
    _
  $region23: #{mi_modelo_forward.3} parent=0 // pred_check_branch
    %1192 = sbr.rel (0) target = $region25
  $region24: #{mi_modelo_forward.3} parent=0 // pred_region
    _
  $region25: #{mi_modelo_forward.3} parent=0 // pred_fallthru
    _

// kernel: mi_modelo_forward.2
$region0: #{mi_modelo_forward.2}
  #allocation0 [shape = 'u32[]', space=smem, size = 0x4, offset = 0x4, fixed_abs, tag = 'smem constant byte address 0x4 - core index']
  #allocation1 [shape = 'u32[144,128]{1,0:T(1,128)}', space=vmem, size = 0x12000, scoped, tag = 'internal scratch']
  %s0 = inlined_call_operand.vmem [shape: f32[2,10,130], index: 0, kind: input, shape index: {}]
  %s1 = inlined_call_operand.vmem [shape: f32[144], index: 1, kind: input, shape index: {}]
  %s2 = inlined_call_operand.vmem [shape: f32[16], index: 2, kind: input, shape index: {}]
  %s3 = inlined_call_operand.vmem [shape: f32[2048,128], index: 3, kind: input, shape index: {}]
  %s4 = inlined_call_operand.vmem [shape: f32[1,128], index: 4, kind: input, shape index: {}]
  %s5 = inlined_call_operand.vmem [shape: f32[2,8,128], index: 5, kind: output, shape index: {}]
  %s6 = sld [smem:[#allocation0]]
  $region61: #{mi_modelo_forward.2} parent=0
    _
  %s8 = ssub.s32 1, %s6
  %s9 = scalar_select 0, %s8, %s6
  $region1: #{mi_modelo_forward.2} parent=0
    #allocation2 [shape = 'u8[1024]{0}', space=smem, size = 0x400, scoped, tag = 'input window, operand 1, single buffered']
    #allocation3 [shape = 's32[2]{0}', space=sflag, size = 0x8, scoped, tag = 'scoped memory for mi_modelo_forward.2']
    #allocation4 [shape = 'u8[512]{0}', space=smem, size = 0x200, scoped, tag = 'input window, operand 2, single buffered']
    #allocation5 [shape = 's32[1]{0}', space=sflag, size = 0x4, scoped, tag = 'scoped memory for mi_modelo_forward.2']
    %10 = vsyncpa [#allocation3], 0
    %11 = vsyncpa [#allocation5], 0
    loop: start=0, step=1, limit=4
    $region2: #{mi_modelo_forward.2} parent=1 // loop_pre_header
      _
    $region3: #{mi_modelo_forward.2} parent=1 // loop_header
      %s13 = sphi 0, %s17
      %p14 = scmp.ge.s32.totalorder %s13, 4
      %s23 = sphi 0, %s25
      %s26 = sphi 0, %s23
      %s27 = sphi 0, %s26
      %s43 = sphi 0, %s27
      %s47 = sphi 0, %s47
      %s49 = sphi 0, %s47
      %s50 = sphi 0, %s49
      %s64 = sphi 0, %s50
      %s68 = sphi 0, %s68
      %s70 = sphi 0, %s68
      %s71 = sphi 0, %s70
      %s85 = sphi 0, %s71
      %s89 = sphi 0, %s89
      %s91 = sphi 0, %s89
      %s92 = sphi 0, %s91
      %s106 = sphi 0, %s92
      %s110 = sphi 0, %s110
      %s112 = sphi 0, %s110
      %s113 = sphi 0, %s112
      %s127 = sphi 0, %s113
      %s133 = sphi 0, %s135
      %s136 = sphi 0, %s133
      %s137 = sphi 0, %s136
      %s153 = sphi 0, %s137
    $region4: #{mi_modelo_forward.2} parent=1 // loop_header_branch
      %16 = sbr.rel (%p14) target = $region8
    $region5: #{mi_modelo_forward.2} parent=1 // loop_body
      %s18 = ssub.s32 %s13, 1
      %s19 = ssub.s32 %s13, 2
      %s20 = sadd.s32 %s13, 1
      %s21 = ssub.s32 %s13, %s20
      %p22 = scmp.eq.s32.totalorder %s21, 0
      %s24 = sadd.s32 %s23, 1
      %s25 = scalar_select %p22, %s23, %s24
      %p28 = pneg %p22
      %p29 = scmp.eq.s32.totalorder %s13, 1
      %p30 = por %p28, %p29
      %p31 = scmp.ne.s32.totalorder %s23, %s26
      %p32 = scmp.eq.s32.totalorder %s13, 0
      %p33 = por %p31, %p32
      %p34 = scmp.ne.s32.totalorder %s23, %s26
      %p35 = scmp.eq.s32.totalorder %s18, 1
      %p36 = por %p34, %p35
      %p37 = scmp.ne.s32.totalorder %s26, %s27
      %p38 = scmp.eq.s32.totalorder %s18, 0
      %p39 = por %p37, %p38
      %p40 = scmp.ne.s32.totalorder %s26, %s27
      %p41 = scmp.eq.s32.totalorder %s19, 1
      %p42 = por %p40, %p41
      %p44 = scmp.ne.s32.totalorder %s27, %s43
      %p45 = scmp.eq.s32.totalorder %s19, 0
      %p46 = por %p44, %p45
      %s48 = sadd.s32 %s47, 1
      %p51 = scmp.eq.s32.totalorder %s13, 1
      %p52 = scmp.ne.s32.totalorder %s47, %s49
      %p53 = scmp.eq.s32.totalorder %s13, 0
      %p54 = por %p52, %p53
      %p55 = scmp.ne.s32.totalorder %s47, %s49
      %p56 = scmp.eq.s32.totalorder %s18, 1
      %p57 = por %p55, %p56
      %p58 = scmp.ne.s32.totalorder %s49, %s50
      %p59 = scmp.eq.s32.totalorder %s18, 0
      %p60 = por %p58, %p59
      %p61 = scmp.ne.s32.totalorder %s49, %s50
      %p62 = scmp.eq.s32.totalorder %s19, 1
      %p63 = por %p61, %p62
      %p65 = scmp.ne.s32.totalorder %s50, %s64
      %p66 = scmp.eq.s32.totalorder %s19, 0
      %p67 = por %p65, %p66
      %s69 = sadd.s32 %s68, 1
      %p72 = scmp.eq.s32.totalorder %s13, 1
      %p73 = scmp.ne.s32.totalorder %s68, %s70
      %p74 = scmp.eq.s32.totalorder %s13, 0
      %p75 = por %p73, %p74
      %p76 = scmp.ne.s32.totalorder %s68, %s70
      %p77 = scmp.eq.s32.totalorder %s18, 1
      %p78 = por %p76, %p77
      %p79 = scmp.ne.s32.totalorder %s70, %s71
      %p80 = scmp.eq.s32.totalorder %s18, 0
      %p81 = por %p79, %p80
      %p82 = scmp.ne.s32.totalorder %s70, %s71
      %p83 = scmp.eq.s32.totalorder %s19, 1
      %p84 = por %p82, %p83
      %p86 = scmp.ne.s32.totalorder %s71, %s85
      %p87 = scmp.eq.s32.totalorder %s19, 0
      %p88 = por %p86, %p87
      %s90 = sadd.s32 %s89, 1
      %p93 = scmp.eq.s32.totalorder %s13, 1
      %p94 = scmp.ne.s32.totalorder %s89, %s91
      %p95 = scmp.eq.s32.totalorder %s13, 0
      %p96 = por %p94, %p95
      %p97 = scmp.ne.s32.totalorder %s89, %s91
      %p98 = scmp.eq.s32.totalorder %s18, 1
      %p99 = por %p97, %p98
      %p100 = scmp.ne.s32.totalorder %s91, %s92
      %p101 = scmp.eq.s32.totalorder %s18, 0
      %p102 = por %p100, %p101
      %p103 = scmp.ne.s32.totalorder %s91, %s92
      %p104 = scmp.eq.s32.totalorder %s19, 1
      %p105 = por %p103, %p104
      %p107 = scmp.ne.s32.totalorder %s92, %s106
      %p108 = scmp.eq.s32.totalorder %s19, 0
      %p109 = por %p107, %p108
      %s111 = sadd.s32 %s110, 1
      %p114 = scmp.eq.s32.totalorder %s13, 1
      %p115 = scmp.ne.s32.totalorder %s110, %s112
      %p116 = scmp.eq.s32.totalorder %s13, 0
      %p117 = por %p115, %p116
      %p118 = scmp.ne.s32.totalorder %s110, %s112
      %p119 = scmp.eq.s32.totalorder %s18, 1
      %p120 = por %p118, %p119
      %p121 = scmp.ne.s32.totalorder %s112, %s113
      %p122 = scmp.eq.s32.totalorder %s18, 0
      %p123 = por %p121, %p122
      %p124 = scmp.ne.s32.totalorder %s112, %s113
      %p125 = scmp.eq.s32.totalorder %s19, 1
      %p126 = por %p124, %p125
      %p128 = scmp.ne.s32.totalorder %s113, %s127
      %p129 = scmp.eq.s32.totalorder %s19, 0
      %p130 = por %p128, %p129
      %s131 = ssub.s32 %s13, %s20
      %p132 = scmp.eq.s32.totalorder %s131, 0
      %s134 = sadd.s32 %s133, 1
      %s135 = scalar_select %p132, %s133, %s134
      %p138 = pneg %p132
      %p139 = scmp.eq.s32.totalorder %s13, 1
      %p140 = por %p138, %p139
      %p141 = scmp.ne.s32.totalorder %s133, %s136
      %p142 = scmp.eq.s32.totalorder %s13, 0
      %p143 = por %p141, %p142
      %p144 = scmp.ne.s32.totalorder %s133, %s136
      %p145 = scmp.eq.s32.totalorder %s18, 1
      %p146 = por %p144, %p145
      %p147 = scmp.ne.s32.totalorder %s136, %s137
      %p148 = scmp.eq.s32.totalorder %s18, 0
      %p149 = por %p147, %p148
      %p150 = scmp.ne.s32.totalorder %s136, %s137
      %p151 = scmp.eq.s32.totalorder %s19, 1
      %p152 = por %p150, %p151
      %p154 = scmp.ne.s32.totalorder %s137, %s153
      %p155 = scmp.eq.s32.totalorder %s19, 0
      %p156 = por %p154, %p155
      %p157 = scmp.le.s32.totalorder 1, %s13
      %p158 = scmp.lt.s32.totalorder %s13, 3
      %p159 = pnand %p157, %p158
      %p160 = pneg %p159
      // Predicated region
      $region9: #{mi_modelo_forward.2} parent=5 // pred_check
        _
      $region10: #{mi_modelo_forward.2} parent=5 // pred_check_branch
        %162 = sbr.rel (%p159) target = $region12
      $region11: #{mi_modelo_forward.2} parent=5 // pred_region
        %s163 = ssub.s32 %s13, 1
        // Predicated region
        $region13: #{mi_modelo_forward.2} parent=11 // pred_check
          %p164 = pneg %p60
        $region14: #{mi_modelo_forward.2} parent=11 // pred_check_branch
          %166 = sbr.rel (%p164) target = $region16
        $region15: #{mi_modelo_forward.2} parent=11 // pred_region
          %s168 = ssub.s32 32, 32
          %169 = vsyncadd [#allocation3], %s168
          %s171 = sshll.u32 %s1, 4
          %s172 = int_to_ptr.vmem [resolvable:$true] %s171
          %174 = dma.vmem_to_smem %s172, 32, [#allocation2], [#allocation3]
        $region16: #{mi_modelo_forward.2} parent=11 // pred_fallthru
          _
        // Predicated region
        $region17: #{mi_modelo_forward.2} parent=11 // pred_check
          %p175 = pneg %p81
        $region18: #{mi_modelo_forward.2} parent=11 // pred_check_branch
          %177 = sbr.rel (%p175) target = $region20
        $region19: #{mi_modelo_forward.2} parent=11 // pred_region
          %s179 = ssub.s32 16, 16
          %180 = vsyncadd [#allocation5], %s179
          %s182 = sshll.u32 %s2, 4
          %s183 = int_to_ptr.vmem [resolvable:$true] %s182
          %185 = dma.vmem_to_smem %s183, 16, [#allocation4], [#allocation5]
        $region20: #{mi_modelo_forward.2} parent=11 // pred_fallthru
          _
        // Predicated region
        $region21: #{mi_modelo_forward.2} parent=11 // pred_check
          %p186 = pneg %p102
        $region22: #{mi_modelo_forward.2} parent=11 // pred_check_branch
          %188 = sbr.rel (%p186) target = $region24
        $region23: #{mi_modelo_forward.2} parent=11 // pred_region
          _
        $region24: #{mi_modelo_forward.2} parent=11 // pred_fallthru
          _
        // Predicated region
        $region25: #{mi_modelo_forward.2} parent=11 // pred_check
          %p189 = pneg %p123
        $region26: #{mi_modelo_forward.2} parent=11 // pred_check_branch
          %191 = sbr.rel (%p189) target = $region28
        $region27: #{mi_modelo_forward.2} parent=11 // pred_region
          _
        $region28: #{mi_modelo_forward.2} parent=11 // pred_fallthru
          _
      $region12: #{mi_modelo_forward.2} parent=5 // pred_fallthru
        _
      %p192 = scmp.lt.s32.totalorder %s13, 2
      // Predicated region
      $region29: #{mi_modelo_forward.2} parent=5 // pred_check
        %p193 = pneg %p192
      $region30: #{mi_modelo_forward.2} parent=5 // pred_check_branch
        %195 = sbr.rel (%p193) target = $region32
      $region31: #{mi_modelo_forward.2} parent=5 // pred_region
        // Predicated region
        $region33: #{mi_modelo_forward.2} parent=31 // pred_check
          %p196 = pneg %p33
        $region34: #{mi_modelo_forward.2} parent=31 // pred_check_branch
          %198 = sbr.rel (%p196) target = $region36
        $region35: #{mi_modelo_forward.2} parent=31 // pred_region
          %p199 = scmp.lt.s32.totalorder %s13, 1
          %s200 = scalar_select %p199, %s13, 1
          %s201 = smul.addr %s200, 4
          %s202 = smul.addr %s201, 8
          %s203 = scalar_lea.vmem %s0, %s202
        $region36: #{mi_modelo_forward.2} parent=31 // pred_fallthru
          _
      $region32: #{mi_modelo_forward.2} parent=5 // pred_fallthru
        _
      %p204 = scmp.le.s32.totalorder 1, %s13
      %p205 = scmp.lt.s32.totalorder %s13, 3
      %p206 = pnand %p204, %p205
      %p207 = pneg %p206
      // Predicated region
      $region37: #{mi_modelo_forward.2} parent=5 // pred_check
        _
      $region38: #{mi_modelo_forward.2} parent=5 // pred_check_branch
        %209 = sbr.rel (%p206) target = $region40
      $region39: #{mi_modelo_forward.2} parent=5 // pred_region
        %s210 = ssub.s32 %s13, 1
        // Predicated region
        $region41: #{mi_modelo_forward.2} parent=39 // pred_check
          %p211 = pneg %p60
        $region42: #{mi_modelo_forward.2} parent=39 // pred_check_branch
          %213 = sbr.rel (%p211) target = $region44
        $region43: #{mi_modelo_forward.2} parent=39 // pred_region
          %214 = dma.done [#allocation3], 32
        $region44: #{mi_modelo_forward.2} parent=39 // pred_fallthru
          _
        // Predicated region
        $region45: #{mi_modelo_forward.2} parent=39 // pred_check
          %p215 = pneg %p81
        $region46: #{mi_modelo_forward.2} parent=39 // pred_check_branch
          %217 = sbr.rel (%p215) target = $region48
        $region47: #{mi_modelo_forward.2} parent=39 // pred_region
          %218 = dma.done [#allocation5], 16
        $region48: #{mi_modelo_forward.2} parent=39 // pred_fallthru
          _
        %219 = sfence
        %p220 = scmp.lt.s32.totalorder %s18, 1
        %s221 = scalar_select %p220, %s18, 1
        %s222 = smul.addr %s221, 4
        %s223 = smul.addr %s222, 8
        %s224 = scalar_lea.vmem %s0, %s223
        %p225 = pneg %p39
        %p226 = pneg %p36
        %p227 = pneg %p60
        %p228 = pneg %p57
        %p229 = pneg %p81
        %p230 = pneg %p78
        %p231 = pneg %p102
        %p232 = pneg %p99
        %p233 = pneg %p123
        %p234 = pneg %p120
        %p235 = pneg %p149
        %p236 = pneg %p146
        %p237 = scmp.lt.s32.totalorder %s18, 1
        %s238 = scalar_select %p237, %s18, 1
        %s239 = smul.addr %s238, 8
        %s240 = scalar_lea.vmem %s5, %s239
        %p241 = scmp.lt.s32.totalorder %s18, 1
        %s242 = scalar_select %p241, %s18, 1
        %s243 = smul.addr %s242, 4
        %s244 = smul.addr %s243, 8
        %s245 = scalar_lea.vmem %s0, %s244
        %p246 = scmp.lt.s32.totalorder %s18, 1
        %s247 = scalar_select %p246, %s18, 1
        %s248 = smul.addr %s247, 8
        %s249 = scalar_lea.vmem %s5, %s248
        %v250 = vld [vmem:[%s245] sm:$0xff]
        %v251 = vld [vmem:[%s245 + $0x8] sm:$0xff]
        %v252 = vld [vmem:[%s245 + $0x10] sm:$0x3]
        %v253 = vld [vmem:[%s245 + $0x18] sm:$0x3]
        %s254 = sld [smem:[#allocation2]]
        %v255 = vstv %s254
        %v256 = vmul.f32 %v255, %v250
        %v257 = vadd.f32 %v256, 0.0
        %s258 = sld [smem:[#allocation2 + $0x1]]
        %v259 = vstv %s258
        %v260 = vmul.f32 %v259, %v250
        %v261 = vmul.f32 %v259, %v252
        %vm264 = vcmask 1046528
        %v265 = vrot.slane %v260, 1
        %v266 = vrot.slane %v261, 1
        %v267 = vsel %vm264, %v265, %v266
        %v269 = vadd.f32 %v257, %v267
        %s270 = sld [smem:[#allocation2 + $0x2]]
        %v271 = vstv %s270
        %v272 = vmul.f32 %v271, %v250
        %v273 = vmul.f32 %v271, %v252
        %vm276 = vcmask 1045504
        %v277 = vrot.slane %v272, 2
        %v278 = vrot.slane %v273, 2
        %v279 = vsel %vm276, %v277, %v278
        %v281 = vadd.f32 %v269, %v279
        %s282 = sld [smem:[#allocation2 + $0x3]]
        %v283 = vstv %s282
        %v284 = vmul.f32 %v283, %v250
        %v285 = vmul.f32 %v283, %v251
        %288 = vrot.lane.b32.xlu0 %v284, 127
        %v289 = vpop.permute.xlu0 %288
        %290 = vrot.lane.b32.xlu0 %v285, 127
        %v291 = vpop.permute.xlu0 %290
        %vm292 = vcmask 1039360
        %v293 = vsel %vm292, %v289, %v291
        %v295 = vadd.f32 %v281, %v293
        %s296 = sld [smem:[#allocation2 + $0x4]]
        %v297 = vstv %s296
        %v298 = vmul.f32 %v297, %v250
        %v299 = vmul.f32 %v297, %v251
        %v300 = vmul.f32 %v297, %v252
        %v301 = vmul.f32 %v297, %v253
        %v306 = vrot.slane %v298, 1
        %v307 = vrot.slane %v300, 1
        %v308 = vsel %vm264, %v306, %v307
        %v309 = vrot.slane %v299, 1
        %v310 = vrot.slane %v301, 1
        %v311 = vsel %vm264, %v309, %v310
        %312 = vrot.lane.b32.xlu0 %v308, 127
        %v313 = vpop.permute.xlu0 %312
        %314 = vrot.lane.b32.xlu0 %v311, 127
        %v315 = vpop.permute.xlu0 %314
        %v316 = vsel %vm292, %v313, %v315
        %v318 = vadd.f32 %v295, %v316
        %s319 = sld [smem:[#allocation2 + $0x5]]
        %v320 = vstv %s319
        %v321 = vmul.f32 %v320, %v250
        %v322 = vmul.f32 %v320, %v251
        %v323 = vmul.f32 %v320, %v252
        %v324 = vmul.f32 %v320, %v253
        %v329 = vrot.slane %v321, 2
        %v330 = vrot.slane %v323, 2
        %v331 = vsel %vm276, %v329, %v330
        %v332 = vrot.slane %v322, 2
        %v333 = vrot.slane %v324, 2
        %v334 = vsel %vm276, %v332, %v333
        %335 = vrot.lane.b32.xlu0 %v331, 127
        %v336 = vpop.permute.xlu0 %335
        %337 = vrot.lane.b32.xlu0 %v334, 127
        %v338 = vpop.permute.xlu0 %337
        %v339 = vsel %vm292, %v336, %v338
        %v341 = vadd.f32 %v318, %v339
        %s342 = sld [smem:[#allocation2 + $0x6]]
        %v343 = vstv %s342
        %v344 = vmul.f32 %v343, %v250
        %v345 = vmul.f32 %v343, %v251
        %348 = vrot.lane.b32.xlu0 %v344, 126
        %v349 = vpop.permute.xlu0 %348
        %350 = vrot.lane.b32.xlu0 %v345, 126
        %v351 = vpop.permute.xlu0 %350
        %vm352 = vcmask 1031168
        %v353 = vsel %vm352, %v349, %v351
        %v355 = vadd.f32 %v341, %v353
        %s356 = sld [smem:[#allocation2 + $0x7]]
        %v357 = vstv %s356
        %v358 = vmul.f32 %v357, %v250
        %v359 = vmul.f32 %v357, %v251
        %v360 = vmul.f32 %v357, %v252
        %v361 = vmul.f32 %v357, %v253
        %v366 = vrot.slane %v358, 1
        %v367 = vrot.slane %v360, 1
        %v368 = vsel %vm264, %v366, %v367
        %v369 = vrot.slane %v359, 1
        %v370 = vrot.slane %v361, 1
        %v371 = vsel %vm264, %v369, %v370
        %372 = vrot.lane.b32.xlu0 %v368, 126
        %v373 = vpop.permute.xlu0 %372
        %374 = vrot.lane.b32.xlu0 %v371, 126
        %v375 = vpop.permute.xlu0 %374
        %v376 = vsel %vm352, %v373, %v375
        %v378 = vadd.f32 %v355, %v376
        %s379 = sld [smem:[#allocation2 + $0x8]]
        %v380 = vstv %s379
        %v381 = vmul.f32 %v380, %v250
        %v382 = vmul.f32 %v380, %v251
        %v383 = vmul.f32 %v380, %v252
        %v384 = vmul.f32 %v380, %v253
        %v389 = vrot.slane %v381, 2
        %v390 = vrot.slane %v383, 2
        %v391 = vsel %vm276, %v389, %v390
        %v392 = vrot.slane %v382, 2
        %v393 = vrot.slane %v384, 2
        %v394 = vsel %vm276, %v392, %v393
        %395 = vrot.lane.b32.xlu0 %v391, 126
        %v396 = vpop.permute.xlu0 %395
        %397 = vrot.lane.b32.xlu0 %v394, 126
        %v398 = vpop.permute.xlu0 %397
        %v399 = vsel %vm352, %v396, %v398
        %v401 = vadd.f32 %v378, %v399
        %s402 = sld [smem:[#allocation4]]
        %v403 = vstv %s402
        %v404 = vadd.f32 %v401, %v403
        %v405 = vmax.f32 %v404, 0.0
        %v406 = vld [vmem:[%s3] sm:$0xff]
        %v407 = vld [vmem:[%s3 + $0x8] sm:$0xff]
        %v408 = vld [vmem:[%s3 + $0x10] sm:$0xff]
        %v409 = vld [vmem:[%s3 + $0x18] sm:$0xff]
        %v410 = vld [vmem:[%s3 + $0x20] sm:$0xff]
        %v411 = vld [vmem:[%s3 + $0x28] sm:$0xff]
        %v412 = vld [vmem:[%s3 + $0x30] sm:$0xff]
        %v413 = vld [vmem:[%s3 + $0x38] sm:$0xff]
        %v414 = vld [vmem:[%s3 + $0x40] sm:$0xff]
        %v415 = vld [vmem:[%s3 + $0x48] sm:$0xff]
        %v416 = vld [vmem:[%s3 + $0x50] sm:$0xff]
        %v417 = vld [vmem:[%s3 + $0x58] sm:$0xff]
        %v418 = vld [vmem:[%s3 + $0x60] sm:$0xff]
        %v419 = vld [vmem:[%s3 + $0x68] sm:$0xff]
        %v420 = vld [vmem:[%s3 + $0x70] sm:$0xff]
        %v421 = vld [vmem:[%s3 + $0x78] sm:$0xff]
        %s422 = sld [smem:[#allocation2 + $0x9]]
        %v423 = vstv %s422
        %v424 = vmul.f32 %v423, %v250
        %v425 = vadd.f32 %v424, 0.0
        %s426 = sld [smem:[#allocation2 + $0xa]]
        %v427 = vstv %s426
        %v428 = vmul.f32 %v427, %v250
        %v429 = vmul.f32 %v427, %v252
        %v432 = vrot.slane %v428, 1
        %v433 = vrot.slane %v429, 1
        %v434 = vsel %vm264, %v432, %v433
        %v436 = vadd.f32 %v425, %v434
        %s437 = sld [smem:[#allocation2 + $0xb]]
        %v438 = vstv %s437
        %v439 = vmul.f32 %v438, %v250
        %v440 = vmul.f32 %v438, %v252
        %v443 = vrot.slane %v439, 2
        %v444 = vrot.slane %v440, 2
        %v445 = vsel %vm276, %v443, %v444
        %v447 = vadd.f32 %v436, %v445
        %s448 = sld [smem:[#allocation2 + $0xc]]
        %v449 = vstv %s448
        %v450 = vmul.f32 %v449, %v250
        %v451 = vmul.f32 %v449, %v251
        %454 = vrot.lane.b32.xlu0 %v450, 127
        %v455 = vpop.permute.xlu0 %454
        %456 = vrot.lane.b32.xlu0 %v451, 127
        %v457 = vpop.permute.xlu0 %456
        %v458 = vsel %vm292, %v455, %v457
        %v460 = vadd.f32 %v447, %v458
        %s461 = sld [smem:[#allocation2 + $0xd]]
        %v462 = vstv %s461
        %v463 = vmul.f32 %v462, %v250
        %v464 = vmul.f32 %v462, %v251
        %v465 = vmul.f32 %v462, %v252
        %v466 = vmul.f32 %v462, %v253
        %v471 = vrot.slane %v463, 1
        %v472 = vrot.slane %v465, 1
        %v473 = vsel %vm264, %v471, %v472
        %v474 = vrot.slane %v464, 1
        %v475 = vrot.slane %v466, 1
        %v476 = vsel %vm264, %v474, %v475
        %477 = vrot.lane.b32.xlu0 %v473, 127
        %v478 = vpop.permute.xlu0 %477
        %479 = vrot.lane.b32.xlu0 %v476, 127
        %v480 = vpop.permute.xlu0 %479
        %v481 = vsel %vm292, %v478, %v480
        %v483 = vadd.f32 %v460, %v481
        %s484 = sld [smem:[#allocation2 + $0xe]]
        %v485 = vstv %s484
        %v486 = vmul.f32 %v485, %v250
        %v487 = vmul.f32 %v485, %v251
        %v488 = vmul.f32 %v485, %v252
        %v489 = vmul.f32 %v485, %v253
        %v494 = vrot.slane %v486, 2
        %v495 = vrot.slane %v488, 2
        %v496 = vsel %vm276, %v494, %v495
        %v497 = vrot.slane %v487, 2
        %v498 = vrot.slane %v489, 2
        %v499 = vsel %vm276, %v497, %v498
        %500 = vrot.lane.b32.xlu0 %v496, 127
        %v501 = vpop.permute.xlu0 %500
        %502 = vrot.lane.b32.xlu0 %v499, 127
        %v503 = vpop.permute.xlu0 %502
        %v504 = vsel %vm292, %v501, %v503
        %v506 = vadd.f32 %v483, %v504
        %s507 = sld [smem:[#allocation2 + $0xf]]
        %v508 = vstv %s507
        %v509 = vmul.f32 %v508, %v250
        %v510 = vmul.f32 %v508, %v251
        %513 = vrot.lane.b32.xlu0 %v509, 126
        %v514 = vpop.permute.xlu0 %513
        %515 = vrot.lane.b32.xlu0 %v510, 126
        %v516 = vpop.permute.xlu0 %515
        %v517 = vsel %vm352, %v514, %v516
        %v519 = vadd.f32 %v506, %v517
        %s520 = sld [smem:[#allocation2 + $0x10]]
        %v521 = vstv %s520
        %v522 = vmul.f32 %v521, %v250
        %v523 = vmul.f32 %v521, %v251
        %v524 = vmul.f32 %v521, %v252
        %v525 = vmul.f32 %v521, %v253
        %v530 = vrot.slane %v522, 1
        %v531 = vrot.slane %v524, 1
        %v532 = vsel %vm264, %v530, %v531
        %v533 = vrot.slane %v523, 1
        %v534 = vrot.slane %v525, 1
        %v535 = vsel %vm264, %v533, %v534
        %536 = vrot.lane.b32.xlu0 %v532, 126
        %v537 = vpop.permute.xlu0 %536
        %538 = vrot.lane.b32.xlu0 %v535, 126
        %v539 = vpop.permute.xlu0 %538
        %v540 = vsel %vm352, %v537, %v539
        %v542 = vadd.f32 %v519, %v540
        %s543 = sld [smem:[#allocation2 + $0x11]]
        %v544 = vstv %s543
        %v545 = vmul.f32 %v544, %v250
        %v546 = vmul.f32 %v544, %v251
        %v547 = vmul.f32 %v544, %v252
        %v548 = vmul.f32 %v544, %v253
        %v553 = vrot.slane %v545, 2
        %v554 = vrot.slane %v547, 2
        %v555 = vsel %vm276, %v553, %v554
        %v556 = vrot.slane %v546, 2
        %v557 = vrot.slane %v548, 2
        %v558 = vsel %vm276, %v556, %v557
        %559 = vrot.lane.b32.xlu0 %v555, 126
        %v560 = vpop.permute.xlu0 %559
        %561 = vrot.lane.b32.xlu0 %v558, 126
        %v562 = vpop.permute.xlu0 %561
        %v563 = vsel %vm352, %v560, %v562
        %v565 = vadd.f32 %v542, %v563
        %s566 = sld [smem:[#allocation4 + $0x1]]
        %v567 = vstv %s566
        %v568 = vadd.f32 %v565, %v567
        %v569 = vmax.f32 %v568, 0.0
        %v570 = vld [vmem:[%s3 + $0x80] sm:$0xff]
        %v571 = vld [vmem:[%s3 + $0x88] sm:$0xff]
        %v572 = vld [vmem:[%s3 + $0x90] sm:$0xff]
        %v573 = vld [vmem:[%s3 + $0x98] sm:$0xff]
        %v574 = vld [vmem:[%s3 + $0xa0] sm:$0xff]
        %v575 = vld [vmem:[%s3 + $0xa8] sm:$0xff]
        %v576 = vld [vmem:[%s3 + $0xb0] sm:$0xff]
        %v577 = vld [vmem:[%s3 + $0xb8] sm:$0xff]
        %v578 = vld [vmem:[%s3 + $0xc0] sm:$0xff]
        %v579 = vld [vmem:[%s3 + $0xc8] sm:$0xff]
        %v580 = vld [vmem:[%s3 + $0xd0] sm:$0xff]
        %v581 = vld [vmem:[%s3 + $0xd8] sm:$0xff]
        %v582 = vld [vmem:[%s3 + $0xe0] sm:$0xff]
        %v583 = vld [vmem:[%s3 + $0xe8] sm:$0xff]
        %v584 = vld [vmem:[%s3 + $0xf0] sm:$0xff]
        %v585 = vld [vmem:[%s3 + $0xf8] sm:$0xff]
        %586 = vmatprep.subr.mxu0 0.0
        %587 = vmatpush1.msra.mxu0 %v570
        %588 = vmatprep.subr.mxu0 0.0
        %589 = vmatpush1.msra.mxu0 %v571
        %590 = vmatprep.subr.mxu0 0.0
        %591 = vmatpush1.msra.mxu0 %v572
        %592 = vmatprep.subr.mxu0 0.0
        %593 = vmatpush1.msra.mxu0 %v573
        %594 = vmatprep.subr.mxu0 0.0
        %595 = vmatpush1.msra.mxu0 %v574
        %596 = vmatprep.subr.mxu0 0.0
        %597 = vmatpush1.msra.mxu0 %v575
        %598 = vmatprep.subr.mxu0 0.0
        %599 = vmatpush1.msra.mxu0 %v576
        %600 = vmatprep.subr.mxu0 0.0
        %601 = vmatpush1.msra.mxu0 %v577
        %602 = vmatprep.subr.mxu0 0.0
        %603 = vmatpush1.msra.mxu0 %v578
        %604 = vmatprep.subr.mxu0 0.0
        %605 = vmatpush1.msra.mxu0 %v579
        %606 = vmatprep.subr.mxu0 0.0
        %607 = vmatpush1.msra.mxu0 %v580
        %608 = vmatprep.subr.mxu0 0.0
        %609 = vmatpush1.msra.mxu0 %v581
        %610 = vmatprep.subr.mxu0 0.0
        %611 = vmatpush1.msra.mxu0 %v582
        %612 = vmatprep.subr.mxu0 0.0
        %613 = vmatpush1.msra.mxu0 %v583
        %614 = vmatprep.subr.mxu0 0.0
        %615 = vmatpush1.msra.mxu0 %v584
        %616 = vmatprep.subr.mxu0 0.0
        %617 = vmatpush1.msra.mxu0 %v585
        %618 = vmatprep.subr.mxu0 0.0
        %619 = vmatpush1.msra.mxu0 0.0
        %620 = vmatprep.subr.mxu0 0.0
        %621 = vmatpush1.msra.mxu0 0.0
        %622 = vmatprep.subr.mxu0 0.0
        %623 = vmatpush1.msra.mxu0 0.0
        %624 = vmatprep.subr.mxu0 0.0
        %625 = vmatpush1.msra.mxu0 0.0
        %626 = vmatprep.subr.mxu0 0.0
        %627 = vmatpush1.msra.mxu0 0.0
        %628 = vmatprep.subr.mxu0 0.0
        %629 = vmatpush1.msra.mxu0 0.0
        %630 = vmatprep.subr.mxu0 0.0
        %631 = vmatpush1.msra.mxu0 0.0
        %632 = vmatprep.subr.mxu0 0.0
        %633 = vmatpush1.msra.mxu0 0.0
        %634 = vmatprep.subr.mxu0 0.0
        %635 = vmatpush1.msra.mxu0 0.0
        %636 = vmatprep.subr.mxu0 0.0
        %637 = vmatpush1.msra.mxu0 0.0
        %638 = vmatprep.subr.mxu0 0.0
        %639 = vmatpush1.msra.mxu0 0.0
        %640 = vmatprep.subr.mxu0 0.0
        %641 = vmatpush1.msra.mxu0 0.0
        %642 = vmatprep.subr.mxu0 0.0
        %643 = vmatpush1.msra.mxu0 0.0
        %644 = vmatprep.subr.mxu0 0.0
        %645 = vmatpush1.msra.mxu0 0.0
        %646 = vmatprep.subr.mxu0 0.0
        %647 = vmatpush1.msra.mxu0 0.0
        %648 = vmatprep.subr.mxu0 0.0
        %649 = vmatpush1.msra.mxu0 0.0
        %650 = vmatprep.mubr.f32.mxu0 0.0
        %651 = vmatmul.mubr.f32.gmra.mrb[0].mxu0 %v569
        %v652 = vpop.f32.mrb[0].mxu0
        %v653 = vadd.f32 0.0, %v652
        %v654 = vpop.f32.mrb[0].mxu0
        %655 = vdwg.mxu0
        %656 = vmatprep.subr.mxu0 0.0
        %657 = vmatpush1.msra.mxu0 %v406
        %658 = vmatprep.subr.mxu0 0.0
        %659 = vmatpush1.msra.mxu0 %v407
        %660 = vmatprep.subr.mxu0 0.0
        %661 = vmatpush1.msra.mxu0 %v408
        %662 = vmatprep.subr.mxu0 0.0
        %663 = vmatpush1.msra.mxu0 %v409
        %664 = vmatprep.subr.mxu0 0.0
        %665 = vmatpush1.msra.mxu0 %v410
        %666 = vmatprep.subr.mxu0 0.0
        %667 = vmatpush1.msra.mxu0 %v411
        %668 = vmatprep.subr.mxu0 0.0
        %669 = vmatpush1.msra.mxu0 %v412
        %670 = vmatprep.subr.mxu0 0.0
        %671 = vmatpush1.msra.mxu0 %v413
        %672 = vmatprep.subr.mxu0 0.0
        %673 = vmatpush1.msra.mxu0 %v414
        %674 = vmatprep.subr.mxu0 0.0
        %675 = vmatpush1.msra.mxu0 %v415
        %676 = vmatprep.subr.mxu0 0.0
        %677 = vmatpush1.msra.mxu0 %v416
        %678 = vmatprep.subr.mxu0 0.0
        %679 = vmatpush1.msra.mxu0 %v417
        %680 = vmatprep.subr.mxu0 0.0
        %681 = vmatpush1.msra.mxu0 %v418
        %682 = vmatprep.subr.mxu0 0.0
        %683 = vmatpush1.msra.mxu0 %v419
        %684 = vmatprep.subr.mxu0 0.0
        %685 = vmatpush1.msra.mxu0 %v420
        %686 = vmatprep.subr.mxu0 0.0
        %687 = vmatpush1.msra.mxu0 %v421
        %688 = vmatprep.subr.mxu0 0.0
        %689 = vmatpush1.msra.mxu0 0.0
        %690 = vmatprep.subr.mxu0 0.0
        %691 = vmatpush1.msra.mxu0 0.0
        %692 = vmatprep.subr.mxu0 0.0
        %693 = vmatpush1.msra.mxu0 0.0
        %694 = vmatprep.subr.mxu0 0.0
        %695 = vmatpush1.msra.mxu0 0.0
        %696 = vmatprep.subr.mxu0 0.0
        %697 = vmatpush1.msra.mxu0 0.0
        %698 = vmatprep.subr.mxu0 0.0
        %699 = vmatpush1.msra.mxu0 0.0
        %700 = vmatprep.subr.mxu0 0.0
        %701 = vmatpush1.msra.mxu0 0.0
        %702 = vmatprep.subr.mxu0 0.0
        %703 = vmatpush1.msra.mxu0 0.0
        %704 = vmatprep.subr.mxu0 0.0
        %705 = vmatpush1.msra.mxu0 0.0
        %706 = vmatprep.subr.mxu0 0.0
        %707 = vmatpush1.msra.mxu0 0.0
        %708 = vmatprep.subr.mxu0 0.0
        %709 = vmatpush1.msra.mxu0 0.0
        %710 = vmatprep.subr.mxu0 0.0
        %711 = vmatpush1.msra.mxu0 0.0
        %712 = vmatprep.subr.mxu0 0.0
        %713 = vmatpush1.msra.mxu0 0.0
        %714 = vmatprep.subr.mxu0 0.0
        %715 = vmatpush1.msra.mxu0 0.0
        %716 = vmatprep.subr.mxu0 0.0
        %717 = vmatpush1.msra.mxu0 0.0
        %718 = vmatprep.subr.mxu0 0.0
        %719 = vmatpush1.msra.mxu0 0.0
        %720 = vmatprep.mubr.f32.mxu0 0.0
        %721 = vmatmul.mubr.f32.gmra.mrb[0].mxu0 %v405
        %v722 = vpop.f32.mrb[0].mxu0
        %v723 = vadd.f32 %v653, %v722
        %v724 = vpop.f32.mrb[0].mxu0
        %725 = vdwg.mxu0
        %s726 = sld [smem:[#allocation2 + $0x12]]
        %v727 = vstv %s726
        %v728 = vmul.f32 %v727, %v250
        %v729 = vadd.f32 %v728, 0.0
        %s730 = sld [smem:[#allocation2 + $0x13]]
        %v731 = vstv %s730
        %v732 = vmul.f32 %v731, %v250
        %v733 = vmul.f32 %v731, %v252
        %v736 = vrot.slane %v732, 1
        %v737 = vrot.slane %v733, 1
        %v738 = vsel %vm264, %v736, %v737
        %v740 = vadd.f32 %v729, %v738
        %s741 = sld [smem:[#allocation2 + $0x14]]
        %v742 = vstv %s741
        %v743 = vmul.f32 %v742, %v250
        %v744 = vmul.f32 %v742, %v252
        %v747 = vrot.slane %v743, 2
        %v748 = vrot.slane %v744, 2
        %v749 = vsel %vm276, %v747, %v748
        %v751 = vadd.f32 %v740, %v749
        %s752 = sld [smem:[#allocation2 + $0x15]]
        %v753 = vstv %s752
        %v754 = vmul.f32 %v753, %v250
        %v755 = vmul.f32 %v753, %v251
        %758 = vrot.lane.b32.xlu0 %v754, 127
        %v759 = vpop.permute.xlu0 %758
        %760 = vrot.lane.b32.xlu0 %v755, 127
        %v761 = vpop.permute.xlu0 %760
        %v762 = vsel %vm292, %v759, %v761
        %v764 = vadd.f32 %v751, %v762
        %s765 = sld [smem:[#allocation2 + $0x16]]
        %v766 = vstv %s765
        %v767 = vmul.f32 %v766, %v250
        %v768 = vmul.f32 %v766, %v251
        %v769 = vmul.f32 %v766, %v252
        %v770 = vmul.f32 %v766, %v253
        %v775 = vrot.slane %v767, 1
        %v776 = vrot.slane %v769, 1
        %v777 = vsel %vm264, %v775, %v776
        %v778 = vrot.slane %v768, 1
        %v779 = vrot.slane %v770, 1
        %v780 = vsel %vm264, %v778, %v779
        %781 = vrot.lane.b32.xlu0 %v777, 127
        %v782 = vpop.permute.xlu0 %781
        %783 = vrot.lane.b32.xlu0 %v780, 127
        %v784 = vpop.permute.xlu0 %783
        %v785 = vsel %vm292, %v782, %v784
        %v787 = vadd.f32 %v764, %v785
        %s788 = sld [smem:[#allocation2 + $0x17]]
        %v789 = vstv %s788
        %v790 = vmul.f32 %v789, %v250
        %v791 = vmul.f32 %v789, %v251
        %v792 = vmul.f32 %v789, %v252
        %v793 = vmul.f32 %v789, %v253
        %v798 = vrot.slane %v790, 2
        %v799 = vrot.slane %v792, 2
        %v800 = vsel %vm276, %v798, %v799
        %v801 = vrot.slane %v791, 2
        %v802 = vrot.slane %v793, 2
        %v803 = vsel %vm276, %v801, %v802
        %804 = vrot.lane.b32.xlu0 %v800, 127
        %v805 = vpop.permute.xlu0 %804
        %806 = vrot.lane.b32.xlu0 %v803, 127
        %v807 = vpop.permute.xlu0 %806
        %v808 = vsel %vm292, %v805, %v807
        %v810 = vadd.f32 %v787, %v808
        %s811 = sld [smem:[#allocation2 + $0x18]]
        %v812 = vstv %s811
        %v813 = vmul.f32 %v812, %v250
        %v814 = vmul.f32 %v812, %v251
        %817 = vrot.lane.b32.xlu0 %v813, 126
        %v818 = vpop.permute.xlu0 %817
        %819 = vrot.lane.b32.xlu0 %v814, 126
        %v820 = vpop.permute.xlu0 %819
        %v821 = vsel %vm352, %v818, %v820
        %v823 = vadd.f32 %v810, %v821
        %s824 = sld [smem:[#allocation2 + $0x19]]
        %v825 = vstv %s824
        %v826 = vmul.f32 %v825, %v250
        %v827 = vmul.f32 %v825, %v251
        %v828 = vmul.f32 %v825, %v252
        %v829 = vmul.f32 %v825, %v253
        %v834 = vrot.slane %v826, 1
        %v835 = vrot.slane %v828, 1
        %v836 = vsel %vm264, %v834, %v835
        %v837 = vrot.slane %v827, 1
        %v838 = vrot.slane %v829, 1
        %v839 = vsel %vm264, %v837, %v838
        %840 = vrot.lane.b32.xlu0 %v836, 126
        %v841 = vpop.permute.xlu0 %840
        %842 = vrot.lane.b32.xlu0 %v839, 126
        %v843 = vpop.permute.xlu0 %842
        %v844 = vsel %vm352, %v841, %v843
        %v846 = vadd.f32 %v823, %v844
        %s847 = sld [smem:[#allocation2 + $0x1a]]
        %v848 = vstv %s847
        %v849 = vmul.f32 %v848, %v250
        %v850 = vmul.f32 %v848, %v251
        %v851 = vmul.f32 %v848, %v252
        %v852 = vmul.f32 %v848, %v253
        %v857 = vrot.slane %v849, 2
        %v858 = vrot.slane %v851, 2
        %v859 = vsel %vm276, %v857, %v858
        %v860 = vrot.slane %v850, 2
        %v861 = vrot.slane %v852, 2
        %v862 = vsel %vm276, %v860, %v861
        %863 = vrot.lane.b32.xlu0 %v859, 126
        %v864 = vpop.permute.xlu0 %863
        %865 = vrot.lane.b32.xlu0 %v862, 126
        %v866 = vpop.permute.xlu0 %865
        %v867 = vsel %vm352, %v864, %v866
        %v869 = vadd.f32 %v846, %v867
        %s870 = sld [smem:[#allocation4 + $0x2]]
        %v871 = vstv %s870
        %v872 = vadd.f32 %v869, %v871
        %v873 = vmax.f32 %v872, 0.0
        %v874 = vld [vmem:[%s3 + $0x100] sm:$0xff]
        %v875 = vld [vmem:[%s3 + $0x108] sm:$0xff]
        %v876 = vld [vmem:[%s3 + $0x110] sm:$0xff]
        %v877 = vld [vmem:[%s3 + $0x118] sm:$0xff]
        %v878 = vld [vmem:[%s3 + $0x120] sm:$0xff]
        %v879 = vld [vmem:[%s3 + $0x128] sm:$0xff]
        %v880 = vld [vmem:[%s3 + $0x130] sm:$0xff]
        %v881 = vld [vmem:[%s3 + $0x138] sm:$0xff]
        %v882 = vld [vmem:[%s3 + $0x140] sm:$0xff]
        %v883 = vld [vmem:[%s3 + $0x148] sm:$0xff]
        %v884 = vld [vmem:[%s3 + $0x150] sm:$0xff]
        %v885 = vld [vmem:[%s3 + $0x158] sm:$0xff]
        %v886 = vld [vmem:[%s3 + $0x160] sm:$0xff]
        %v887 = vld [vmem:[%s3 + $0x168] sm:$0xff]
        %v888 = vld [vmem:[%s3 + $0x170] sm:$0xff]
        %v889 = vld [vmem:[%s3 + $0x178] sm:$0xff]
        %890 = vmatprep.subr.mxu0 0.0
        %891 = vmatpush1.msra.mxu0 %v874
        %892 = vmatprep.subr.mxu0 0.0
        %893 = vmatpush1.msra.mxu0 %v875
        %894 = vmatprep.subr.mxu0 0.0
        %895 = vmatpush1.msra.mxu0 %v876
        %896 = vmatprep.subr.mxu0 0.0
        %897 = vmatpush1.msra.mxu0 %v877
        %898 = vmatprep.subr.mxu0 0.0
        %899 = vmatpush1.msra.mxu0 %v878
        %900 = vmatprep.subr.mxu0 0.0
        %901 = vmatpush1.msra.mxu0 %v879
        %902 = vmatprep.subr.mxu0 0.0
        %903 = vmatpush1.msra.mxu0 %v880
        %904 = vmatprep.subr.mxu0 0.0
        %905 = vmatpush1.msra.mxu0 %v881
        %906 = vmatprep.subr.mxu0 0.0
        %907 = vmatpush1.msra.mxu0 %v882
        %908 = vmatprep.subr.mxu0 0.0
        %909 = vmatpush1.msra.mxu0 %v883
        %910 = vmatprep.subr.mxu0 0.0
        %911 = vmatpush1.msra.mxu0 %v884
        %912 = vmatprep.subr.mxu0 0.0
        %913 = vmatpush1.msra.mxu0 %v885
        %914 = vmatprep.subr.mxu0 0.0
        %915 = vmatpush1.msra.mxu0 %v886
        %916 = vmatprep.subr.mxu0 0.0
        %917 = vmatpush1.msra.mxu0 %v887
        %918 = vmatprep.subr.mxu0 0.0
        %919 = vmatpush1.msra.mxu0 %v888
        %920 = vmatprep.subr.mxu0 0.0
        %921 = vmatpush1.msra.mxu0 %v889
        %922 = vmatprep.subr.mxu0 0.0
        %923 = vmatpush1.msra.mxu0 0.0
        %924 = vmatprep.subr.mxu0 0.0
        %925 = vmatpush1.msra.mxu0 0.0
        %926 = vmatprep.subr.mxu0 0.0
        %927 = vmatpush1.msra.mxu0 0.0
        %928 = vmatprep.subr.mxu0 0.0
        %929 = vmatpush1.msra.mxu0 0.0
        %930 = vmatprep.subr.mxu0 0.0
        %931 = vmatpush1.msra.mxu0 0.0
        %932 = vmatprep.subr.mxu0 0.0
        %933 = vmatpush1.msra.mxu0 0.0
        %934 = vmatprep.subr.mxu0 0.0
        %935 = vmatpush1.msra.mxu0 0.0
        %936 = vmatprep.subr.mxu0 0.0
        %937 = vmatpush1.msra.mxu0 0.0
        %938 = vmatprep.subr.mxu0 0.0
        %939 = vmatpush1.msra.mxu0 0.0
        %940 = vmatprep.subr.mxu0 0.0
        %941 = vmatpush1.msra.mxu0 0.0
        %942 = vmatprep.subr.mxu0 0.0
        %943 = vmatpush1.msra.mxu0 0.0
        %944 = vmatprep.subr.mxu0 0.0
        %945 = vmatpush1.msra.mxu0 0.0
        %946 = vmatprep.subr.mxu0 0.0
        %947 = vmatpush1.msra.mxu0 0.0
        %948 = vmatprep.subr.mxu0 0.0
        %949 = vmatpush1.msra.mxu0 0.0
        %950 = vmatprep.subr.mxu0 0.0
        %951 = vmatpush1.msra.mxu0 0.0
        %952 = vmatprep.subr.mxu0 0.0
        %953 = vmatpush1.msra.mxu0 0.0
        %954 = vmatprep.mubr.f32.mxu0 0.0
        %955 = vmatmul.mubr.f32.gmra.mrb[0].mxu0 %v873
        %v956 = vpop.f32.mrb[0].mxu0
        %v957 = vadd.f32 0.0, %v956
        %v958 = vpop.f32.mrb[0].mxu0
        %959 = vdwg.mxu0
        %v960 = vadd.f32 %v723, %v957
        %s961 = sld [smem:[#allocation2 + $0x1b]]
        %v962 = vstv %s961
        %v963 = vmul.f32 %v962, %v250
        %v964 = vadd.f32 %v963, 0.0
        %s965 = sld [smem:[#allocation2 + $0x1c]]
        %v966 = vstv %s965
        %v967 = vmul.f32 %v966, %v250
        %v968 = vmul.f32 %v966, %v252
        %v971 = vrot.slane %v967, 1
        %v972 = vrot.slane %v968, 1
        %v973 = vsel %vm264, %v971, %v972
        %v975 = vadd.f32 %v964, %v973
        %s976 = sld [smem:[#allocation2 + $0x1d]]
        %v977 = vstv %s976
        %v978 = vmul.f32 %v977, %v250
        %v979 = vmul.f32 %v977, %v252
        %v982 = vrot.slane %v978, 2
        %v983 = vrot.slane %v979, 2
        %v984 = vsel %vm276, %v982, %v983
        %v986 = vadd.f32 %v975, %v984
        %s987 = sld [smem:[#allocation2 + $0x1e]]
        %v988 = vstv %s987
        %v989 = vmul.f32 %v988, %v250
        %v990 = vmul.f32 %v988, %v251
        %993 = vrot.lane.b32.xlu0 %v989, 127
        %v994 = vpop.permute.xlu0 %993
        %995 = vrot.lane.b32.xlu0 %v990, 127
        %v996 = vpop.permute.xlu0 %995
        %v997 = vsel %vm292, %v994, %v996
        %v999 = vadd.f32 %v986, %v997
        %s1000 = sld [smem:[#allocation2 + $0x1f]]
        %v1001 = vstv %s1000
        %v1002 = vmul.f32 %v1001, %v250
        %v1003 = vmul.f32 %v1001, %v251
        %v1004 = vmul.f32 %v1001, %v252
        %v1005 = vmul.f32 %v1001, %v253
        %v1010 = vrot.slane %v1002, 1
        %v1011 = vrot.slane %v1004, 1
        %v1012 = vsel %vm264, %v1010, %v1011
        %v1013 = vrot.slane %v1003, 1
        %v1014 = vrot.slane %v1005, 1
        %v1015 = vsel %vm264, %v1013, %v1014
        %1016 = vrot.lane.b32.xlu0 %v1012, 127
        %v1017 = vpop.permute.xlu0 %1016
        %1018 = vrot.lane.b32.xlu0 %v1015, 127
        %v1019 = vpop.permute.xlu0 %1018
        %v1020 = vsel %vm292, %v1017, %v1019
        %v1022 = vadd.f32 %v999, %v1020
        %s1023 = sld [smem:[#allocation2 + $0x20]]
        %v1024 = vstv %s1023
        %v1025 = vmul.f32 %v1024, %v250
        %v1026 = vmul.f32 %v1024, %v251
        %v1027 = vmul.f32 %v1024, %v252
        %v1028 = vmul.f32 %v1024, %v253
        %v1033 = vrot.slane %v1025, 2
        %v1034 = vrot.slane %v1027, 2
        %v1035 = vsel %vm276, %v1033, %v1034
        %v1036 = vrot.slane %v1026, 2
        %v1037 = vrot.slane %v1028, 2
        %v1038 = vsel %vm276, %v1036, %v1037
        %1039 = vrot.lane.b32.xlu0 %v1035, 127
        %v1040 = vpop.permute.xlu0 %1039
        %1041 = vrot.lane.b32.xlu0 %v1038, 127
        %v1042 = vpop.permute.xlu0 %1041
        %v1043 = vsel %vm292, %v1040, %v1042
        %v1045 = vadd.f32 %v1022, %v1043
        %s1046 = sld [smem:[#allocation2 + $0x21]]
        %v1047 = vstv %s1046
        %v1048 = vmul.f32 %v1047, %v250
        %v1049 = vmul.f32 %v1047, %v251
        %1052 = vrot.lane.b32.xlu0 %v1048, 126
        %v1053 = vpop.permute.xlu0 %1052
        %1054 = vrot.lane.b32.xlu0 %v1049, 126
        %v1055 = vpop.permute.xlu0 %1054
        %v1056 = vsel %vm352, %v1053, %v1055
        %v1058 = vadd.f32 %v1045, %v1056
        %s1059 = sld [smem:[#allocation2 + $0x22]]
        %v1060 = vstv %s1059
        %v1061 = vmul.f32 %v1060, %v250
        %v1062 = vmul.f32 %v1060, %v251
        %v1063 = vmul.f32 %v1060, %v252
        %v1064 = vmul.f32 %v1060, %v253
        %v1069 = vrot.slane %v1061, 1
        %v1070 = vrot.slane %v1063, 1
        %v1071 = vsel %vm264, %v1069, %v1070
        %v1072 = vrot.slane %v1062, 1
        %v1073 = vrot.slane %v1064, 1
        %v1074 = vsel %vm264, %v1072, %v1073
        %1075 = vrot.lane.b32.xlu0 %v1071, 126
        %v1076 = vpop.permute.xlu0 %1075
        %1077 = vrot.lane.b32.xlu0 %v1074, 126
        %v1078 = vpop.permute.xlu0 %1077
        %v1079 = vsel %vm352, %v1076, %v1078
        %v1081 = vadd.f32 %v1058, %v1079
        %s1082 = sld [smem:[#allocation2 + $0x23]]
        %v1083 = vstv %s1082
        %v1084 = vmul.f32 %v1083, %v250
        %v1085 = vmul.f32 %v1083, %v251
        %v1086 = vmul.f32 %v1083, %v252
        %v1087 = vmul.f32 %v1083, %v253
        %v1092 = vrot.slane %v1084, 2
        %v1093 = vrot.slane %v1086, 2
        %v1094 = vsel %vm276, %v1092, %v1093
        %v1095 = vrot.slane %v1085, 2
        %v1096 = vrot.slane %v1087, 2
        %v1097 = vsel %vm276, %v1095, %v1096
        %1098 = vrot.lane.b32.xlu0 %v1094, 126
        %v1099 = vpop.permute.xlu0 %1098
        %1100 = vrot.lane.b32.xlu0 %v1097, 126
        %v1101 = vpop.permute.xlu0 %1100
        %v1102 = vsel %vm352, %v1099, %v1101
        %v1104 = vadd.f32 %v1081, %v1102
        %s1105 = sld [smem:[#allocation4 + $0x3]]
        %v1106 = vstv %s1105
        %v1107 = vadd.f32 %v1104, %v1106
        %v1108 = vmax.f32 %v1107, 0.0
        %v1109 = vld [vmem:[%s3 + $0x180] sm:$0xff]
        %v1110 = vld [vmem:[%s3 + $0x188] sm:$0xff]
        %v1111 = vld [vmem:[%s3 + $0x190] sm:$0xff]
        %v1112 = vld [vmem:[%s3 + $0x198] sm:$0xff]
        %v1113 = vld [vmem:[%s3 + $0x1a0] sm:$0xff]
        %v1114 = vld [vmem:[%s3 + $0x1a8] sm:$0xff]
        %v1115 = vld [vmem:[%s3 + $0x1b0] sm:$0xff]
        %v1116 = vld [vmem:[%s3 + $0x1b8] sm:$0xff]
        %v1117 = vld [vmem:[%s3 + $0x1c0] sm:$0xff]
        %v1118 = vld [vmem:[%s3 + $0x1c8] sm:$0xff]
        %v1119 = vld [vmem:[%s3 + $0x1d0] sm:$0xff]
        %v1120 = vld [vmem:[%s3 + $0x1d8] sm:$0xff]
        %v1121 = vld [vmem:[%s3 + $0x1e0] sm:$0xff]
        %v1122 = vld [vmem:[%s3 + $0x1e8] sm:$0xff]
        %v1123 = vld [vmem:[%s3 + $0x1f0] sm:$0xff]
        %v1124 = vld [vmem:[%s3 + $0x1f8] sm:$0xff]
        %1125 = vmatprep.subr.mxu0 0.0
        %1126 = vmatpush1.msra.mxu0 %v1109
        %1127 = vmatprep.subr.mxu0 0.0
        %1128 = vmatpush1.msra.mxu0 %v1110
        %1129 = vmatprep.subr.mxu0 0.0
        %1130 = vmatpush1.msra.mxu0 %v1111
        %1131 = vmatprep.subr.mxu0 0.0
        %1132 = vmatpush1.msra.mxu0 %v1112
        %1133 = vmatprep.subr.mxu0 0.0
        %1134 = vmatpush1.msra.mxu0 %v1113
        %1135 = vmatprep.subr.mxu0 0.0
        %1136 = vmatpush1.msra.mxu0 %v1114
        %1137 = vmatprep.subr.mxu0 0.0
        %1138 = vmatpush1.msra.mxu0 %v1115
        %1139 = vmatprep.subr.mxu0 0.0
        %1140 = vmatpush1.msra.mxu0 %v1116
        %1141 = vmatprep.subr.mxu0 0.0
        %1142 = vmatpush1.msra.mxu0 %v1117
        %1143 = vmatprep.subr.mxu0 0.0
        %1144 = vmatpush1.msra.mxu0 %v1118
        %1145 = vmatprep.subr.mxu0 0.0
        %1146 = vmatpush1.msra.mxu0 %v1119
        %1147 = vmatprep.subr.mxu0 0.0
        %1148 = vmatpush1.msra.mxu0 %v1120
        %1149 = vmatprep.subr.mxu0 0.0
        %1150 = vmatpush1.msra.mxu0 %v1121
        %1151 = vmatprep.subr.mxu0 0.0
        %1152 = vmatpush1.msra.mxu0 %v1122
        %1153 = vmatprep.subr.mxu0 0.0
        %1154 = vmatpush1.msra.mxu0 %v1123
        %1155 = vmatprep.subr.mxu0 0.0
        %1156 = vmatpush1.msra.mxu0 %v1124
        %1157 = vmatprep.subr.mxu0 0.0
        %1158 = vmatpush1.msra.mxu0 0.0
        %1159 = vmatprep.subr.mxu0 0.0
        %1160 = vmatpush1.msra.mxu0 0.0
        %1161 = vmatprep.subr.mxu0 0.0
        %1162 = vmatpush1.msra.mxu0 0.0
        %1163 = vmatprep.subr.mxu0 0.0
        %1164 = vmatpush1.msra.mxu0 0.0
        %1165 = vmatprep.subr.mxu0 0.0
        %1166 = vmatpush1.msra.mxu0 0.0
        %1167 = vmatprep.subr.mxu0 0.0
        %1168 = vmatpush1.msra.mxu0 0.0
        %1169 = vmatprep.subr.mxu0 0.0
        %1170 = vmatpush1.msra.mxu0 0.0
        %1171 = vmatprep.subr.mxu0 0.0
        %1172 = vmatpush1.msra.mxu0 0.0
        %1173 = vmatprep.subr.mxu0 0.0
        %1174 = vmatpush1.msra.mxu0 0.0
        %1175 = vmatprep.subr.mxu0 0.0
        %1176 = vmatpush1.msra.mxu0 0.0
        %1177 = vmatprep.subr.mxu0 0.0
        %1178 = vmatpush1.msra.mxu0 0.0
        %1179 = vmatprep.subr.mxu0 0.0
        %1180 = vmatpush1.msra.mxu0 0.0
        %1181 = vmatprep.subr.mxu0 0.0
        %1182 = vmatpush1.msra.mxu0 0.0
        %1183 = vmatprep.subr.mxu0 0.0
        %1184 = vmatpush1.msra.mxu0 0.0
        %1185 = vmatprep.subr.mxu0 0.0
        %1186 = vmatpush1.msra.mxu0 0.0
        %1187 = vmatprep.subr.mxu0 0.0
        %1188 = vmatpush1.msra.mxu0 0.0
        %1189 = vmatprep.mubr.f32.mxu0 0.0
        %1190 = vmatmul.mubr.f32.gmra.mrb[0].mxu0 %v1108
        %v1191 = vpop.f32.mrb[0].mxu0
        %v1192 = vadd.f32 0.0, %v1191
        %v1193 = vpop.f32.mrb[0].mxu0
        %1194 = vdwg.mxu0
        %v1195 = vadd.f32 %v960, %v1192
        %s1196 = sld [smem:[#allocation2 + $0x24]]
        %v1197 = vstv %s1196
        %v1198 = vmul.f32 %v1197, %v250
        %v1199 = vadd.f32 %v1198, 0.0
        %s1200 = sld [smem:[#allocation2 + $0x25]]
        %v1201 = vstv %s1200
        %v1202 = vmul.f32 %v1201, %v250
        %v1203 = vmul.f32 %v1201, %v252
        %v1206 = vrot.slane %v1202, 1
        %v1207 = vrot.slane %v1203, 1
        %v1208 = vsel %vm264, %v1206, %v1207
        %v1210 = vadd.f32 %v1199, %v1208
        %s1211 = sld [smem:[#allocation2 + $0x26]]
        %v1212 = vstv %s1211
        %v1213 = vmul.f32 %v1212, %v250
        %v1214 = vmul.f32 %v1212, %v252
        %v1217 = vrot.slane %v1213, 2
        %v1218 = vrot.slane %v1214, 2
        %v1219 = vsel %vm276, %v1217, %v1218
        %v1221 = vadd.f32 %v1210, %v1219
        %s1222 = sld [smem:[#allocation2 + $0x27]]
        %v1223 = vstv %s1222
        %v1224 = vmul.f32 %v1223, %v250
        %v1225 = vmul.f32 %v1223, %v251
        %1228 = vrot.lane.b32.xlu0 %v1224, 127
        %v1229 = vpop.permute.xlu0 %1228
        %1230 = vrot.lane.b32.xlu0 %v1225, 127
        %v1231 = vpop.permute.xlu0 %1230
        %v1232 = vsel %vm292, %v1229, %v1231
        %v1234 = vadd.f32 %v1221, %v1232
        %s1235 = sld [smem:[#allocation2 + $0x28]]
        %v1236 = vstv %s1235
        %v1237 = vmul.f32 %v1236, %v250
        %v1238 = vmul.f32 %v1236, %v251
        %v1239 = vmul.f32 %v1236, %v252
        %v1240 = vmul.f32 %v1236, %v253
        %v1245 = vrot.slane %v1237, 1
        %v1246 = vrot.slane %v1239, 1
        %v1247 = vsel %vm264, %v1245, %v1246
        %v1248 = vrot.slane %v1238, 1
        %v1249 = vrot.slane %v1240, 1
        %v1250 = vsel %vm264, %v1248, %v1249
        %1251 = vrot.lane.b32.xlu0 %v1247, 127
        %v1252 = vpop.permute.xlu0 %1251
        %1253 = vrot.lane.b32.xlu0 %v1250, 127
        %v1254 = vpop.permute.xlu0 %1253
        %v1255 = vsel %vm292, %v1252, %v1254
        %v1257 = vadd.f32 %v1234, %v1255
        %s1258 = sld [smem:[#allocation2 + $0x29]]
        %v1259 = vstv %s1258
        %v1260 = vmul.f32 %v1259, %v250
        %v1261 = vmul.f32 %v1259, %v251
        %v1262 = vmul.f32 %v1259, %v252
        %v1263 = vmul.f32 %v1259, %v253
        %v1268 = vrot.slane %v1260, 2
        %v1269 = vrot.slane %v1262, 2
        %v1270 = vsel %vm276, %v1268, %v1269
        %v1271 = vrot.slane %v1261, 2
        %v1272 = vrot.slane %v1263, 2
        %v1273 = vsel %vm276, %v1271, %v1272
        %1274 = vrot.lane.b32.xlu0 %v1270, 127
        %v1275 = vpop.permute.xlu0 %1274
        %1276 = vrot.lane.b32.xlu0 %v1273, 127
        %v1277 = vpop.permute.xlu0 %1276
        %v1278 = vsel %vm292, %v1275, %v1277
        %v1280 = vadd.f32 %v1257, %v1278
        %s1281 = sld [smem:[#allocation2 + $0x2a]]
        %v1282 = vstv %s1281
        %v1283 = vmul.f32 %v1282, %v250
        %v1284 = vmul.f32 %v1282, %v251
        %1287 = vrot.lane.b32.xlu0 %v1283, 126
        %v1288 = vpop.permute.xlu0 %1287
        %1289 = vrot.lane.b32.xlu0 %v1284, 126
        %v1290 = vpop.permute.xlu0 %1289
        %v1291 = vsel %vm352, %v1288, %v1290
        %v1293 = vadd.f32 %v1280, %v1291
        %s1294 = sld [smem:[#allocation2 + $0x2b]]
        %v1295 = vstv %s1294
        %v1296 = vmul.f32 %v1295, %v250
        %v1297 = vmul.f32 %v1295, %v251
        %v1298 = vmul.f32 %v1295, %v252
        %v1299 = vmul.f32 %v1295, %v253
        %v1304 = vrot.slane %v1296, 1
        %v1305 = vrot.slane %v1298, 1
        %v1306 = vsel %vm264, %v1304, %v1305
        %v1307 = vrot.slane %v1297, 1
        %v1308 = vrot.slane %v1299, 1
        %v1309 = vsel %vm264, %v1307, %v1308
        %1310 = vrot.lane.b32.xlu0 %v1306, 126
        %v1311 = vpop.permute.xlu0 %1310
        %1312 = vrot.lane.b32.xlu0 %v1309, 126
        %v1313 = vpop.permute.xlu0 %1312
        %v1314 = vsel %vm352, %v1311, %v1313
        %v1316 = vadd.f32 %v1293, %v1314
        %s1317 = sld [smem:[#allocation2 + $0x2c]]
        %v1318 = vstv %s1317
        %v1319 = vmul.f32 %v1318, %v250
        %v1320 = vmul.f32 %v1318, %v251
        %v1321 = vmul.f32 %v1318, %v252
        %v1322 = vmul.f32 %v1318, %v253
        %v1327 = vrot.slane %v1319, 2
        %v1328 = vrot.slane %v1321, 2
        %v1329 = vsel %vm276, %v1327, %v1328
        %v1330 = vrot.slane %v1320, 2
        %v1331 = vrot.slane %v1322, 2
        %v1332 = vsel %vm276, %v1330, %v1331
        %1333 = vrot.lane.b32.xlu0 %v1329, 126
        %v1334 = vpop.permute.xlu0 %1333
        %1335 = vrot.lane.b32.xlu0 %v1332, 126
        %v1336 = vpop.permute.xlu0 %1335
        %v1337 = vsel %vm352, %v1334, %v1336
        %v1339 = vadd.f32 %v1316, %v1337
        %s1340 = sld [smem:[#allocation4 + $0x4]]
        %v1341 = vstv %s1340
        %v1342 = vadd.f32 %v1339, %v1341
        %v1343 = vmax.f32 %v1342, 0.0
        %v1344 = vld [vmem:[%s3 + $0x200] sm:$0xff]
        %v1345 = vld [vmem:[%s3 + $0x208] sm:$0xff]
        %v1346 = vld [vmem:[%s3 + $0x210] sm:$0xff]
        %v1347 = vld [vmem:[%s3 + $0x218] sm:$0xff]
        %v1348 = vld [vmem:[%s3 + $0x220] sm:$0xff]
        %v1349 = vld [vmem:[%s3 + $0x228] sm:$0xff]
        %v1350 = vld [vmem:[%s3 + $0x230] sm:$0xff]
        %v1351 = vld [vmem:[%s3 + $0x238] sm:$0xff]
        %v1352 = vld [vmem:[%s3 + $0x240] sm:$0xff]
        %v1353 = vld [vmem:[%s3 + $0x248] sm:$0xff]
        %v1354 = vld [vmem:[%s3 + $0x250] sm:$0xff]
        %v1355 = vld [vmem:[%s3 + $0x258] sm:$0xff]
        %v1356 = vld [vmem:[%s3 + $0x260] sm:$0xff]
        %v1357 = vld [vmem:[%s3 + $0x268] sm:$0xff]
        %v1358 = vld [vmem:[%s3 + $0x270] sm:$0xff]
        %v1359 = vld [vmem:[%s3 + $0x278] sm:$0xff]
        %1360 = vmatprep.subr.mxu0 0.0
        %1361 = vmatpush1.msra.mxu0 %v1344
        %1362 = vmatprep.subr.mxu0 0.0
        %1363 = vmatpush1.msra.mxu0 %v1345
        %1364 = vmatprep.subr.mxu0 0.0
        %1365 = vmatpush1.msra.mxu0 %v1346
        %1366 = vmatprep.subr.mxu0 0.0
        %1367 = vmatpush1.msra.mxu0 %v1347
        %1368 = vmatprep.subr.mxu0 0.0
        %1369 = vmatpush1.msra.mxu0 %v1348
        %1370 = vmatprep.subr.mxu0 0.0
        %1371 = vmatpush1.msra.mxu0 %v1349
        %1372 = vmatprep.subr.mxu0 0.0
        %1373 = vmatpush1.msra.mxu0 %v1350
        %1374 = vmatprep.subr.mxu0 0.0
        %1375 = vmatpush1.msra.mxu0 %v1351
        %1376 = vmatprep.subr.mxu0 0.0
        %1377 = vmatpush1.msra.mxu0 %v1352
        %1378 = vmatprep.subr.mxu0 0.0
        %1379 = vmatpush1.msra.mxu0 %v1353
        %1380 = vmatprep.subr.mxu0 0.0
        %1381 = vmatpush1.msra.mxu0 %v1354
        %1382 = vmatprep.subr.mxu0 0.0
        %1383 = vmatpush1.msra.mxu0 %v1355
        %1384 = vmatprep.subr.mxu0 0.0
        %1385 = vmatpush1.msra.mxu0 %v1356
        %1386 = vmatprep.subr.mxu0 0.0
        %1387 = vmatpush1.msra.mxu0 %v1357
        %1388 = vmatprep.subr.mxu0 0.0
        %1389 = vmatpush1.msra.mxu0 %v1358
        %1390 = vmatprep.subr.mxu0 0.0
        %1391 = vmatpush1.msra.mxu0 %v1359
        %1392 = vmatprep.subr.mxu0 0.0
        %1393 = vmatpush1.msra.mxu0 0.0
        %1394 = vmatprep.subr.mxu0 0.0
        %1395 = vmatpush1.msra.mxu0 0.0
        %1396 = vmatprep.subr.mxu0 0.0
        %1397 = vmatpush1.msra.mxu0 0.0
        %1398 = vmatprep.subr.mxu0 0.0
        %1399 = vmatpush1.msra.mxu0 0.0
        %1400 = vmatprep.subr.mxu0 0.0
        %1401 = vmatpush1.msra.mxu0 0.0
        %1402 = vmatprep.subr.mxu0 0.0
        %1403 = vmatpush1.msra.mxu0 0.0
        %1404 = vmatprep.subr.mxu0 0.0
        %1405 = vmatpush1.msra.mxu0 0.0
        %1406 = vmatprep.subr.mxu0 0.0
        %1407 = vmatpush1.msra.mxu0 0.0
        %1408 = vmatprep.subr.mxu0 0.0
        %1409 = vmatpush1.msra.mxu0 0.0
        %1410 = vmatprep.subr.mxu0 0.0
        %1411 = vmatpush1.msra.mxu0 0.0
        %1412 = vmatprep.subr.mxu0 0.0
        %1413 = vmatpush1.msra.mxu0 0.0
        %1414 = vmatprep.subr.mxu0 0.0
        %1415 = vmatpush1.msra.mxu0 0.0
        %1416 = vmatprep.subr.mxu0 0.0
        %1417 = vmatpush1.msra.mxu0 0.0
        %1418 = vmatprep.subr.mxu0 0.0
        %1419 = vmatpush1.msra.mxu0 0.0
        %1420 = vmatprep.subr.mxu0 0.0
        %1421 = vmatpush1.msra.mxu0 0.0
        %1422 = vmatprep.subr.mxu0 0.0
        %1423 = vmatpush1.msra.mxu0 0.0
        %1424 = vmatprep.mubr.f32.mxu0 0.0
        %1425 = vmatmul.mubr.f32.gmra.mrb[0].mxu0 %v1343
        %v1426 = vpop.f32.mrb[0].mxu0
        %v1427 = vadd.f32 0.0, %v1426
        %v1428 = vpop.f32.mrb[0].mxu0
        %1429 = vdwg.mxu0
        %v1430 = vadd.f32 %v1195, %v1427
        %s1431 = sld [smem:[#allocation2 + $0x2d]]
        %v1432 = vstv %s1431
        %v1433 = vmul.f32 %v1432, %v250
        %v1434 = vadd.f32 %v1433, 0.0
        %s1435 = sld [smem:[#allocation2 + $0x2e]]
        %v1436 = vstv %s1435
        %v1437 = vmul.f32 %v1436, %v250
        %v1438 = vmul.f32 %v1436, %v252
        %v1441 = vrot.slane %v1437, 1
        %v1442 = vrot.slane %v1438, 1
        %v1443 = vsel %vm264, %v1441, %v1442
        %v1445 = vadd.f32 %v1434, %v1443
        %s1446 = sld [smem:[#allocation2 + $0x2f]]
        %v1447 = vstv %s1446
        %v1448 = vmul.f32 %v1447, %v250
        %v1449 = vmul.f32 %v1447, %v252
        %v1452 = vrot.slane %v1448, 2
        %v1453 = vrot.slane %v1449, 2
        %v1454 = vsel %vm276, %v1452, %v1453
        %v1456 = vadd.f32 %v1445, %v1454
        %s1457 = sld [smem:[#allocation2 + $0x30]]
        %v1458 = vstv %s1457
        %v1459 = vmul.f32 %v1458, %v250
        %v1460 = vmul.f32 %v1458, %v251
        %1463 = vrot.lane.b32.xlu0 %v1459, 127
        %v1464 = vpop.permute.xlu0 %1463
        %1465 = vrot.lane.b32.xlu0 %v1460, 127
        %v1466 = vpop.permute.xlu0 %1465
        %v1467 = vsel %vm292, %v1464, %v1466
        %v1469 = vadd.f32 %v1456, %v1467
        %s1470 = sld [smem:[#allocation2 + $0x31]]
        %v1471 = vstv %s1470
        %v1472 = vmul.f32 %v1471, %v250
        %v1473 = vmul.f32 %v1471, %v251
        %v1474 = vmul.f32 %v1471, %v252
        %v1475 = vmul.f32 %v1471, %v253
        %v1480 = vrot.slane %v1472, 1
        %v1481 = vrot.slane %v1474, 1
        %v1482 = vsel %vm264, %v1480, %v1481
        %v1483 = vrot.slane %v1473, 1
        %v1484 = vrot.slane %v1475, 1
        %v1485 = vsel %vm264, %v1483, %v1484
        %1486 = vrot.lane.b32.xlu0 %v1482, 127
        %v1487 = vpop.permute.xlu0 %1486
        %1488 = vrot.lane.b32.xlu0 %v1485, 127
        %v1489 = vpop.permute.xlu0 %1488
        %v1490 = vsel %vm292, %v1487, %v1489
        %v1492 = vadd.f32 %v1469, %v1490
        %s1493 = sld [smem:[#allocation2 + $0x32]]
        %v1494 = vstv %s1493
        %v1495 = vmul.f32 %v1494, %v250
        %v1496 = vmul.f32 %v1494, %v251
        %v1497 = vmul.f32 %v1494, %v252
        %v1498 = vmul.f32 %v1494, %v253
        %v1503 = vrot.slane %v1495, 2
        %v1504 = vrot.slane %v1497, 2
        %v1505 = vsel %vm276, %v1503, %v1504
        %v1506 = vrot.slane %v1496, 2
        %v1507 = vrot.slane %v1498, 2
        %v1508 = vsel %vm276, %v1506, %v1507
        %1509 = vrot.lane.b32.xlu0 %v1505, 127
        %v1510 = vpop.permute.xlu0 %1509
        %1511 = vrot.lane.b32.xlu0 %v1508, 127
        %v1512 = vpop.permute.xlu0 %1511
        %v1513 = vsel %vm292, %v1510, %v1512
        %v1515 = vadd.f32 %v1492, %v1513
        %s1516 = sld [smem:[#allocation2 + $0x33]]
        %v1517 = vstv %s1516
        %v1518 = vmul.f32 %v1517, %v250
        %v1519 = vmul.f32 %v1517, %v251
        %1522 = vrot.lane.b32.xlu0 %v1518, 126
        %v1523 = vpop.permute.xlu0 %1522
        %1524 = vrot.lane.b32.xlu0 %v1519, 126
        %v1525 = vpop.permute.xlu0 %1524
        %v1526 = vsel %vm352, %v1523, %v1525
        %v1528 = vadd.f32 %v1515, %v1526
        %s1529 = sld [smem:[#allocation2 + $0x34]]
        %v1530 = vstv %s1529
        %v1531 = vmul.f32 %v1530, %v250
        %v1532 = vmul.f32 %v1530, %v251
        %v1533 = vmul.f32 %v1530, %v252
        %v1534 = vmul.f32 %v1530, %v253
        %v1539 = vrot.slane %v1531, 1
        %v1540 = vrot.slane %v1533, 1
        %v1541 = vsel %vm264, %v1539, %v1540
        %v1542 = vrot.slane %v1532, 1
        %v1543 = vrot.slane %v1534, 1
        %v1544 = vsel %vm264, %v1542, %v1543
        %1545 = vrot.lane.b32.xlu0 %v1541, 126
        %v1546 = vpop.permute.xlu0 %1545
        %1547 = vrot.lane.b32.xlu0 %v1544, 126
        %v1548 = vpop.permute.xlu0 %1547
        %v1549 = vsel %vm352, %v1546, %v1548
        %v1551 = vadd.f32 %v1528, %v1549
        %s1552 = sld [smem:[#allocation2 + $0x35]]
        %v1553 = vstv %s1552
        %v1554 = vmul.f32 %v1553, %v250
        %v1555 = vmul.f32 %v1553, %v251
        %v1556 = vmul.f32 %v1553, %v252
        %v1557 = vmul.f32 %v1553, %v253
        %v1562 = vrot.slane %v1554, 2
        %v1563 = vrot.slane %v1556, 2
        %v1564 = vsel %vm276, %v1562, %v1563
        %v1565 = vrot.slane %v1555, 2
        %v1566 = vrot.slane %v1557, 2
        %v1567 = vsel %vm276, %v1565, %v1566
        %1568 = vrot.lane.b32.xlu0 %v1564, 126
        %v1569 = vpop.permute.xlu0 %1568
        %1570 = vrot.lane.b32.xlu0 %v1567, 126
        %v1571 = vpop.permute.xlu0 %1570
        %v1572 = vsel %vm352, %v1569, %v1571
        %v1574 = vadd.f32 %v1551, %v1572
        %s1575 = sld [smem:[#allocation4 + $0x5]]
        %v1576 = vstv %s1575
        %v1577 = vadd.f32 %v1574, %v1576
        %v1578 = vmax.f32 %v1577, 0.0
        %v1579 = vld [vmem:[%s3 + $0x280] sm:$0xff]
        %v1580 = vld [vmem:[%s3 + $0x288] sm:$0xff]
        %v1581 = vld [vmem:[%s3 + $0x290] sm:$0xff]
        %v1582 = vld [vmem:[%s3 + $0x298] sm:$0xff]
        %v1583 = vld [vmem:[%s3 + $0x2a0] sm:$0xff]
        %v1584 = vld [vmem:[%s3 + $0x2a8] sm:$0xff]
        %v1585 = vld [vmem:[%s3 + $0x2b0] sm:$0xff]
        %v1586 = vld [vmem:[%s3 + $0x2b8] sm:$0xff]
        %v1587 = vld [vmem:[%s3 + $0x2c0] sm:$0xff]
        %v1588 = vld [vmem:[%s3 + $0x2c8] sm:$0xff]
        %v1589 = vld [vmem:[%s3 + $0x2d0] sm:$0xff]
        %v1590 = vld [vmem:[%s3 + $0x2d8] sm:$0xff]
        %v1591 = vld [vmem:[%s3 + $0x2e0] sm:$0xff]
        %v1592 = vld [vmem:[%s3 + $0x2e8] sm:$0xff]
        %v1593 = vld [vmem:[%s3 + $0x2f0] sm:$0xff]
        %v1594 = vld [vmem:[%s3 + $0x2f8] sm:$0xff]
        %1595 = vmatprep.subr.mxu0 0.0
        %1596 = vmatpush1.msra.mxu0 %v1579
        %1597 = vmatprep.subr.mxu0 0.0
        %1598 = vmatpush1.msra.mxu0 %v1580
        %1599 = vmatprep.subr.mxu0 0.0
        %1600 = vmatpush1.msra.mxu0 %v1581
        %1601 = vmatprep.subr.mxu0 0.0
        %1602 = vmatpush1.msra.mxu0 %v1582
        %1603 = vmatprep.subr.mxu0 0.0
        %1604 = vmatpush1.msra.mxu0 %v1583
        %1605 = vmatprep.subr.mxu0 0.0
        %1606 = vmatpush1.msra.mxu0 %v1584
        %1607 = vmatprep.subr.mxu0 0.0
        %1608 = vmatpush1.msra.mxu0 %v1585
        %1609 = vmatprep.subr.mxu0 0.0
        %1610 = vmatpush1.msra.mxu0 %v1586
        %1611 = vmatprep.subr.mxu0 0.0
        %1612 = vmatpush1.msra.mxu0 %v1587
        %1613 = vmatprep.subr.mxu0 0.0
        %1614 = vmatpush1.msra.mxu0 %v1588
        %1615 = vmatprep.subr.mxu0 0.0
        %1616 = vmatpush1.msra.mxu0 %v1589
        %1617 = vmatprep.subr.mxu0 0.0
        %1618 = vmatpush1.msra.mxu0 %v1590
        %1619 = vmatprep.subr.mxu0 0.0
        %1620 = vmatpush1.msra.mxu0 %v1591
        %1621 = vmatprep.subr.mxu0 0.0
        %1622 = vmatpush1.msra.mxu0 %v1592
        %1623 = vmatprep.subr.mxu0 0.0
        %1624 = vmatpush1.msra.mxu0 %v1593
        %1625 = vmatprep.subr.mxu0 0.0
        %1626 = vmatpush1.msra.mxu0 %v1594
        %1627 = vmatprep.subr.mxu0 0.0
        %1628 = vmatpush1.msra.mxu0 0.0
        %1629 = vmatprep.subr.mxu0 0.0
        %1630 = vmatpush1.msra.mxu0 0.0
        %1631 = vmatprep.subr.mxu0 0.0
        %1632 = vmatpush1.msra.mxu0 0.0
        %1633 = vmatprep.subr.mxu0 0.0
        %1634 = vmatpush1.msra.mxu0 0.0
        %1635 = vmatprep.subr.mxu0 0.0
        %1636 = vmatpush1.msra.mxu0 0.0
        %1637 = vmatprep.subr.mxu0 0.0
        %1638 = vmatpush1.msra.mxu0 0.0
        %1639 = vmatprep.subr.mxu0 0.0
        %1640 = vmatpush1.msra.mxu0 0.0
        %1641 = vmatprep.subr.mxu0 0.0
        %1642 = vmatpush1.msra.mxu0 0.0
        %1643 = vmatprep.subr.mxu0 0.0
        %1644 = vmatpush1.msra.mxu0 0.0
        %1645 = vmatprep.subr.mxu0 0.0
        %1646 = vmatpush1.msra.mxu0 0.0
        %1647 = vmatprep.subr.mxu0 0.0
        %1648 = vmatpush1.msra.mxu0 0.0
        %1649 = vmatprep.subr.mxu0 0.0
        %1650 = vmatpush1.msra.mxu0 0.0
        %1651 = vmatprep.subr.mxu0 0.0
        %1652 = vmatpush1.msra.mxu0 0.0
        %1653 = vmatprep.subr.mxu0 0.0
        %1654 = vmatpush1.msra.mxu0 0.0
        %1655 = vmatprep.subr.mxu0 0.0
        %1656 = vmatpush1.msra.mxu0 0.0
        %1657 = vmatprep.subr.mxu0 0.0
        %1658 = vmatpush1.msra.mxu0 0.0
        %1659 = vmatprep.mubr.f32.mxu0 0.0
        %1660 = vmatmul.mubr.f32.gmra.mrb[0].mxu0 %v1578
        %v1661 = vpop.f32.mrb[0].mxu0
        %v1662 = vadd.f32 0.0, %v1661
        %v1663 = vpop.f32.mrb[0].mxu0
        %1664 = vdwg.mxu0
        %v1665 = vadd.f32 %v1430, %v1662
        %s1666 = sld [smem:[#allocation2 + $0x36]]
        %v1667 = vstv %s1666
        %v1668 = vmul.f32 %v1667, %v250
        %v1669 = vadd.f32 %v1668, 0.0
        %s1670 = sld [smem:[#allocation2 + $0x37]]
        %v1671 = vstv %s1670
        %v1672 = vmul.f32 %v1671, %v250
        %v1673 = vmul.f32 %v1671, %v252
        %v1676 = vrot.slane %v1672, 1
        %v1677 = vrot.slane %v1673, 1
        %v1678 = vsel %vm264, %v1676, %v1677
        %v1680 = vadd.f32 %v1669, %v1678
        %s1681 = sld [smem:[#allocation2 + $0x38]]
        %v1682 = vstv %s1681
        %v1683 = vmul.f32 %v1682, %v250
        %v1684 = vmul.f32 %v1682, %v252
        %v1687 = vrot.slane %v1683, 2
        %v1688 = vrot.slane %v1684, 2
        %v1689 = vsel %vm276, %v1687, %v1688
        %v1691 = vadd.f32 %v1680, %v1689
        %s1692 = sld [smem:[#allocation2 + $0x39]]
        %v1693 = vstv %s1692
        %v1694 = vmul.f32 %v1693, %v250
        %v1695 = vmul.f32 %v1693, %v251
        %1698 = vrot.lane.b32.xlu0 %v1694, 127
        %v1699 = vpop.permute.xlu0 %1698
        %1700 = vrot.lane.b32.xlu0 %v1695, 127
        %v1701 = vpop.permute.xlu0 %1700
        %v1702 = vsel %vm292, %v1699, %v1701
        %v1704 = vadd.f32 %v1691, %v1702
        %s1705 = sld [smem:[#allocation2 + $0x3a]]
        %v1706 = vstv %s1705
        %v1707 = vmul.f32 %v1706, %v250
        %v1708 = vmul.f32 %v1706, %v251
        %v1709 = vmul.f32 %v1706, %v252
        %v1710 = vmul.f32 %v1706, %v253
        %v1715 = vrot.slane %v1707, 1
        %v1716 = vrot.slane %v1709, 1
        %v1717 = vsel %vm264, %v1715, %v1716
        %v1718 = vrot.slane %v1708, 1
        %v1719 = vrot.slane %v1710, 1
        %v1720 = vsel %vm264, %v1718, %v1719
        %1721 = vrot.lane.b32.xlu0 %v1717, 127
        %v1722 = vpop.permute.xlu0 %1721
        %1723 = vrot.lane.b32.xlu0 %v1720, 127
        %v1724 = vpop.permute.xlu0 %1723
        %v1725 = vsel %vm292, %v1722, %v1724
        %v1727 = vadd.f32 %v1704, %v1725
        %s1728 = sld [smem:[#allocation2 + $0x3b]]
        %v1729 = vstv %s1728
        %v1730 = vmul.f32 %v1729, %v250
        %v1731 = vmul.f32 %v1729, %v251
        %v1732 = vmul.f32 %v1729, %v252
        %v1733 = vmul.f32 %v1729, %v253
        %v1738 = vrot.slane %v1730, 2
        %v1739 = vrot.slane %v1732, 2
        %v1740 = vsel %vm276, %v1738, %v1739
        %v1741 = vrot.slane %v1731, 2
        %v1742 = vrot.slane %v1733, 2
        %v1743 = vsel %vm276, %v1741, %v1742
        %1744 = vrot.lane.b32.xlu0 %v1740, 127
        %v1745 = vpop.permute.xlu0 %1744
        %1746 = vrot.lane.b32.xlu0 %v1743, 127
        %v1747 = vpop.permute.xlu0 %1746
        %v1748 = vsel %vm292, %v1745, %v1747
        %v1750 = vadd.f32 %v1727, %v1748
        %s1751 = sld [smem:[#allocation2 + $0x3c]]
        %v1752 = vstv %s1751
        %v1753 = vmul.f32 %v1752, %v250
        %v1754 = vmul.f32 %v1752, %v251
        %1757 = vrot.lane.b32.xlu0 %v1753, 126
        %v1758 = vpop.permute.xlu0 %1757
        %1759 = vrot.lane.b32.xlu0 %v1754, 126
        %v1760 = vpop.permute.xlu0 %1759
        %v1761 = vsel %vm352, %v1758, %v1760
        %v1763 = vadd.f32 %v1750, %v1761
        %s1764 = sld [smem:[#allocation2 + $0x3d]]
        %v1765 = vstv %s1764
        %v1766 = vmul.f32 %v1765, %v250
        %v1767 = vmul.f32 %v1765, %v251
        %v1768 = vmul.f32 %v1765, %v252
        %v1769 = vmul.f32 %v1765, %v253
        %v1774 = vrot.slane %v1766, 1
        %v1775 = vrot.slane %v1768, 1
        %v1776 = vsel %vm264, %v1774, %v1775
        %v1777 = vrot.slane %v1767, 1
        %v1778 = vrot.slane %v1769, 1
        %v1779 = vsel %vm264, %v1777, %v1778
        %1780 = vrot.lane.b32.xlu0 %v1776, 126
        %v1781 = vpop.permute.xlu0 %1780
        %1782 = vrot.lane.b32.xlu0 %v1779, 126
        %v1783 = vpop.permute.xlu0 %1782
        %v1784 = vsel %vm352, %v1781, %v1783
        %v1786 = vadd.f32 %v1763, %v1784
        %s1787 = sld [smem:[#allocation2 + $0x3e]]
        %v1788 = vstv %s1787
        %v1789 = vmul.f32 %v1788, %v250
        %v1790 = vmul.f32 %v1788, %v251
        %v1791 = vmul.f32 %v1788, %v252
        %v1792 = vmul.f32 %v1788, %v253
        %v1797 = vrot.slane %v1789, 2
        %v1798 = vrot.slane %v1791, 2
        %v1799 = vsel %vm276, %v1797, %v1798
        %v1800 = vrot.slane %v1790, 2
        %v1801 = vrot.slane %v1792, 2
        %v1802 = vsel %vm276, %v1800, %v1801
        %1803 = vrot.lane.b32.xlu0 %v1799, 126
        %v1804 = vpop.permute.xlu0 %1803
        %1805 = vrot.lane.b32.xlu0 %v1802, 126
        %v1806 = vpop.permute.xlu0 %1805
        %v1807 = vsel %vm352, %v1804, %v1806
        %v1809 = vadd.f32 %v1786, %v1807
        %s1810 = sld [smem:[#allocation4 + $0x6]]
        %v1811 = vstv %s1810
        %v1812 = vadd.f32 %v1809, %v1811
        %v1813 = vmax.f32 %v1812, 0.0
        %v1814 = vld [vmem:[%s3 + $0x300] sm:$0xff]
        %v1815 = vld [vmem:[%s3 + $0x308] sm:$0xff]
        %v1816 = vld [vmem:[%s3 + $0x310] sm:$0xff]
        %v1817 = vld [vmem:[%s3 + $0x318] sm:$0xff]
        %v1818 = vld [vmem:[%s3 + $0x320] sm:$0xff]
        %v1819 = vld [vmem:[%s3 + $0x328] sm:$0xff]
        %v1820 = vld [vmem:[%s3 + $0x330] sm:$0xff]
        %v1821 = vld [vmem:[%s3 + $0x338] sm:$0xff]
        %v1822 = vld [vmem:[%s3 + $0x340] sm:$0xff]
        %v1823 = vld [vmem:[%s3 + $0x348] sm:$0xff]
        %v1824 = vld [vmem:[%s3 + $0x350] sm:$0xff]
        %v1825 = vld [vmem:[%s3 + $0x358] sm:$0xff]
        %v1826 = vld [vmem:[%s3 + $0x360] sm:$0xff]
        %v1827 = vld [vmem:[%s3 + $0x368] sm:$0xff]
        %v1828 = vld [vmem:[%s3 + $0x370] sm:$0xff]
        %v1829 = vld [vmem:[%s3 + $0x378] sm:$0xff]
        %1830 = vmatprep.subr.mxu0 0.0
        %1831 = vmatpush1.msra.mxu0 %v1814
        %1832 = vmatprep.subr.mxu0 0.0
        %1833 = vmatpush1.msra.mxu0 %v1815
        %1834 = vmatprep.subr.mxu0 0.0
        %1835 = vmatpush1.msra.mxu0 %v1816
        %1836 = vmatprep.subr.mxu0 0.0
        %1837 = vmatpush1.msra.mxu0 %v1817
        %1838 = vmatprep.subr.mxu0 0.0
        %1839 = vmatpush1.msra.mxu0 %v1818
        %1840 = vmatprep.subr.mxu0 0.0
        %1841 = vmatpush1.msra.mxu0 %v1819
        %1842 = vmatprep.subr.mxu0 0.0
        %1843 = vmatpush1.msra.mxu0 %v1820
        %1844 = vmatprep.subr.mxu0 0.0
        %1845 = vmatpush1.msra.mxu0 %v1821
        %1846 = vmatprep.subr.mxu0 0.0
        %1847 = vmatpush1.msra.mxu0 %v1822
        %1848 = vmatprep.subr.mxu0 0.0
        %1849 = vmatpush1.msra.mxu0 %v1823
        %1850 = vmatprep.subr.mxu0 0.0
        %1851 = vmatpush1.msra.mxu0 %v1824
        %1852 = vmatprep.subr.mxu0 0.0
        %1853 = vmatpush1.msra.mxu0 %v1825
        %1854 = vmatprep.subr.mxu0 0.0
        %1855 = vmatpush1.msra.mxu0 %v1826
        %1856 = vmatprep.subr.mxu0 0.0
        %1857 = vmatpush1.msra.mxu0 %v1827
        %1858 = vmatprep.subr.mxu0 0.0
        %1859 = vmatpush1.msra.mxu0 %v1828
        %1860 = vmatprep.subr.mxu0 0.0
        %1861 = vmatpush1.msra.mxu0 %v1829
        %1862 = vmatprep.subr.mxu0 0.0
        %1863 = vmatpush1.msra.mxu0 0.0
        %1864 = vmatprep.subr.mxu0 0.0
        %1865 = vmatpush1.msra.mxu0 0.0
        %1866 = vmatprep.subr.mxu0 0.0
        %1867 = vmatpush1.msra.mxu0 0.0
        %1868 = vmatprep.subr.mxu0 0.0
        %1869 = vmatpush1.msra.mxu0 0.0
        %1870 = vmatprep.subr.mxu0 0.0
        %1871 = vmatpush1.msra.mxu0 0.0
        %1872 = vmatprep.subr.mxu0 0.0
        %1873 = vmatpush1.msra.mxu0 0.0
        %1874 = vmatprep.subr.mxu0 0.0
        %1875 = vmatpush1.msra.mxu0 0.0
        %1876 = vmatprep.subr.mxu0 0.0
        %1877 = vmatpush1.msra.mxu0 0.0
        %1878 = vmatprep.subr.mxu0 0.0
        %1879 = vmatpush1.msra.mxu0 0.0
        %1880 = vmatprep.subr.mxu0 0.0
        %1881 = vmatpush1.msra.mxu0 0.0
        %1882 = vmatprep.subr.mxu0 0.0
        %1883 = vmatpush1.msra.mxu0 0.0
        %1884 = vmatprep.subr.mxu0 0.0
        %1885 = vmatpush1.msra.mxu0 0.0
        %1886 = vmatprep.subr.mxu0 0.0
        %1887 = vmatpush1.msra.mxu0 0.0
        %1888 = vmatprep.subr.mxu0 0.0
        %1889 = vmatpush1.msra.mxu0 0.0
        %1890 = vmatprep.subr.mxu0 0.0
        %1891 = vmatpush1.msra.mxu0 0.0
        %1892 = vmatprep.subr.mxu0 0.0
        %1893 = vmatpush1.msra.mxu0 0.0
        %1894 = vmatprep.mubr.f32.mxu0 0.0
        %1895 = vmatmul.mubr.f32.gmra.mrb[0].mxu0 %v1813
        %v1896 = vpop.f32.mrb[0].mxu0
        %v1897 = vadd.f32 0.0, %v1896
        %v1898 = vpop.f32.mrb[0].mxu0
        %1899 = vdwg.mxu0
        %v1900 = vadd.f32 %v1665, %v1897
        %s1901 = sld [smem:[#allocation2 + $0x3f]]
        %v1902 = vstv %s1901
        %v1903 = vmul.f32 %v1902, %v250
        %v1904 = vadd.f32 %v1903, 0.0
        %s1905 = sld [smem:[#allocation2 + $0x40]]
        %v1906 = vstv %s1905
        %v1907 = vmul.f32 %v1906, %v250
        %v1908 = vmul.f32 %v1906, %v252
        %v1911 = vrot.slane %v1907, 1
        %v1912 = vrot.slane %v1908, 1
        %v1913 = vsel %vm264, %v1911, %v1912
        %v1915 = vadd.f32 %v1904, %v1913
        %s1916 = sld [smem:[#allocation2 + $0x41]]
        %v1917 = vstv %s1916
        %v1918 = vmul.f32 %v1917, %v250
        %v1919 = vmul.f32 %v1917, %v252
        %v1922 = vrot.slane %v1918, 2
        %v1923 = vrot.slane %v1919, 2
        %v1924 = vsel %vm276, %v1922, %v1923
        %v1926 = vadd.f32 %v1915, %v1924
        %s1927 = sld [smem:[#allocation2 + $0x42]]
        %v1928 = vstv %s1927
        %v1929 = vmul.f32 %v1928, %v250
        %v1930 = vmul.f32 %v1928, %v251
        %1933 = vrot.lane.b32.xlu0 %v1929, 127
        %v1934 = vpop.permute.xlu0 %1933
        %1935 = vrot.lane.b32.xlu0 %v1930, 127
        %v1936 = vpop.permute.xlu0 %1935
        %v1937 = vsel %vm292, %v1934, %v1936
        %v1939 = vadd.f32 %v1926, %v1937
        %s1940 = sld [smem:[#allocation2 + $0x43]]
        %v1941 = vstv %s1940
        %v1942 = vmul.f32 %v1941, %v250
        %v1943 = vmul.f32 %v1941, %v251
        %v1944 = vmul.f32 %v1941, %v252
        %v1945 = vmul.f32 %v1941, %v253
        %v1950 = vrot.slane %v1942, 1
        %v1951 = vrot.slane %v1944, 1
        %v1952 = vsel %vm264, %v1950, %v1951
        %v1953 = vrot.slane %v1943, 1
        %v1954 = vrot.slane %v1945, 1
        %v1955 = vsel %vm264, %v1953, %v1954
        %1956 = vrot.lane.b32.xlu0 %v1952, 127
        %v1957 = vpop.permute.xlu0 %1956
        %1958 = vrot.lane.b32.xlu0 %v1955, 127
        %v1959 = vpop.permute.xlu0 %1958
        %v1960 = vsel %vm292, %v1957, %v1959
        %v1962 = vadd.f32 %v1939, %v1960
        %s1963 = sld [smem:[#allocation2 + $0x44]]
        %v1964 = vstv %s1963
        %v1965 = vmul.f32 %v1964, %v250
        %v1966 = vmul.f32 %v1964, %v251
        %v1967 = vmul.f32 %v1964, %v252
        %v1968 = vmul.f32 %v1964, %v253
        %v1973 = vrot.slane %v1965, 2
        %v1974 = vrot.slane %v1967, 2
        %v1975 = vsel %vm276, %v1973, %v1974
        %v1976 = vrot.slane %v1966, 2
        %v1977 = vrot.slane %v1968, 2
        %v1978 = vsel %vm276, %v1976, %v1977
        %1979 = vrot.lane.b32.xlu0 %v1975, 127
        %v1980 = vpop.permute.xlu0 %1979
        %1981 = vrot.lane.b32.xlu0 %v1978, 127
        %v1982 = vpop.permute.xlu0 %1981
        %v1983 = vsel %vm292, %v1980, %v1982
        %v1985 = vadd.f32 %v1962, %v1983
        %s1986 = sld [smem:[#allocation2 + $0x45]]
        %v1987 = vstv %s1986
        %v1988 = vmul.f32 %v1987, %v250
        %v1989 = vmul.f32 %v1987, %v251
        %1992 = vrot.lane.b32.xlu0 %v1988, 126
        %v1993 = vpop.permute.xlu0 %1992
        %1994 = vrot.lane.b32.xlu0 %v1989, 126
        %v1995 = vpop.permute.xlu0 %1994
        %v1996 = vsel %vm352, %v1993, %v1995
        %v1998 = vadd.f32 %v1985, %v1996
        %s1999 = sld [smem:[#allocation2 + $0x46]]
        %v2000 = vstv %s1999
        %v2001 = vmul.f32 %v2000, %v250
        %v2002 = vmul.f32 %v2000, %v251
        %v2003 = vmul.f32 %v2000, %v252
        %v2004 = vmul.f32 %v2000, %v253
        %v2009 = vrot.slane %v2001, 1
        %v2010 = vrot.slane %v2003, 1
        %v2011 = vsel %vm264, %v2009, %v2010
        %v2012 = vrot.slane %v2002, 1
        %v2013 = vrot.slane %v2004, 1
        %v2014 = vsel %vm264, %v2012, %v2013
        %2015 = vrot.lane.b32.xlu0 %v2011, 126
        %v2016 = vpop.permute.xlu0 %2015
        %2017 = vrot.lane.b32.xlu0 %v2014, 126
        %v2018 = vpop.permute.xlu0 %2017
        %v2019 = vsel %vm352, %v2016, %v2018
        %v2021 = vadd.f32 %v1998, %v2019
        %s2022 = sld [smem:[#allocation2 + $0x47]]
        %v2023 = vstv %s2022
        %v2024 = vmul.f32 %v2023, %v250
        %v2025 = vmul.f32 %v2023, %v251
        %v2026 = vmul.f32 %v2023, %v252
        %v2027 = vmul.f32 %v2023, %v253
        %v2032 = vrot.slane %v2024, 2
        %v2033 = vrot.slane %v2026, 2
        %v2034 = vsel %vm276, %v2032, %v2033
        %v2035 = vrot.slane %v2025, 2
        %v2036 = vrot.slane %v2027, 2
        %v2037 = vsel %vm276, %v2035, %v2036
        %2038 = vrot.lane.b32.xlu0 %v2034, 126
        %v2039 = vpop.permute.xlu0 %2038
        %2040 = vrot.lane.b32.xlu0 %v2037, 126
        %v2041 = vpop.permute.xlu0 %2040
        %v2042 = vsel %vm352, %v2039, %v2041
        %v2044 = vadd.f32 %v2021, %v2042
        %s2045 = sld [smem:[#allocation4 + $0x7]]
        %v2046 = vstv %s2045
        %v2047 = vadd.f32 %v2044, %v2046
        %v2048 = vmax.f32 %v2047, 0.0
        %v2049 = vld [vmem:[%s3 + $0x380] sm:$0xff]
        %v2050 = vld [vmem:[%s3 + $0x388] sm:$0xff]
        %v2051 = vld [vmem:[%s3 + $0x390] sm:$0xff]
        %v2052 = vld [vmem:[%s3 + $0x398] sm:$0xff]
        %v2053 = vld [vmem:[%s3 + $0x3a0] sm:$0xff]
        %v2054 = vld [vmem:[%s3 + $0x3a8] sm:$0xff]
        %v2055 = vld [vmem:[%s3 + $0x3b0] sm:$0xff]
        %v2056 = vld [vmem:[%s3 + $0x3b8] sm:$0xff]
        %v2057 = vld [vmem:[%s3 + $0x3c0] sm:$0xff]
        %v2058 = vld [vmem:[%s3 + $0x3c8] sm:$0xff]
        %v2059 = vld [vmem:[%s3 + $0x3d0] sm:$0xff]
        %v2060 = vld [vmem:[%s3 + $0x3d8] sm:$0xff]
        %v2061 = vld [vmem:[%s3 + $0x3e0] sm:$0xff]
        %v2062 = vld [vmem:[%s3 + $0x3e8] sm:$0xff]
        %v2063 = vld [vmem:[%s3 + $0x3f0] sm:$0xff]
        %v2064 = vld [vmem:[%s3 + $0x3f8] sm:$0xff]
        %2065 = vmatprep.subr.mxu0 0.0
        %2066 = vmatpush1.msra.mxu0 %v2049
        %2067 = vmatprep.subr.mxu0 0.0
        %2068 = vmatpush1.msra.mxu0 %v2050
        %2069 = vmatprep.subr.mxu0 0.0
        %2070 = vmatpush1.msra.mxu0 %v2051
        %2071 = vmatprep.subr.mxu0 0.0
        %2072 = vmatpush1.msra.mxu0 %v2052
        %2073 = vmatprep.subr.mxu0 0.0
        %2074 = vmatpush1.msra.mxu0 %v2053
        %2075 = vmatprep.subr.mxu0 0.0
        %2076 = vmatpush1.msra.mxu0 %v2054
        %2077 = vmatprep.subr.mxu0 0.0
        %2078 = vmatpush1.msra.mxu0 %v2055
        %2079 = vmatprep.subr.mxu0 0.0
        %2080 = vmatpush1.msra.mxu0 %v2056
        %2081 = vmatprep.subr.mxu0 0.0
        %2082 = vmatpush1.msra.mxu0 %v2057
        %2083 = vmatprep.subr.mxu0 0.0
        %2084 = vmatpush1.msra.mxu0 %v2058
        %2085 = vmatprep.subr.mxu0 0.0
        %2086 = vmatpush1.msra.mxu0 %v2059
        %2087 = vmatprep.subr.mxu0 0.0
        %2088 = vmatpush1.msra.mxu0 %v2060
        %2089 = vmatprep.subr.mxu0 0.0
        %2090 = vmatpush1.msra.mxu0 %v2061
        %2091 = vmatprep.subr.mxu0 0.0
        %2092 = vmatpush1.msra.mxu0 %v2062
        %2093 = vmatprep.subr.mxu0 0.0
        %2094 = vmatpush1.msra.mxu0 %v2063
        %2095 = vmatprep.subr.mxu0 0.0
        %2096 = vmatpush1.msra.mxu0 %v2064
        %2097 = vmatprep.subr.mxu0 0.0
        %2098 = vmatpush1.msra.mxu0 0.0
        %2099 = vmatprep.subr.mxu0 0.0
        %2100 = vmatpush1.msra.mxu0 0.0
        %2101 = vmatprep.subr.mxu0 0.0
        %2102 = vmatpush1.msra.mxu0 0.0
        %2103 = vmatprep.subr.mxu0 0.0
        %2104 = vmatpush1.msra.mxu0 0.0
        %2105 = vmatprep.subr.mxu0 0.0
        %2106 = vmatpush1.msra.mxu0 0.0
        %2107 = vmatprep.subr.mxu0 0.0
        %2108 = vmatpush1.msra.mxu0 0.0
        %2109 = vmatprep.subr.mxu0 0.0
        %2110 = vmatpush1.msra.mxu0 0.0
        %2111 = vmatprep.subr.mxu0 0.0
        %2112 = vmatpush1.msra.mxu0 0.0
        %2113 = vmatprep.subr.mxu0 0.0
        %2114 = vmatpush1.msra.mxu0 0.0
        %2115 = vmatprep.subr.mxu0 0.0
        %2116 = vmatpush1.msra.mxu0 0.0
        %2117 = vmatprep.subr.mxu0 0.0
        %2118 = vmatpush1.msra.mxu0 0.0
        %2119 = vmatprep.subr.mxu0 0.0
        %2120 = vmatpush1.msra.mxu0 0.0
        %2121 = vmatprep.subr.mxu0 0.0
        %2122 = vmatpush1.msra.mxu0 0.0
        %2123 = vmatprep.subr.mxu0 0.0
        %2124 = vmatpush1.msra.mxu0 0.0
        %2125 = vmatprep.subr.mxu0 0.0
        %2126 = vmatpush1.msra.mxu0 0.0
        %2127 = vmatprep.subr.mxu0 0.0
        %2128 = vmatpush1.msra.mxu0 0.0
        %2129 = vmatprep.mubr.f32.mxu0 0.0
        %2130 = vmatmul.mubr.f32.gmra.mrb[0].mxu0 %v2048
        %v2131 = vpop.f32.mrb[0].mxu0
        %v2132 = vadd.f32 0.0, %v2131
        %v2133 = vpop.f32.mrb[0].mxu0
        %2134 = vdwg.mxu0
        %v2135 = vadd.f32 %v1900, %v2132
        %s2136 = sld [smem:[#allocation2 + $0x48]]
        %v2137 = vstv %s2136
        %v2138 = vmul.f32 %v2137, %v250
        %v2139 = vadd.f32 %v2138, 0.0
        %s2140 = sld [smem:[#allocation2 + $0x49]]
        %v2141 = vstv %s2140
        %v2142 = vmul.f32 %v2141, %v250
        %v2143 = vmul.f32 %v2141, %v252
        %v2146 = vrot.slane %v2142, 1
        %v2147 = vrot.slane %v2143, 1
        %v2148 = vsel %vm264, %v2146, %v2147
        %v2150 = vadd.f32 %v2139, %v2148
        %s2151 = sld [smem:[#allocation2 + $0x4a]]
        %v2152 = vstv %s2151
        %v2153 = vmul.f32 %v2152, %v250
        %v2154 = vmul.f32 %v2152, %v252
        %v2157 = vrot.slane %v2153, 2
        %v2158 = vrot.slane %v2154, 2
        %v2159 = vsel %vm276, %v2157, %v2158
        %v2161 = vadd.f32 %v2150, %v2159
        %s2162 = sld [smem:[#allocation2 + $0x4b]]
        %v2163 = vstv %s2162
        %v2164 = vmul.f32 %v2163, %v250
        %v2165 = vmul.f32 %v2163, %v251
        %2168 = vrot.lane.b32.xlu0 %v2164, 127
        %v2169 = vpop.permute.xlu0 %2168
        %2170 = vrot.lane.b32.xlu0 %v2165, 127
        %v2171 = vpop.permute.xlu0 %2170
        %v2172 = vsel %vm292, %v2169, %v2171
        %v2174 = vadd.f32 %v2161, %v2172
        %s2175 = sld [smem:[#allocation2 + $0x4c]]
        %v2176 = vstv %s2175
        %v2177 = vmul.f32 %v2176, %v250
        %v2178 = vmul.f32 %v2176, %v251
        %v2179 = vmul.f32 %v2176, %v252
        %v2180 = vmul.f32 %v2176, %v253
        %v2185 = vrot.slane %v2177, 1
        %v2186 = vrot.slane %v2179, 1
        %v2187 = vsel %vm264, %v2185, %v2186
        %v2188 = vrot.slane %v2178, 1
        %v2189 = vrot.slane %v2180, 1
        %v2190 = vsel %vm264, %v2188, %v2189
        %2191 = vrot.lane.b32.xlu0 %v2187, 127
        %v2192 = vpop.permute.xlu0 %2191
        %2193 = vrot.lane.b32.xlu0 %v2190, 127
        %v2194 = vpop.permute.xlu0 %2193
        %v2195 = vsel %vm292, %v2192, %v2194
        %v2197 = vadd.f32 %v2174, %v2195
        %s2198 = sld [smem:[#allocation2 + $0x4d]]
        %v2199 = vstv %s2198
        %v2200 = vmul.f32 %v2199, %v250
        %v2201 = vmul.f32 %v2199, %v251
        %v2202 = vmul.f32 %v2199, %v252
        %v2203 = vmul.f32 %v2199, %v253
        %v2208 = vrot.slane %v2200, 2
        %v2209 = vrot.slane %v2202, 2
        %v2210 = vsel %vm276, %v2208, %v2209
        %v2211 = vrot.slane %v2201, 2
        %v2212 = vrot.slane %v2203, 2
        %v2213 = vsel %vm276, %v2211, %v2212
        %2214 = vrot.lane.b32.xlu0 %v2210, 127
        %v2215 = vpop.permute.xlu0 %2214
        %2216 = vrot.lane.b32.xlu0 %v2213, 127
        %v2217 = vpop.permute.xlu0 %2216
        %v2218 = vsel %vm292, %v2215, %v2217
        %v2220 = vadd.f32 %v2197, %v2218
        %s2221 = sld [smem:[#allocation2 + $0x4e]]
        %v2222 = vstv %s2221
        %v2223 = vmul.f32 %v2222, %v250
        %v2224 = vmul.f32 %v2222, %v251
        %2227 = vrot.lane.b32.xlu0 %v2223, 126
        %v2228 = vpop.permute.xlu0 %2227
        %2229 = vrot.lane.b32.xlu0 %v2224, 126
        %v2230 = vpop.permute.xlu0 %2229
        %v2231 = vsel %vm352, %v2228, %v2230
        %v2233 = vadd.f32 %v2220, %v2231
        %s2234 = sld [smem:[#allocation2 + $0x4f]]
        %v2235 = vstv %s2234
        %v2236 = vmul.f32 %v2235, %v250
        %v2237 = vmul.f32 %v2235, %v251
        %v2238 = vmul.f32 %v2235, %v252
        %v2239 = vmul.f32 %v2235, %v253
        %v2244 = vrot.slane %v2236, 1
        %v2245 = vrot.slane %v2238, 1
        %v2246 = vsel %vm264, %v2244, %v2245
        %v2247 = vrot.slane %v2237, 1
        %v2248 = vrot.slane %v2239, 1
        %v2249 = vsel %vm264, %v2247, %v2248
        %2250 = vrot.lane.b32.xlu0 %v2246, 126
        %v2251 = vpop.permute.xlu0 %2250
        %2252 = vrot.lane.b32.xlu0 %v2249, 126
        %v2253 = vpop.permute.xlu0 %2252
        %v2254 = vsel %vm352, %v2251, %v2253
        %v2256 = vadd.f32 %v2233, %v2254
        %s2257 = sld [smem:[#allocation2 + $0x50]]
        %v2258 = vstv %s2257
        %v2259 = vmul.f32 %v2258, %v250
        %v2260 = vmul.f32 %v2258, %v251
        %v2261 = vmul.f32 %v2258, %v252
        %v2262 = vmul.f32 %v2258, %v253
        %v2267 = vrot.slane %v2259, 2
        %v2268 = vrot.slane %v2261, 2
        %v2269 = vsel %vm276, %v2267, %v2268
        %v2270 = vrot.slane %v2260, 2
        %v2271 = vrot.slane %v2262, 2
        %v2272 = vsel %vm276, %v2270, %v2271
        %2273 = vrot.lane.b32.xlu0 %v2269, 126
        %v2274 = vpop.permute.xlu0 %2273
        %2275 = vrot.lane.b32.xlu0 %v2272, 126
        %v2276 = vpop.permute.xlu0 %2275
        %v2277 = vsel %vm352, %v2274, %v2276
        %v2279 = vadd.f32 %v2256, %v2277
        %s2280 = sld [smem:[#allocation4 + $0x8]]
        %v2281 = vstv %s2280
        %v2282 = vadd.f32 %v2279, %v2281
        %v2283 = vmax.f32 %v2282, 0.0
        %v2284 = vld [vmem:[%s3 + $0x400] sm:$0xff]
        %v2285 = vld [vmem:[%s3 + $0x408] sm:$0xff]
        %v2286 = vld [vmem:[%s3 + $0x410] sm:$0xff]
        %v2287 = vld [vmem:[%s3 + $0x418] sm:$0xff]
        %v2288 = vld [vmem:[%s3 + $0x420] sm:$0xff]
        %v2289 = vld [vmem:[%s3 + $0x428] sm:$0xff]
        %v2290 = vld [vmem:[%s3 + $0x430] sm:$0xff]
        %v2291 = vld [vmem:[%s3 + $0x438] sm:$0xff]
        %v2292 = vld [vmem:[%s3 + $0x440] sm:$0xff]
        %v2293 = vld [vmem:[%s3 + $0x448] sm:$0xff]
        %v2294 = vld [vmem:[%s3 + $0x450] sm:$0xff]
        %v2295 = vld [vmem:[%s3 + $0x458] sm:$0xff]
        %v2296 = vld [vmem:[%s3 + $0x460] sm:$0xff]
        %v2297 = vld [vmem:[%s3 + $0x468] sm:$0xff]
        %v2298 = vld [vmem:[%s3 + $0x470] sm:$0xff]
        %v2299 = vld [vmem:[%s3 + $0x478] sm:$0xff]
        %2300 = vmatprep.subr.mxu0 0.0
        %2301 = vmatpush1.msra.mxu0 %v2284
        %2302 = vmatprep.subr.mxu0 0.0
        %2303 = vmatpush1.msra.mxu0 %v2285
        %2304 = vmatprep.subr.mxu0 0.0
        %2305 = vmatpush1.msra.mxu0 %v2286
        %2306 = vmatprep.subr.mxu0 0.0
        %2307 = vmatpush1.msra.mxu0 %v2287
        %2308 = vmatprep.subr.mxu0 0.0
        %2309 = vmatpush1.msra.mxu0 %v2288
        %2310 = vmatprep.subr.mxu0 0.0
        %2311 = vmatpush1.msra.mxu0 %v2289
        %2312 = vmatprep.subr.mxu0 0.0
        %2313 = vmatpush1.msra.mxu0 %v2290
        %2314 = vmatprep.subr.mxu0 0.0
        %2315 = vmatpush1.msra.mxu0 %v2291
        %2316 = vmatprep.subr.mxu0 0.0
        %2317 = vmatpush1.msra.mxu0 %v2292
        %2318 = vmatprep.subr.mxu0 0.0
        %2319 = vmatpush1.msra.mxu0 %v2293
        %2320 = vmatprep.subr.mxu0 0.0
        %2321 = vmatpush1.msra.mxu0 %v2294
        %2322 = vmatprep.subr.mxu0 0.0
        %2323 = vmatpush1.msra.mxu0 %v2295
        %2324 = vmatprep.subr.mxu0 0.0
        %2325 = vmatpush1.msra.mxu0 %v2296
        %2326 = vmatprep.subr.mxu0 0.0
        %2327 = vmatpush1.msra.mxu0 %v2297
        %2328 = vmatprep.subr.mxu0 0.0
        %2329 = vmatpush1.msra.mxu0 %v2298
        %2330 = vmatprep.subr.mxu0 0.0
        %2331 = vmatpush1.msra.mxu0 %v2299
        %2332 = vmatprep.subr.mxu0 0.0
        %2333 = vmatpush1.msra.mxu0 0.0
        %2334 = vmatprep.subr.mxu0 0.0
        %2335 = vmatpush1.msra.mxu0 0.0
        %2336 = vmatprep.subr.mxu0 0.0
        %2337 = vmatpush1.msra.mxu0 0.0
        %2338 = vmatprep.subr.mxu0 0.0
        %2339 = vmatpush1.msra.mxu0 0.0
        %2340 = vmatprep.subr.mxu0 0.0
        %2341 = vmatpush1.msra.mxu0 0.0
        %2342 = vmatprep.subr.mxu0 0.0
        %2343 = vmatpush1.msra.mxu0 0.0
        %2344 = vmatprep.subr.mxu0 0.0
        %2345 = vmatpush1.msra.mxu0 0.0
        %2346 = vmatprep.subr.mxu0 0.0
        %2347 = vmatpush1.msra.mxu0 0.0
        %2348 = vmatprep.subr.mxu0 0.0
        %2349 = vmatpush1.msra.mxu0 0.0
        %2350 = vmatprep.subr.mxu0 0.0
        %2351 = vmatpush1.msra.mxu0 0.0
        %2352 = vmatprep.subr.mxu0 0.0
        %2353 = vmatpush1.msra.mxu0 0.0
        %2354 = vmatprep.subr.mxu0 0.0
        %2355 = vmatpush1.msra.mxu0 0.0
        %2356 = vmatprep.subr.mxu0 0.0
        %2357 = vmatpush1.msra.mxu0 0.0
        %2358 = vmatprep.subr.mxu0 0.0
        %2359 = vmatpush1.msra.mxu0 0.0
        %2360 = vmatprep.subr.mxu0 0.0
        %2361 = vmatpush1.msra.mxu0 0.0
        %2362 = vmatprep.subr.mxu0 0.0
        %2363 = vmatpush1.msra.mxu0 0.0
        %2364 = vmatprep.mubr.f32.mxu0 0.0
        %2365 = vmatmul.mubr.f32.gmra.mrb[0].mxu0 %v2283
        %v2366 = vpop.f32.mrb[0].mxu0
        %v2367 = vadd.f32 0.0, %v2366
        %v2368 = vpop.f32.mrb[0].mxu0
        %2369 = vdwg.mxu0
        %v2370 = vadd.f32 %v2135, %v2367
        %s2371 = sld [smem:[#allocation2 + $0x51]]
        %v2372 = vstv %s2371
        %v2373 = vmul.f32 %v2372, %v250
        %v2374 = vadd.f32 %v2373, 0.0
        %s2375 = sld [smem:[#allocation2 + $0x52]]
        %v2376 = vstv %s2375
        %v2377 = vmul.f32 %v2376, %v250
        %v2378 = vmul.f32 %v2376, %v252
        %v2381 = vrot.slane %v2377, 1
        %v2382 = vrot.slane %v2378, 1
        %v2383 = vsel %vm264, %v2381, %v2382
        %v2385 = vadd.f32 %v2374, %v2383
        %s2386 = sld [smem:[#allocation2 + $0x53]]
        %v2387 = vstv %s2386
        %v2388 = vmul.f32 %v2387, %v250
        %v2389 = vmul.f32 %v2387, %v252
        %v2392 = vrot.slane %v2388, 2
        %v2393 = vrot.slane %v2389, 2
        %v2394 = vsel %vm276, %v2392, %v2393
        %v2396 = vadd.f32 %v2385, %v2394
        %s2397 = sld [smem:[#allocation2 + $0x54]]
        %v2398 = vstv %s2397
        %v2399 = vmul.f32 %v2398, %v250
        %v2400 = vmul.f32 %v2398, %v251
        %2403 = vrot.lane.b32.xlu0 %v2399, 127
        %v2404 = vpop.permute.xlu0 %2403
        %2405 = vrot.lane.b32.xlu0 %v2400, 127
        %v2406 = vpop.permute.xlu0 %2405
        %v2407 = vsel %vm292, %v2404, %v2406
        %v2409 = vadd.f32 %v2396, %v2407
        %s2410 = sld [smem:[#allocation2 + $0x55]]
        %v2411 = vstv %s2410
        %v2412 = vmul.f32 %v2411, %v250
        %v2413 = vmul.f32 %v2411, %v251
        %v2414 = vmul.f32 %v2411, %v252
        %v2415 = vmul.f32 %v2411, %v253
        %v2420 = vrot.slane %v2412, 1
        %v2421 = vrot.slane %v2414, 1
        %v2422 = vsel %vm264, %v2420, %v2421
        %v2423 = vrot.slane %v2413, 1
        %v2424 = vrot.slane %v2415, 1
        %v2425 = vsel %vm264, %v2423, %v2424
        %2426 = vrot.lane.b32.xlu0 %v2422, 127
        %v2427 = vpop.permute.xlu0 %2426
        %2428 = vrot.lane.b32.xlu0 %v2425, 127
        %v2429 = vpop.permute.xlu0 %2428
        %v2430 = vsel %vm292, %v2427, %v2429
        %v2432 = vadd.f32 %v2409, %v2430
        %s2433 = sld [smem:[#allocation2 + $0x56]]
        %v2434 = vstv %s2433
        %v2435 = vmul.f32 %v2434, %v250
        %v2436 = vmul.f32 %v2434, %v251
        %v2437 = vmul.f32 %v2434, %v252
        %v2438 = vmul.f32 %v2434, %v253
        %v2443 = vrot.slane %v2435, 2
        %v2444 = vrot.slane %v2437, 2
        %v2445 = vsel %vm276, %v2443, %v2444
        %v2446 = vrot.slane %v2436, 2
        %v2447 = vrot.slane %v2438, 2
        %v2448 = vsel %vm276, %v2446, %v2447
        %2449 = vrot.lane.b32.xlu0 %v2445, 127
        %v2450 = vpop.permute.xlu0 %2449
        %2451 = vrot.lane.b32.xlu0 %v2448, 127
        %v2452 = vpop.permute.xlu0 %2451
        %v2453 = vsel %vm292, %v2450, %v2452
        %v2455 = vadd.f32 %v2432, %v2453
        %s2456 = sld [smem:[#allocation2 + $0x57]]
        %v2457 = vstv %s2456
        %v2458 = vmul.f32 %v2457, %v250
        %v2459 = vmul.f32 %v2457, %v251
        %2462 = vrot.lane.b32.xlu0 %v2458, 126
        %v2463 = vpop.permute.xlu0 %2462
        %2464 = vrot.lane.b32.xlu0 %v2459, 126
        %v2465 = vpop.permute.xlu0 %2464
        %v2466 = vsel %vm352, %v2463, %v2465
        %v2468 = vadd.f32 %v2455, %v2466
        %s2469 = sld [smem:[#allocation2 + $0x58]]
        %v2470 = vstv %s2469
        %v2471 = vmul.f32 %v2470, %v250
        %v2472 = vmul.f32 %v2470, %v251
        %v2473 = vmul.f32 %v2470, %v252
        %v2474 = vmul.f32 %v2470, %v253
        %v2479 = vrot.slane %v2471, 1
        %v2480 = vrot.slane %v2473, 1
        %v2481 = vsel %vm264, %v2479, %v2480
        %v2482 = vrot.slane %v2472, 1
        %v2483 = vrot.slane %v2474, 1
        %v2484 = vsel %vm264, %v2482, %v2483
        %2485 = vrot.lane.b32.xlu0 %v2481, 126
        %v2486 = vpop.permute.xlu0 %2485
        %2487 = vrot.lane.b32.xlu0 %v2484, 126
        %v2488 = vpop.permute.xlu0 %2487
        %v2489 = vsel %vm352, %v2486, %v2488
        %v2491 = vadd.f32 %v2468, %v2489
        %s2492 = sld [smem:[#allocation2 + $0x59]]
        %v2493 = vstv %s2492
        %v2494 = vmul.f32 %v2493, %v250
        %v2495 = vmul.f32 %v2493, %v251
        %v2496 = vmul.f32 %v2493, %v252
        %v2497 = vmul.f32 %v2493, %v253
        %v2502 = vrot.slane %v2494, 2
        %v2503 = vrot.slane %v2496, 2
        %v2504 = vsel %vm276, %v2502, %v2503
        %v2505 = vrot.slane %v2495, 2
        %v2506 = vrot.slane %v2497, 2
        %v2507 = vsel %vm276, %v2505, %v2506
        %2508 = vrot.lane.b32.xlu0 %v2504, 126
        %v2509 = vpop.permute.xlu0 %2508
        %2510 = vrot.lane.b32.xlu0 %v2507, 126
        %v2511 = vpop.permute.xlu0 %2510
        %v2512 = vsel %vm352, %v2509, %v2511
        %v2514 = vadd.f32 %v2491, %v2512
        %s2515 = sld [smem:[#allocation4 + $0x9]]
        %v2516 = vstv %s2515
        %v2517 = vadd.f32 %v2514, %v2516
        %v2518 = vmax.f32 %v2517, 0.0
        %v2519 = vld [vmem:[%s3 + $0x480] sm:$0xff]
        %v2520 = vld [vmem:[%s3 + $0x488] sm:$0xff]
        %v2521 = vld [vmem:[%s3 + $0x490] sm:$0xff]
        %v2522 = vld [vmem:[%s3 + $0x498] sm:$0xff]
        %v2523 = vld [vmem:[%s3 + $0x4a0] sm:$0xff]
        %v2524 = vld [vmem:[%s3 + $0x4a8] sm:$0xff]
        %v2525 = vld [vmem:[%s3 + $0x4b0] sm:$0xff]
        %v2526 = vld [vmem:[%s3 + $0x4b8] sm:$0xff]
        %v2527 = vld [vmem:[%s3 + $0x4c0] sm:$0xff]
        %v2528 = vld [vmem:[%s3 + $0x4c8] sm:$0xff]
        %v2529 = vld [vmem:[%s3 + $0x4d0] sm:$0xff]
        %v2530 = vld [vmem:[%s3 + $0x4d8] sm:$0xff]
        %v2531 = vld [vmem:[%s3 + $0x4e0] sm:$0xff]
        %v2532 = vld [vmem:[%s3 + $0x4e8] sm:$0xff]
        %v2533 = vld [vmem:[%s3 + $0x4f0] sm:$0xff]
        %v2534 = vld [vmem:[%s3 + $0x4f8] sm:$0xff]
        %2535 = vmatprep.subr.mxu0 0.0
        %2536 = vmatpush1.msra.mxu0 %v2519
        %2537 = vmatprep.subr.mxu0 0.0
        %2538 = vmatpush1.msra.mxu0 %v2520
        %2539 = vmatprep.subr.mxu0 0.0
        %2540 = vmatpush1.msra.mxu0 %v2521
        %2541 = vmatprep.subr.mxu0 0.0
        %2542 = vmatpush1.msra.mxu0 %v2522
        %2543 = vmatprep.subr.mxu0 0.0
        %2544 = vmatpush1.msra.mxu0 %v2523
        %2545 = vmatprep.subr.mxu0 0.0
        %2546 = vmatpush1.msra.mxu0 %v2524
        %2547 = vmatprep.subr.mxu0 0.0
        %2548 = vmatpush1.msra.mxu0 %v2525
        %2549 = vmatprep.subr.mxu0 0.0
        %2550 = vmatpush1.msra.mxu0 %v2526
        %2551 = vmatprep.subr.mxu0 0.0
        %2552 = vmatpush1.msra.mxu0 %v2527
        %2553 = vmatprep.subr.mxu0 0.0
        %2554 = vmatpush1.msra.mxu0 %v2528
        %2555 = vmatprep.subr.mxu0 0.0
        %2556 = vmatpush1.msra.mxu0 %v2529
        %2557 = vmatprep.subr.mxu0 0.0
        %2558 = vmatpush1.msra.mxu0 %v2530
        %2559 = vmatprep.subr.mxu0 0.0
        %2560 = vmatpush1.msra.mxu0 %v2531
        %2561 = vmatprep.subr.mxu0 0.0
        %2562 = vmatpush1.msra.mxu0 %v2532
        %2563 = vmatprep.subr.mxu0 0.0
        %2564 = vmatpush1.msra.mxu0 %v2533
        %2565 = vmatprep.subr.mxu0 0.0
        %2566 = vmatpush1.msra.mxu0 %v2534
        %2567 = vmatprep.subr.mxu0 0.0
        %2568 = vmatpush1.msra.mxu0 0.0
        %2569 = vmatprep.subr.mxu0 0.0
        %2570 = vmatpush1.msra.mxu0 0.0
        %2571 = vmatprep.subr.mxu0 0.0
        %2572 = vmatpush1.msra.mxu0 0.0
        %2573 = vmatprep.subr.mxu0 0.0
        %2574 = vmatpush1.msra.mxu0 0.0
        %2575 = vmatprep.subr.mxu0 0.0
        %2576 = vmatpush1.msra.mxu0 0.0
        %2577 = vmatprep.subr.mxu0 0.0
        %2578 = vmatpush1.msra.mxu0 0.0
        %2579 = vmatprep.subr.mxu0 0.0
        %2580 = vmatpush1.msra.mxu0 0.0
        %2581 = vmatprep.subr.mxu0 0.0
        %2582 = vmatpush1.msra.mxu0 0.0
        %2583 = vmatprep.subr.mxu0 0.0
        %2584 = vmatpush1.msra.mxu0 0.0
        %2585 = vmatprep.subr.mxu0 0.0
        %2586 = vmatpush1.msra.mxu0 0.0
        %2587 = vmatprep.subr.mxu0 0.0
        %2588 = vmatpush1.msra.mxu0 0.0
        %2589 = vmatprep.subr.mxu0 0.0
        %2590 = vmatpush1.msra.mxu0 0.0
        %2591 = vmatprep.subr.mxu0 0.0
        %2592 = vmatpush1.msra.mxu0 0.0
        %2593 = vmatprep.subr.mxu0 0.0
        %2594 = vmatpush1.msra.mxu0 0.0
        %2595 = vmatprep.subr.mxu0 0.0
        %2596 = vmatpush1.msra.mxu0 0.0
        %2597 = vmatprep.subr.mxu0 0.0
        %2598 = vmatpush1.msra.mxu0 0.0
        %2599 = vmatprep.mubr.f32.mxu0 0.0
        %2600 = vmatmul.mubr.f32.gmra.mrb[0].mxu0 %v2518
        %v2601 = vpop.f32.mrb[0].mxu0
        %v2602 = vadd.f32 0.0, %v2601
        %v2603 = vpop.f32.mrb[0].mxu0
        %2604 = vdwg.mxu0
        %v2605 = vadd.f32 %v2370, %v2602
        %s2606 = sld [smem:[#allocation2 + $0x5a]]
        %v2607 = vstv %s2606
        %v2608 = vmul.f32 %v2607, %v250
        %v2609 = vadd.f32 %v2608, 0.0
        %s2610 = sld [smem:[#allocation2 + $0x5b]]
        %v2611 = vstv %s2610
        %v2612 = vmul.f32 %v2611, %v250
        %v2613 = vmul.f32 %v2611, %v252
        %v2616 = vrot.slane %v2612, 1
        %v2617 = vrot.slane %v2613, 1
        %v2618 = vsel %vm264, %v2616, %v2617
        %v2620 = vadd.f32 %v2609, %v2618
        %s2621 = sld [smem:[#allocation2 + $0x5c]]
        %v2622 = vstv %s2621
        %v2623 = vmul.f32 %v2622, %v250
        %v2624 = vmul.f32 %v2622, %v252
        %v2627 = vrot.slane %v2623, 2
        %v2628 = vrot.slane %v2624, 2
        %v2629 = vsel %vm276, %v2627, %v2628
        %v2631 = vadd.f32 %v2620, %v2629
        %s2632 = sld [smem:[#allocation2 + $0x5d]]
        %v2633 = vstv %s2632
        %v2634 = vmul.f32 %v2633, %v250
        %v2635 = vmul.f32 %v2633, %v251
        %2638 = vrot.lane.b32.xlu0 %v2634, 127
        %v2639 = vpop.permute.xlu0 %2638
        %2640 = vrot.lane.b32.xlu0 %v2635, 127
        %v2641 = vpop.permute.xlu0 %2640
        %v2642 = vsel %vm292, %v2639, %v2641
        %v2644 = vadd.f32 %v2631, %v2642
        %s2645 = sld [smem:[#allocation2 + $0x5e]]
        %v2646 = vstv %s2645
        %v2647 = vmul.f32 %v2646, %v250
        %v2648 = vmul.f32 %v2646, %v251
        %v2649 = vmul.f32 %v2646, %v252
        %v2650 = vmul.f32 %v2646, %v253
        %v2655 = vrot.slane %v2647, 1
        %v2656 = vrot.slane %v2649, 1
        %v2657 = vsel %vm264, %v2655, %v2656
        %v2658 = vrot.slane %v2648, 1
        %v2659 = vrot.slane %v2650, 1
        %v2660 = vsel %vm264, %v2658, %v2659
        %2661 = vrot.lane.b32.xlu0 %v2657, 127
        %v2662 = vpop.permute.xlu0 %2661
        %2663 = vrot.lane.b32.xlu0 %v2660, 127
        %v2664 = vpop.permute.xlu0 %2663
        %v2665 = vsel %vm292, %v2662, %v2664
        %v2667 = vadd.f32 %v2644, %v2665
        %s2668 = sld [smem:[#allocation2 + $0x5f]]
        %v2669 = vstv %s2668
        %v2670 = vmul.f32 %v2669, %v250
        %v2671 = vmul.f32 %v2669, %v251
        %v2672 = vmul.f32 %v2669, %v252
        %v2673 = vmul.f32 %v2669, %v253
        %v2678 = vrot.slane %v2670, 2
        %v2679 = vrot.slane %v2672, 2
        %v2680 = vsel %vm276, %v2678, %v2679
        %v2681 = vrot.slane %v2671, 2
        %v2682 = vrot.slane %v2673, 2
        %v2683 = vsel %vm276, %v2681, %v2682
        %2684 = vrot.lane.b32.xlu0 %v2680, 127
        %v2685 = vpop.permute.xlu0 %2684
        %2686 = vrot.lane.b32.xlu0 %v2683, 127
        %v2687 = vpop.permute.xlu0 %2686
        %v2688 = vsel %vm292, %v2685, %v2687
        %v2690 = vadd.f32 %v2667, %v2688
        %s2691 = sld [smem:[#allocation2 + $0x60]]
        %v2692 = vstv %s2691
        %v2693 = vmul.f32 %v2692, %v250
        %v2694 = vmul.f32 %v2692, %v251
        %2697 = vrot.lane.b32.xlu0 %v2693, 126
        %v2698 = vpop.permute.xlu0 %2697
        %2699 = vrot.lane.b32.xlu0 %v2694, 126
        %v2700 = vpop.permute.xlu0 %2699
        %v2701 = vsel %vm352, %v2698, %v2700
        %v2703 = vadd.f32 %v2690, %v2701
        %s2704 = sld [smem:[#allocation2 + $0x61]]
        %v2705 = vstv %s2704
        %v2706 = vmul.f32 %v2705, %v250
        %v2707 = vmul.f32 %v2705, %v251
        %v2708 = vmul.f32 %v2705, %v252
        %v2709 = vmul.f32 %v2705, %v253
        %v2714 = vrot.slane %v2706, 1
        %v2715 = vrot.slane %v2708, 1
        %v2716 = vsel %vm264, %v2714, %v2715
        %v2717 = vrot.slane %v2707, 1
        %v2718 = vrot.slane %v2709, 1
        %v2719 = vsel %vm264, %v2717, %v2718
        %2720 = vrot.lane.b32.xlu0 %v2716, 126
        %v2721 = vpop.permute.xlu0 %2720
        %2722 = vrot.lane.b32.xlu0 %v2719, 126
        %v2723 = vpop.permute.xlu0 %2722
        %v2724 = vsel %vm352, %v2721, %v2723
        %v2726 = vadd.f32 %v2703, %v2724
        %s2727 = sld [smem:[#allocation2 + $0x62]]
        %v2728 = vstv %s2727
        %v2729 = vmul.f32 %v2728, %v250
        %v2730 = vmul.f32 %v2728, %v251
        %v2731 = vmul.f32 %v2728, %v252
        %v2732 = vmul.f32 %v2728, %v253
        %v2737 = vrot.slane %v2729, 2
        %v2738 = vrot.slane %v2731, 2
        %v2739 = vsel %vm276, %v2737, %v2738
        %v2740 = vrot.slane %v2730, 2
        %v2741 = vrot.slane %v2732, 2
        %v2742 = vsel %vm276, %v2740, %v2741
        %2743 = vrot.lane.b32.xlu0 %v2739, 126
        %v2744 = vpop.permute.xlu0 %2743
        %2745 = vrot.lane.b32.xlu0 %v2742, 126
        %v2746 = vpop.permute.xlu0 %2745
        %v2747 = vsel %vm352, %v2744, %v2746
        %v2749 = vadd.f32 %v2726, %v2747
        %s2750 = sld [smem:[#allocation4 + $0xa]]
        %v2751 = vstv %s2750
        %v2752 = vadd.f32 %v2749, %v2751
        %v2753 = vmax.f32 %v2752, 0.0
        %v2754 = vld [vmem:[%s3 + $0x500] sm:$0xff]
        %v2755 = vld [vmem:[%s3 + $0x508] sm:$0xff]
        %v2756 = vld [vmem:[%s3 + $0x510] sm:$0xff]
        %v2757 = vld [vmem:[%s3 + $0x518] sm:$0xff]
        %v2758 = vld [vmem:[%s3 + $0x520] sm:$0xff]
        %v2759 = vld [vmem:[%s3 + $0x528] sm:$0xff]
        %v2760 = vld [vmem:[%s3 + $0x530] sm:$0xff]
        %v2761 = vld [vmem:[%s3 + $0x538] sm:$0xff]
        %v2762 = vld [vmem:[%s3 + $0x540] sm:$0xff]
        %v2763 = vld [vmem:[%s3 + $0x548] sm:$0xff]
        %v2764 = vld [vmem:[%s3 + $0x550] sm:$0xff]
        %v2765 = vld [vmem:[%s3 + $0x558] sm:$0xff]
        %v2766 = vld [vmem:[%s3 + $0x560] sm:$0xff]
        %v2767 = vld [vmem:[%s3 + $0x568] sm:$0xff]
        %v2768 = vld [vmem:[%s3 + $0x570] sm:$0xff]
        %v2769 = vld [vmem:[%s3 + $0x578] sm:$0xff]
        %2770 = vmatprep.subr.mxu0 0.0
        %2771 = vmatpush1.msra.mxu0 %v2754
        %2772 = vmatprep.subr.mxu0 0.0
        %2773 = vmatpush1.msra.mxu0 %v2755
        %2774 = vmatprep.subr.mxu0 0.0
        %2775 = vmatpush1.msra.mxu0 %v2756
        %2776 = vmatprep.subr.mxu0 0.0
        %2777 = vmatpush1.msra.mxu0 %v2757
        %2778 = vmatprep.subr.mxu0 0.0
        %2779 = vmatpush1.msra.mxu0 %v2758
        %2780 = vmatprep.subr.mxu0 0.0
        %2781 = vmatpush1.msra.mxu0 %v2759
        %2782 = vmatprep.subr.mxu0 0.0
        %2783 = vmatpush1.msra.mxu0 %v2760
        %2784 = vmatprep.subr.mxu0 0.0
        %2785 = vmatpush1.msra.mxu0 %v2761
        %2786 = vmatprep.subr.mxu0 0.0
        %2787 = vmatpush1.msra.mxu0 %v2762
        %2788 = vmatprep.subr.mxu0 0.0
        %2789 = vmatpush1.msra.mxu0 %v2763
        %2790 = vmatprep.subr.mxu0 0.0
        %2791 = vmatpush1.msra.mxu0 %v2764
        %2792 = vmatprep.subr.mxu0 0.0
        %2793 = vmatpush1.msra.mxu0 %v2765
        %2794 = vmatprep.subr.mxu0 0.0
        %2795 = vmatpush1.msra.mxu0 %v2766
        %2796 = vmatprep.subr.mxu0 0.0
        %2797 = vmatpush1.msra.mxu0 %v2767
        %2798 = vmatprep.subr.mxu0 0.0
        %2799 = vmatpush1.msra.mxu0 %v2768
        %2800 = vmatprep.subr.mxu0 0.0
        %2801 = vmatpush1.msra.mxu0 %v2769
        %2802 = vmatprep.subr.mxu0 0.0
        %2803 = vmatpush1.msra.mxu0 0.0
        %2804 = vmatprep.subr.mxu0 0.0
        %2805 = vmatpush1.msra.mxu0 0.0
        %2806 = vmatprep.subr.mxu0 0.0
        %2807 = vmatpush1.msra.mxu0 0.0
        %2808 = vmatprep.subr.mxu0 0.0
        %2809 = vmatpush1.msra.mxu0 0.0
        %2810 = vmatprep.subr.mxu0 0.0
        %2811 = vmatpush1.msra.mxu0 0.0
        %2812 = vmatprep.subr.mxu0 0.0
        %2813 = vmatpush1.msra.mxu0 0.0
        %2814 = vmatprep.subr.mxu0 0.0
        %2815 = vmatpush1.msra.mxu0 0.0
        %2816 = vmatprep.subr.mxu0 0.0
        %2817 = vmatpush1.msra.mxu0 0.0
        %2818 = vmatprep.subr.mxu0 0.0
        %2819 = vmatpush1.msra.mxu0 0.0
        %2820 = vmatprep.subr.mxu0 0.0
        %2821 = vmatpush1.msra.mxu0 0.0
        %2822 = vmatprep.subr.mxu0 0.0
        %2823 = vmatpush1.msra.mxu0 0.0
        %2824 = vmatprep.subr.mxu0 0.0
        %2825 = vmatpush1.msra.mxu0 0.0
        %2826 = vmatprep.subr.mxu0 0.0
        %2827 = vmatpush1.msra.mxu0 0.0
        %2828 = vmatprep.subr.mxu0 0.0
        %2829 = vmatpush1.msra.mxu0 0.0
        %2830 = vmatprep.subr.mxu0 0.0
        %2831 = vmatpush1.msra.mxu0 0.0
        %2832 = vmatprep.subr.mxu0 0.0
        %2833 = vmatpush1.msra.mxu0 0.0
        %2834 = vmatprep.mubr.f32.mxu0 0.0
        %2835 = vmatmul.mubr.f32.gmra.mrb[0].mxu0 %v2753
        %v2836 = vpop.f32.mrb[0].mxu0
        %v2837 = vadd.f32 0.0, %v2836
        %v2838 = vpop.f32.mrb[0].mxu0
        %2839 = vdwg.mxu0
        %v2840 = vadd.f32 %v2605, %v2837
        %s2841 = sld [smem:[#allocation2 + $0x63]]
        %v2842 = vstv %s2841
        %v2843 = vmul.f32 %v2842, %v250
        %v2844 = vadd.f32 %v2843, 0.0
        %s2845 = sld [smem:[#allocation2 + $0x64]]
        %v2846 = vstv %s2845
        %v2847 = vmul.f32 %v2846, %v250
        %v2848 = vmul.f32 %v2846, %v252
        %v2851 = vrot.slane %v2847, 1
        %v2852 = vrot.slane %v2848, 1
        %v2853 = vsel %vm264, %v2851, %v2852
        %v2855 = vadd.f32 %v2844, %v2853
        %s2856 = sld [smem:[#allocation2 + $0x65]]
        %v2857 = vstv %s2856
        %v2858 = vmul.f32 %v2857, %v250
        %v2859 = vmul.f32 %v2857, %v252
        %v2862 = vrot.slane %v2858, 2
        %v2863 = vrot.slane %v2859, 2
        %v2864 = vsel %vm276, %v2862, %v2863
        %v2866 = vadd.f32 %v2855, %v2864
        %s2867 = sld [smem:[#allocation2 + $0x66]]
        %v2868 = vstv %s2867
        %v2869 = vmul.f32 %v2868, %v250
        %v2870 = vmul.f32 %v2868, %v251
        %2873 = vrot.lane.b32.xlu0 %v2869, 127
        %v2874 = vpop.permute.xlu0 %2873
        %2875 = vrot.lane.b32.xlu0 %v2870, 127
        %v2876 = vpop.permute.xlu0 %2875
        %v2877 = vsel %vm292, %v2874, %v2876
        %v2879 = vadd.f32 %v2866, %v2877
        %s2880 = sld [smem:[#allocation2 + $0x67]]
        %v2881 = vstv %s2880
        %v2882 = vmul.f32 %v2881, %v250
        %v2883 = vmul.f32 %v2881, %v251
        %v2884 = vmul.f32 %v2881, %v252
        %v2885 = vmul.f32 %v2881, %v253
        %v2890 = vrot.slane %v2882, 1
        %v2891 = vrot.slane %v2884, 1
        %v2892 = vsel %vm264, %v2890, %v2891
        %v2893 = vrot.slane %v2883, 1
        %v2894 = vrot.slane %v2885, 1
        %v2895 = vsel %vm264, %v2893, %v2894
        %2896 = vrot.lane.b32.xlu0 %v2892, 127
        %v2897 = vpop.permute.xlu0 %2896
        %2898 = vrot.lane.b32.xlu0 %v2895, 127
        %v2899 = vpop.permute.xlu0 %2898
        %v2900 = vsel %vm292, %v2897, %v2899
        %v2902 = vadd.f32 %v2879, %v2900
        %s2903 = sld [smem:[#allocation2 + $0x68]]
        %v2904 = vstv %s2903
        %v2905 = vmul.f32 %v2904, %v250
        %v2906 = vmul.f32 %v2904, %v251
        %v2907 = vmul.f32 %v2904, %v252
        %v2908 = vmul.f32 %v2904, %v253
        %v2913 = vrot.slane %v2905, 2
        %v2914 = vrot.slane %v2907, 2
        %v2915 = vsel %vm276, %v2913, %v2914
        %v2916 = vrot.slane %v2906, 2
        %v2917 = vrot.slane %v2908, 2
        %v2918 = vsel %vm276, %v2916, %v2917
        %2919 = vrot.lane.b32.xlu0 %v2915, 127
        %v2920 = vpop.permute.xlu0 %2919
        %2921 = vrot.lane.b32.xlu0 %v2918, 127
        %v2922 = vpop.permute.xlu0 %2921
        %v2923 = vsel %vm292, %v2920, %v2922
        %v2925 = vadd.f32 %v2902, %v2923
        %s2926 = sld [smem:[#allocation2 + $0x69]]
        %v2927 = vstv %s2926
        %v2928 = vmul.f32 %v2927, %v250
        %v2929 = vmul.f32 %v2927, %v251
        %2932 = vrot.lane.b32.xlu0 %v2928, 126
        %v2933 = vpop.permute.xlu0 %2932
        %2934 = vrot.lane.b32.xlu0 %v2929, 126
        %v2935 = vpop.permute.xlu0 %2934
        %v2936 = vsel %vm352, %v2933, %v2935
        %v2938 = vadd.f32 %v2925, %v2936
        %s2939 = sld [smem:[#allocation2 + $0x6a]]
        %v2940 = vstv %s2939
        %v2941 = vmul.f32 %v2940, %v250
        %v2942 = vmul.f32 %v2940, %v251
        %v2943 = vmul.f32 %v2940, %v252
        %v2944 = vmul.f32 %v2940, %v253
        %v2949 = vrot.slane %v2941, 1
        %v2950 = vrot.slane %v2943, 1
        %v2951 = vsel %vm264, %v2949, %v2950
        %v2952 = vrot.slane %v2942, 1
        %v2953 = vrot.slane %v2944, 1
        %v2954 = vsel %vm264, %v2952, %v2953
        %2955 = vrot.lane.b32.xlu0 %v2951, 126
        %v2956 = vpop.permute.xlu0 %2955
        %2957 = vrot.lane.b32.xlu0 %v2954, 126
        %v2958 = vpop.permute.xlu0 %2957
        %v2959 = vsel %vm352, %v2956, %v2958
        %v2961 = vadd.f32 %v2938, %v2959
        %s2962 = sld [smem:[#allocation2 + $0x6b]]
        %v2963 = vstv %s2962
        %v2964 = vmul.f32 %v2963, %v250
        %v2965 = vmul.f32 %v2963, %v251
        %v2966 = vmul.f32 %v2963, %v252
        %v2967 = vmul.f32 %v2963, %v253
        %v2972 = vrot.slane %v2964, 2
        %v2973 = vrot.slane %v2966, 2
        %v2974 = vsel %vm276, %v2972, %v2973
        %v2975 = vrot.slane %v2965, 2
        %v2976 = vrot.slane %v2967, 2
        %v2977 = vsel %vm276, %v2975, %v2976
        %2978 = vrot.lane.b32.xlu0 %v2974, 126
        %v2979 = vpop.permute.xlu0 %2978
        %2980 = vrot.lane.b32.xlu0 %v2977, 126
        %v2981 = vpop.permute.xlu0 %2980
        %v2982 = vsel %vm352, %v2979, %v2981
        %v2984 = vadd.f32 %v2961, %v2982
        %s2985 = sld [smem:[#allocation4 + $0xb]]
        %v2986 = vstv %s2985
        %v2987 = vadd.f32 %v2984, %v2986
        %v2988 = vmax.f32 %v2987, 0.0
        %v2989 = vld [vmem:[%s3 + $0x580] sm:$0xff]
        %v2990 = vld [vmem:[%s3 + $0x588] sm:$0xff]
        %v2991 = vld [vmem:[%s3 + $0x590] sm:$0xff]
        %v2992 = vld [vmem:[%s3 + $0x598] sm:$0xff]
        %v2993 = vld [vmem:[%s3 + $0x5a0] sm:$0xff]
        %v2994 = vld [vmem:[%s3 + $0x5a8] sm:$0xff]
        %v2995 = vld [vmem:[%s3 + $0x5b0] sm:$0xff]
        %v2996 = vld [vmem:[%s3 + $0x5b8] sm:$0xff]
        %v2997 = vld [vmem:[%s3 + $0x5c0] sm:$0xff]
        %v2998 = vld [vmem:[%s3 + $0x5c8] sm:$0xff]
        %v2999 = vld [vmem:[%s3 + $0x5d0] sm:$0xff]
        %v3000 = vld [vmem:[%s3 + $0x5d8] sm:$0xff]
        %v3001 = vld [vmem:[%s3 + $0x5e0] sm:$0xff]
        %v3002 = vld [vmem:[%s3 + $0x5e8] sm:$0xff]
        %v3003 = vld [vmem:[%s3 + $0x5f0] sm:$0xff]
        %v3004 = vld [vmem:[%s3 + $0x5f8] sm:$0xff]
        %3005 = vmatprep.subr.mxu0 0.0
        %3006 = vmatpush1.msra.mxu0 %v2989
        %3007 = vmatprep.subr.mxu0 0.0
        %3008 = vmatpush1.msra.mxu0 %v2990
        %3009 = vmatprep.subr.mxu0 0.0
        %3010 = vmatpush1.msra.mxu0 %v2991
        %3011 = vmatprep.subr.mxu0 0.0
        %3012 = vmatpush1.msra.mxu0 %v2992
        %3013 = vmatprep.subr.mxu0 0.0
        %3014 = vmatpush1.msra.mxu0 %v2993
        %3015 = vmatprep.subr.mxu0 0.0
        %3016 = vmatpush1.msra.mxu0 %v2994
        %3017 = vmatprep.subr.mxu0 0.0
        %3018 = vmatpush1.msra.mxu0 %v2995
        %3019 = vmatprep.subr.mxu0 0.0
        %3020 = vmatpush1.msra.mxu0 %v2996
        %3021 = vmatprep.subr.mxu0 0.0
        %3022 = vmatpush1.msra.mxu0 %v2997
        %3023 = vmatprep.subr.mxu0 0.0
        %3024 = vmatpush1.msra.mxu0 %v2998
        %3025 = vmatprep.subr.mxu0 0.0
        %3026 = vmatpush1.msra.mxu0 %v2999
        %3027 = vmatprep.subr.mxu0 0.0
        %3028 = vmatpush1.msra.mxu0 %v3000
        %3029 = vmatprep.subr.mxu0 0.0
        %3030 = vmatpush1.msra.mxu0 %v3001
        %3031 = vmatprep.subr.mxu0 0.0
        %3032 = vmatpush1.msra.mxu0 %v3002
        %3033 = vmatprep.subr.mxu0 0.0
        %3034 = vmatpush1.msra.mxu0 %v3003
        %3035 = vmatprep.subr.mxu0 0.0
        %3036 = vmatpush1.msra.mxu0 %v3004
        %3037 = vmatprep.subr.mxu0 0.0
        %3038 = vmatpush1.msra.mxu0 0.0
        %3039 = vmatprep.subr.mxu0 0.0
        %3040 = vmatpush1.msra.mxu0 0.0
        %3041 = vmatprep.subr.mxu0 0.0
        %3042 = vmatpush1.msra.mxu0 0.0
        %3043 = vmatprep.subr.mxu0 0.0
        %3044 = vmatpush1.msra.mxu0 0.0
        %3045 = vmatprep.subr.mxu0 0.0
        %3046 = vmatpush1.msra.mxu0 0.0
        %3047 = vmatprep.subr.mxu0 0.0
        %3048 = vmatpush1.msra.mxu0 0.0
        %3049 = vmatprep.subr.mxu0 0.0
        %3050 = vmatpush1.msra.mxu0 0.0
        %3051 = vmatprep.subr.mxu0 0.0
        %3052 = vmatpush1.msra.mxu0 0.0
        %3053 = vmatprep.subr.mxu0 0.0
        %3054 = vmatpush1.msra.mxu0 0.0
        %3055 = vmatprep.subr.mxu0 0.0
        %3056 = vmatpush1.msra.mxu0 0.0
        %3057 = vmatprep.subr.mxu0 0.0
        %3058 = vmatpush1.msra.mxu0 0.0
        %3059 = vmatprep.subr.mxu0 0.0
        %3060 = vmatpush1.msra.mxu0 0.0
        %3061 = vmatprep.subr.mxu0 0.0
        %3062 = vmatpush1.msra.mxu0 0.0
        %3063 = vmatprep.subr.mxu0 0.0
        %3064 = vmatpush1.msra.mxu0 0.0
        %3065 = vmatprep.subr.mxu0 0.0
        %3066 = vmatpush1.msra.mxu0 0.0
        %3067 = vmatprep.subr.mxu0 0.0
        %3068 = vmatpush1.msra.mxu0 0.0
        %3069 = vmatprep.mubr.f32.mxu0 0.0
        %3070 = vmatmul.mubr.f32.gmra.mrb[0].mxu0 %v2988
        %v3071 = vpop.f32.mrb[0].mxu0
        %v3072 = vadd.f32 0.0, %v3071
        %v3073 = vpop.f32.mrb[0].mxu0
        %3074 = vdwg.mxu0
        %v3075 = vadd.f32 %v2840, %v3072
        %s3076 = sld [smem:[#allocation2 + $0x6c]]
        %v3077 = vstv %s3076
        %v3078 = vmul.f32 %v3077, %v250
        %v3079 = vadd.f32 %v3078, 0.0
        %s3080 = sld [smem:[#allocation2 + $0x6d]]
        %v3081 = vstv %s3080
        %v3082 = vmul.f32 %v3081, %v250
        %v3083 = vmul.f32 %v3081, %v252
        %v3086 = vrot.slane %v3082, 1
        %v3087 = vrot.slane %v3083, 1
        %v3088 = vsel %vm264, %v3086, %v3087
        %v3090 = vadd.f32 %v3079, %v3088
        %s3091 = sld [smem:[#allocation2 + $0x6e]]
        %v3092 = vstv %s3091
        %v3093 = vmul.f32 %v3092, %v250
        %v3094 = vmul.f32 %v3092, %v252
        %v3097 = vrot.slane %v3093, 2
        %v3098 = vrot.slane %v3094, 2
        %v3099 = vsel %vm276, %v3097, %v3098
        %v3101 = vadd.f32 %v3090, %v3099
        %s3102 = sld [smem:[#allocation2 + $0x6f]]
        %v3103 = vstv %s3102
        %v3104 = vmul.f32 %v3103, %v250
        %v3105 = vmul.f32 %v3103, %v251
        %3108 = vrot.lane.b32.xlu0 %v3104, 127
        %v3109 = vpop.permute.xlu0 %3108
        %3110 = vrot.lane.b32.xlu0 %v3105, 127
        %v3111 = vpop.permute.xlu0 %3110
        %v3112 = vsel %vm292, %v3109, %v3111
        %v3114 = vadd.f32 %v3101, %v3112
        %s3115 = sld [smem:[#allocation2 + $0x70]]
        %v3116 = vstv %s3115
        %v3117 = vmul.f32 %v3116, %v250
        %v3118 = vmul.f32 %v3116, %v251
        %v3119 = vmul.f32 %v3116, %v252
        %v3120 = vmul.f32 %v3116, %v253
        %v3125 = vrot.slane %v3117, 1
        %v3126 = vrot.slane %v3119, 1
        %v3127 = vsel %vm264, %v3125, %v3126
        %v3128 = vrot.slane %v3118, 1
        %v3129 = vrot.slane %v3120, 1
        %v3130 = vsel %vm264, %v3128, %v3129
        %3131 = vrot.lane.b32.xlu0 %v3127, 127
        %v3132 = vpop.permute.xlu0 %3131
        %3133 = vrot.lane.b32.xlu0 %v3130, 127
        %v3134 = vpop.permute.xlu0 %3133
        %v3135 = vsel %vm292, %v3132, %v3134
        %v3137 = vadd.f32 %v3114, %v3135
        %s3138 = sld [smem:[#allocation2 + $0x71]]
        %v3139 = vstv %s3138
        %v3140 = vmul.f32 %v3139, %v250
        %v3141 = vmul.f32 %v3139, %v251
        %v3142 = vmul.f32 %v3139, %v252
        %v3143 = vmul.f32 %v3139, %v253
        %v3148 = vrot.slane %v3140, 2
        %v3149 = vrot.slane %v3142, 2
        %v3150 = vsel %vm276, %v3148, %v3149
        %v3151 = vrot.slane %v3141, 2
        %v3152 = vrot.slane %v3143, 2
        %v3153 = vsel %vm276, %v3151, %v3152
        %3154 = vrot.lane.b32.xlu0 %v3150, 127
        %v3155 = vpop.permute.xlu0 %3154
        %3156 = vrot.lane.b32.xlu0 %v3153, 127
        %v3157 = vpop.permute.xlu0 %3156
        %v3158 = vsel %vm292, %v3155, %v3157
        %v3160 = vadd.f32 %v3137, %v3158
        %s3161 = sld [smem:[#allocation2 + $0x72]]
        %v3162 = vstv %s3161
        %v3163 = vmul.f32 %v3162, %v250
        %v3164 = vmul.f32 %v3162, %v251
        %3167 = vrot.lane.b32.xlu0 %v3163, 126
        %v3168 = vpop.permute.xlu0 %3167
        %3169 = vrot.lane.b32.xlu0 %v3164, 126
        %v3170 = vpop.permute.xlu0 %3169
        %v3171 = vsel %vm352, %v3168, %v3170
        %v3173 = vadd.f32 %v3160, %v3171
        %s3174 = sld [smem:[#allocation2 + $0x73]]
        %v3175 = vstv %s3174
        %v3176 = vmul.f32 %v3175, %v250
        %v3177 = vmul.f32 %v3175, %v251
        %v3178 = vmul.f32 %v3175, %v252
        %v3179 = vmul.f32 %v3175, %v253
        %v3184 = vrot.slane %v3176, 1
        %v3185 = vrot.slane %v3178, 1
        %v3186 = vsel %vm264, %v3184, %v3185
        %v3187 = vrot.slane %v3177, 1
        %v3188 = vrot.slane %v3179, 1
        %v3189 = vsel %vm264, %v3187, %v3188
        %3190 = vrot.lane.b32.xlu0 %v3186, 126
        %v3191 = vpop.permute.xlu0 %3190
        %3192 = vrot.lane.b32.xlu0 %v3189, 126
        %v3193 = vpop.permute.xlu0 %3192
        %v3194 = vsel %vm352, %v3191, %v3193
        %v3196 = vadd.f32 %v3173, %v3194
        %s3197 = sld [smem:[#allocation2 + $0x74]]
        %v3198 = vstv %s3197
        %v3199 = vmul.f32 %v3198, %v250
        %v3200 = vmul.f32 %v3198, %v251
        %v3201 = vmul.f32 %v3198, %v252
        %v3202 = vmul.f32 %v3198, %v253
        %v3207 = vrot.slane %v3199, 2
        %v3208 = vrot.slane %v3201, 2
        %v3209 = vsel %vm276, %v3207, %v3208
        %v3210 = vrot.slane %v3200, 2
        %v3211 = vrot.slane %v3202, 2
        %v3212 = vsel %vm276, %v3210, %v3211
        %3213 = vrot.lane.b32.xlu0 %v3209, 126
        %v3214 = vpop.permute.xlu0 %3213
        %3215 = vrot.lane.b32.xlu0 %v3212, 126
        %v3216 = vpop.permute.xlu0 %3215
        %v3217 = vsel %vm352, %v3214, %v3216
        %v3219 = vadd.f32 %v3196, %v3217
        %s3220 = sld [smem:[#allocation4 + $0xc]]
        %v3221 = vstv %s3220
        %v3222 = vadd.f32 %v3219, %v3221
        %v3223 = vmax.f32 %v3222, 0.0
        %v3224 = vld [vmem:[%s3 + $0x600] sm:$0xff]
        %v3225 = vld [vmem:[%s3 + $0x608] sm:$0xff]
        %v3226 = vld [vmem:[%s3 + $0x610] sm:$0xff]
        %v3227 = vld [vmem:[%s3 + $0x618] sm:$0xff]
        %v3228 = vld [vmem:[%s3 + $0x620] sm:$0xff]
        %v3229 = vld [vmem:[%s3 + $0x628] sm:$0xff]
        %v3230 = vld [vmem:[%s3 + $0x630] sm:$0xff]
        %v3231 = vld [vmem:[%s3 + $0x638] sm:$0xff]
        %v3232 = vld [vmem:[%s3 + $0x640] sm:$0xff]
        %v3233 = vld [vmem:[%s3 + $0x648] sm:$0xff]
        %v3234 = vld [vmem:[%s3 + $0x650] sm:$0xff]
        %v3235 = vld [vmem:[%s3 + $0x658] sm:$0xff]
        %v3236 = vld [vmem:[%s3 + $0x660] sm:$0xff]
        %v3237 = vld [vmem:[%s3 + $0x668] sm:$0xff]
        %v3238 = vld [vmem:[%s3 + $0x670] sm:$0xff]
        %v3239 = vld [vmem:[%s3 + $0x678] sm:$0xff]
        %3240 = vmatprep.subr.mxu0 0.0
        %3241 = vmatpush1.msra.mxu0 %v3224
        %3242 = vmatprep.subr.mxu0 0.0
        %3243 = vmatpush1.msra.mxu0 %v3225
        %3244 = vmatprep.subr.mxu0 0.0
        %3245 = vmatpush1.msra.mxu0 %v3226
        %3246 = vmatprep.subr.mxu0 0.0
        %3247 = vmatpush1.msra.mxu0 %v3227
        %3248 = vmatprep.subr.mxu0 0.0
        %3249 = vmatpush1.msra.mxu0 %v3228
        %3250 = vmatprep.subr.mxu0 0.0
        %3251 = vmatpush1.msra.mxu0 %v3229
        %3252 = vmatprep.subr.mxu0 0.0
        %3253 = vmatpush1.msra.mxu0 %v3230
        %3254 = vmatprep.subr.mxu0 0.0
        %3255 = vmatpush1.msra.mxu0 %v3231
        %3256 = vmatprep.subr.mxu0 0.0
        %3257 = vmatpush1.msra.mxu0 %v3232
        %3258 = vmatprep.subr.mxu0 0.0
        %3259 = vmatpush1.msra.mxu0 %v3233
        %3260 = vmatprep.subr.mxu0 0.0
        %3261 = vmatpush1.msra.mxu0 %v3234
        %3262 = vmatprep.subr.mxu0 0.0
        %3263 = vmatpush1.msra.mxu0 %v3235
        %3264 = vmatprep.subr.mxu0 0.0
        %3265 = vmatpush1.msra.mxu0 %v3236
        %3266 = vmatprep.subr.mxu0 0.0
        %3267 = vmatpush1.msra.mxu0 %v3237
        %3268 = vmatprep.subr.mxu0 0.0
        %3269 = vmatpush1.msra.mxu0 %v3238
        %3270 = vmatprep.subr.mxu0 0.0
        %3271 = vmatpush1.msra.mxu0 %v3239
        %3272 = vmatprep.subr.mxu0 0.0
        %3273 = vmatpush1.msra.mxu0 0.0
        %3274 = vmatprep.subr.mxu0 0.0
        %3275 = vmatpush1.msra.mxu0 0.0
        %3276 = vmatprep.subr.mxu0 0.0
        %3277 = vmatpush1.msra.mxu0 0.0
        %3278 = vmatprep.subr.mxu0 0.0
        %3279 = vmatpush1.msra.mxu0 0.0
        %3280 = vmatprep.subr.mxu0 0.0
        %3281 = vmatpush1.msra.mxu0 0.0
        %3282 = vmatprep.subr.mxu0 0.0
        %3283 = vmatpush1.msra.mxu0 0.0
        %3284 = vmatprep.subr.mxu0 0.0
        %3285 = vmatpush1.msra.mxu0 0.0
        %3286 = vmatprep.subr.mxu0 0.0
        %3287 = vmatpush1.msra.mxu0 0.0
        %3288 = vmatprep.subr.mxu0 0.0
        %3289 = vmatpush1.msra.mxu0 0.0
        %3290 = vmatprep.subr.mxu0 0.0
        %3291 = vmatpush1.msra.mxu0 0.0
        %3292 = vmatprep.subr.mxu0 0.0
        %3293 = vmatpush1.msra.mxu0 0.0
        %3294 = vmatprep.subr.mxu0 0.0
        %3295 = vmatpush1.msra.mxu0 0.0
        %3296 = vmatprep.subr.mxu0 0.0
        %3297 = vmatpush1.msra.mxu0 0.0
        %3298 = vmatprep.subr.mxu0 0.0
        %3299 = vmatpush1.msra.mxu0 0.0
        %3300 = vmatprep.subr.mxu0 0.0
        %3301 = vmatpush1.msra.mxu0 0.0
        %3302 = vmatprep.subr.mxu0 0.0
        %3303 = vmatpush1.msra.mxu0 0.0
        %3304 = vmatprep.mubr.f32.mxu0 0.0
        %3305 = vmatmul.mubr.f32.gmra.mrb[0].mxu0 %v3223
        %v3306 = vpop.f32.mrb[0].mxu0
        %v3307 = vadd.f32 0.0, %v3306
        %v3308 = vpop.f32.mrb[0].mxu0
        %3309 = vdwg.mxu0
        %v3310 = vadd.f32 %v3075, %v3307
        %s3311 = sld [smem:[#allocation2 + $0x75]]
        %v3312 = vstv %s3311
        %v3313 = vmul.f32 %v3312, %v250
        %v3314 = vadd.f32 %v3313, 0.0
        %s3315 = sld [smem:[#allocation2 + $0x76]]
        %v3316 = vstv %s3315
        %v3317 = vmul.f32 %v3316, %v250
        %v3318 = vmul.f32 %v3316, %v252
        %v3321 = vrot.slane %v3317, 1
        %v3322 = vrot.slane %v3318, 1
        %v3323 = vsel %vm264, %v3321, %v3322
        %v3325 = vadd.f32 %v3314, %v3323
        %s3326 = sld [smem:[#allocation2 + $0x77]]
        %v3327 = vstv %s3326
        %v3328 = vmul.f32 %v3327, %v250
        %v3329 = vmul.f32 %v3327, %v252
        %v3332 = vrot.slane %v3328, 2
        %v3333 = vrot.slane %v3329, 2
        %v3334 = vsel %vm276, %v3332, %v3333
        %v3336 = vadd.f32 %v3325, %v3334
        %s3337 = sld [smem:[#allocation2 + $0x78]]
        %v3338 = vstv %s3337
        %v3339 = vmul.f32 %v3338, %v250
        %v3340 = vmul.f32 %v3338, %v251
        %3343 = vrot.lane.b32.xlu0 %v3339, 127
        %v3344 = vpop.permute.xlu0 %3343
        %3345 = vrot.lane.b32.xlu0 %v3340, 127
        %v3346 = vpop.permute.xlu0 %3345
        %v3347 = vsel %vm292, %v3344, %v3346
        %v3349 = vadd.f32 %v3336, %v3347
        %s3350 = sld [smem:[#allocation2 + $0x79]]
        %v3351 = vstv %s3350
        %v3352 = vmul.f32 %v3351, %v250
        %v3353 = vmul.f32 %v3351, %v251
        %v3354 = vmul.f32 %v3351, %v252
        %v3355 = vmul.f32 %v3351, %v253
        %v3360 = vrot.slane %v3352, 1
        %v3361 = vrot.slane %v3354, 1
        %v3362 = vsel %vm264, %v3360, %v3361
        %v3363 = vrot.slane %v3353, 1
        %v3364 = vrot.slane %v3355, 1
        %v3365 = vsel %vm264, %v3363, %v3364
        %3366 = vrot.lane.b32.xlu0 %v3362, 127
        %v3367 = vpop.permute.xlu0 %3366
        %3368 = vrot.lane.b32.xlu0 %v3365, 127
        %v3369 = vpop.permute.xlu0 %3368
        %v3370 = vsel %vm292, %v3367, %v3369
        %v3372 = vadd.f32 %v3349, %v3370
        %s3373 = sld [smem:[#allocation2 + $0x7a]]
        %v3374 = vstv %s3373
        %v3375 = vmul.f32 %v3374, %v250
        %v3376 = vmul.f32 %v3374, %v251
        %v3377 = vmul.f32 %v3374, %v252
        %v3378 = vmul.f32 %v3374, %v253
        %v3383 = vrot.slane %v3375, 2
        %v3384 = vrot.slane %v3377, 2
        %v3385 = vsel %vm276, %v3383, %v3384
        %v3386 = vrot.slane %v3376, 2
        %v3387 = vrot.slane %v3378, 2
        %v3388 = vsel %vm276, %v3386, %v3387
        %3389 = vrot.lane.b32.xlu0 %v3385, 127
        %v3390 = vpop.permute.xlu0 %3389
        %3391 = vrot.lane.b32.xlu0 %v3388, 127
        %v3392 = vpop.permute.xlu0 %3391
        %v3393 = vsel %vm292, %v3390, %v3392
        %v3395 = vadd.f32 %v3372, %v3393
        %s3396 = sld [smem:[#allocation2 + $0x7b]]
        %v3397 = vstv %s3396
        %v3398 = vmul.f32 %v3397, %v250
        %v3399 = vmul.f32 %v3397, %v251
        %3402 = vrot.lane.b32.xlu0 %v3398, 126
        %v3403 = vpop.permute.xlu0 %3402
        %3404 = vrot.lane.b32.xlu0 %v3399, 126
        %v3405 = vpop.permute.xlu0 %3404
        %v3406 = vsel %vm352, %v3403, %v3405
        %v3408 = vadd.f32 %v3395, %v3406
        %s3409 = sld [smem:[#allocation2 + $0x7c]]
        %v3410 = vstv %s3409
        %v3411 = vmul.f32 %v3410, %v250
        %v3412 = vmul.f32 %v3410, %v251
        %v3413 = vmul.f32 %v3410, %v252
        %v3414 = vmul.f32 %v3410, %v253
        %v3419 = vrot.slane %v3411, 1
        %v3420 = vrot.slane %v3413, 1
        %v3421 = vsel %vm264, %v3419, %v3420
        %v3422 = vrot.slane %v3412, 1
        %v3423 = vrot.slane %v3414, 1
        %v3424 = vsel %vm264, %v3422, %v3423
        %3425 = vrot.lane.b32.xlu0 %v3421, 126
        %v3426 = vpop.permute.xlu0 %3425
        %3427 = vrot.lane.b32.xlu0 %v3424, 126
        %v3428 = vpop.permute.xlu0 %3427
        %v3429 = vsel %vm352, %v3426, %v3428
        %v3431 = vadd.f32 %v3408, %v3429
        %s3432 = sld [smem:[#allocation2 + $0x7d]]
        %v3433 = vstv %s3432
        %v3434 = vmul.f32 %v3433, %v250
        %v3435 = vmul.f32 %v3433, %v251
        %v3436 = vmul.f32 %v3433, %v252
        %v3437 = vmul.f32 %v3433, %v253
        %v3442 = vrot.slane %v3434, 2
        %v3443 = vrot.slane %v3436, 2
        %v3444 = vsel %vm276, %v3442, %v3443
        %v3445 = vrot.slane %v3435, 2
        %v3446 = vrot.slane %v3437, 2
        %v3447 = vsel %vm276, %v3445, %v3446
        %3448 = vrot.lane.b32.xlu0 %v3444, 126
        %v3449 = vpop.permute.xlu0 %3448
        %3450 = vrot.lane.b32.xlu0 %v3447, 126
        %v3451 = vpop.permute.xlu0 %3450
        %v3452 = vsel %vm352, %v3449, %v3451
        %v3454 = vadd.f32 %v3431, %v3452
        %s3455 = sld [smem:[#allocation4 + $0xd]]
        %v3456 = vstv %s3455
        %v3457 = vadd.f32 %v3454, %v3456
        %v3458 = vmax.f32 %v3457, 0.0
        %v3459 = vld [vmem:[%s3 + $0x680] sm:$0xff]
        %v3460 = vld [vmem:[%s3 + $0x688] sm:$0xff]
        %v3461 = vld [vmem:[%s3 + $0x690] sm:$0xff]
        %v3462 = vld [vmem:[%s3 + $0x698] sm:$0xff]
        %v3463 = vld [vmem:[%s3 + $0x6a0] sm:$0xff]
        %v3464 = vld [vmem:[%s3 + $0x6a8] sm:$0xff]
        %v3465 = vld [vmem:[%s3 + $0x6b0] sm:$0xff]
        %v3466 = vld [vmem:[%s3 + $0x6b8] sm:$0xff]
        %v3467 = vld [vmem:[%s3 + $0x6c0] sm:$0xff]
        %v3468 = vld [vmem:[%s3 + $0x6c8] sm:$0xff]
        %v3469 = vld [vmem:[%s3 + $0x6d0] sm:$0xff]
        %v3470 = vld [vmem:[%s3 + $0x6d8] sm:$0xff]
        %v3471 = vld [vmem:[%s3 + $0x6e0] sm:$0xff]
        %v3472 = vld [vmem:[%s3 + $0x6e8] sm:$0xff]
        %v3473 = vld [vmem:[%s3 + $0x6f0] sm:$0xff]
        %v3474 = vld [vmem:[%s3 + $0x6f8] sm:$0xff]
        %3475 = vmatprep.subr.mxu0 0.0
        %3476 = vmatpush1.msra.mxu0 %v3459
        %3477 = vmatprep.subr.mxu0 0.0
        %3478 = vmatpush1.msra.mxu0 %v3460
        %3479 = vmatprep.subr.mxu0 0.0
        %3480 = vmatpush1.msra.mxu0 %v3461
        %3481 = vmatprep.subr.mxu0 0.0
        %3482 = vmatpush1.msra.mxu0 %v3462
        %3483 = vmatprep.subr.mxu0 0.0
        %3484 = vmatpush1.msra.mxu0 %v3463
        %3485 = vmatprep.subr.mxu0 0.0
        %3486 = vmatpush1.msra.mxu0 %v3464
        %3487 = vmatprep.subr.mxu0 0.0
        %3488 = vmatpush1.msra.mxu0 %v3465
        %3489 = vmatprep.subr.mxu0 0.0
        %3490 = vmatpush1.msra.mxu0 %v3466
        %3491 = vmatprep.subr.mxu0 0.0
        %3492 = vmatpush1.msra.mxu0 %v3467
        %3493 = vmatprep.subr.mxu0 0.0
        %3494 = vmatpush1.msra.mxu0 %v3468
        %3495 = vmatprep.subr.mxu0 0.0
        %3496 = vmatpush1.msra.mxu0 %v3469
        %3497 = vmatprep.subr.mxu0 0.0
        %3498 = vmatpush1.msra.mxu0 %v3470
        %3499 = vmatprep.subr.mxu0 0.0
        %3500 = vmatpush1.msra.mxu0 %v3471
        %3501 = vmatprep.subr.mxu0 0.0
        %3502 = vmatpush1.msra.mxu0 %v3472
        %3503 = vmatprep.subr.mxu0 0.0
        %3504 = vmatpush1.msra.mxu0 %v3473
        %3505 = vmatprep.subr.mxu0 0.0
        %3506 = vmatpush1.msra.mxu0 %v3474
        %3507 = vmatprep.subr.mxu0 0.0
        %3508 = vmatpush1.msra.mxu0 0.0
        %3509 = vmatprep.subr.mxu0 0.0
        %3510 = vmatpush1.msra.mxu0 0.0
        %3511 = vmatprep.subr.mxu0 0.0
        %3512 = vmatpush1.msra.mxu0 0.0
        %3513 = vmatprep.subr.mxu0 0.0
        %3514 = vmatpush1.msra.mxu0 0.0
        %3515 = vmatprep.subr.mxu0 0.0
        %3516 = vmatpush1.msra.mxu0 0.0
        %3517 = vmatprep.subr.mxu0 0.0
        %3518 = vmatpush1.msra.mxu0 0.0
        %3519 = vmatprep.subr.mxu0 0.0
        %3520 = vmatpush1.msra.mxu0 0.0
        %3521 = vmatprep.subr.mxu0 0.0
        %3522 = vmatpush1.msra.mxu0 0.0
        %3523 = vmatprep.subr.mxu0 0.0
        %3524 = vmatpush1.msra.mxu0 0.0
        %3525 = vmatprep.subr.mxu0 0.0
        %3526 = vmatpush1.msra.mxu0 0.0
        %3527 = vmatprep.subr.mxu0 0.0
        %3528 = vmatpush1.msra.mxu0 0.0
        %3529 = vmatprep.subr.mxu0 0.0
        %3530 = vmatpush1.msra.mxu0 0.0
        %3531 = vmatprep.subr.mxu0 0.0
        %3532 = vmatpush1.msra.mxu0 0.0
        %3533 = vmatprep.subr.mxu0 0.0
        %3534 = vmatpush1.msra.mxu0 0.0
        %3535 = vmatprep.subr.mxu0 0.0
        %3536 = vmatpush1.msra.mxu0 0.0
        %3537 = vmatprep.subr.mxu0 0.0
        %3538 = vmatpush1.msra.mxu0 0.0
        %3539 = vmatprep.mubr.f32.mxu0 0.0
        %3540 = vmatmul.mubr.f32.gmra.mrb[0].mxu0 %v3458
        %v3541 = vpop.f32.mrb[0].mxu0
        %v3542 = vadd.f32 0.0, %v3541
        %v3543 = vpop.f32.mrb[0].mxu0
        %3544 = vdwg.mxu0
        %v3545 = vadd.f32 %v3310, %v3542
        %s3546 = sld [smem:[#allocation2 + $0x7e]]
        %v3547 = vstv %s3546
        %v3548 = vmul.f32 %v3547, %v250
        %v3549 = vadd.f32 %v3548, 0.0
        %s3550 = sld [smem:[#allocation2 + $0x7f]]
        %v3551 = vstv %s3550
        %v3552 = vmul.f32 %v3551, %v250
        %v3553 = vmul.f32 %v3551, %v252
        %v3556 = vrot.slane %v3552, 1
        %v3557 = vrot.slane %v3553, 1
        %v3558 = vsel %vm264, %v3556, %v3557
        %v3560 = vadd.f32 %v3549, %v3558
        %s3561 = sld [smem:[#allocation2 + $0x80]]
        %v3562 = vstv %s3561
        %v3563 = vmul.f32 %v3562, %v250
        %v3564 = vmul.f32 %v3562, %v252
        %v3567 = vrot.slane %v3563, 2
        %v3568 = vrot.slane %v3564, 2
        %v3569 = vsel %vm276, %v3567, %v3568
        %v3571 = vadd.f32 %v3560, %v3569
        %s3572 = sld [smem:[#allocation2 + $0x81]]
        %v3573 = vstv %s3572
        %v3574 = vmul.f32 %v3573, %v250
        %v3575 = vmul.f32 %v3573, %v251
        %3578 = vrot.lane.b32.xlu0 %v3574, 127
        %v3579 = vpop.permute.xlu0 %3578
        %3580 = vrot.lane.b32.xlu0 %v3575, 127
        %v3581 = vpop.permute.xlu0 %3580
        %v3582 = vsel %vm292, %v3579, %v3581
        %v3584 = vadd.f32 %v3571, %v3582
        %s3585 = sld [smem:[#allocation2 + $0x82]]
        %v3586 = vstv %s3585
        %v3587 = vmul.f32 %v3586, %v250
        %v3588 = vmul.f32 %v3586, %v251
        %v3589 = vmul.f32 %v3586, %v252
        %v3590 = vmul.f32 %v3586, %v253
        %v3595 = vrot.slane %v3587, 1
        %v3596 = vrot.slane %v3589, 1
        %v3597 = vsel %vm264, %v3595, %v3596
        %v3598 = vrot.slane %v3588, 1
        %v3599 = vrot.slane %v3590, 1
        %v3600 = vsel %vm264, %v3598, %v3599
        %3601 = vrot.lane.b32.xlu0 %v3597, 127
        %v3602 = vpop.permute.xlu0 %3601
        %3603 = vrot.lane.b32.xlu0 %v3600, 127
        %v3604 = vpop.permute.xlu0 %3603
        %v3605 = vsel %vm292, %v3602, %v3604
        %v3607 = vadd.f32 %v3584, %v3605
        %s3608 = sld [smem:[#allocation2 + $0x83]]
        %v3609 = vstv %s3608
        %v3610 = vmul.f32 %v3609, %v250
        %v3611 = vmul.f32 %v3609, %v251
        %v3612 = vmul.f32 %v3609, %v252
        %v3613 = vmul.f32 %v3609, %v253
        %v3618 = vrot.slane %v3610, 2
        %v3619 = vrot.slane %v3612, 2
        %v3620 = vsel %vm276, %v3618, %v3619
        %v3621 = vrot.slane %v3611, 2
        %v3622 = vrot.slane %v3613, 2
        %v3623 = vsel %vm276, %v3621, %v3622
        %3624 = vrot.lane.b32.xlu0 %v3620, 127
        %v3625 = vpop.permute.xlu0 %3624
        %3626 = vrot.lane.b32.xlu0 %v3623, 127
        %v3627 = vpop.permute.xlu0 %3626
        %v3628 = vsel %vm292, %v3625, %v3627
        %v3630 = vadd.f32 %v3607, %v3628
        %s3631 = sld [smem:[#allocation2 + $0x84]]
        %v3632 = vstv %s3631
        %v3633 = vmul.f32 %v3632, %v250
        %v3634 = vmul.f32 %v3632, %v251
        %3637 = vrot.lane.b32.xlu0 %v3633, 126
        %v3638 = vpop.permute.xlu0 %3637
        %3639 = vrot.lane.b32.xlu0 %v3634, 126
        %v3640 = vpop.permute.xlu0 %3639
        %v3641 = vsel %vm352, %v3638, %v3640
        %v3643 = vadd.f32 %v3630, %v3641
        %s3644 = sld [smem:[#allocation2 + $0x85]]
        %v3645 = vstv %s3644
        %v3646 = vmul.f32 %v3645, %v250
        %v3647 = vmul.f32 %v3645, %v251
        %v3648 = vmul.f32 %v3645, %v252
        %v3649 = vmul.f32 %v3645, %v253
        %v3654 = vrot.slane %v3646, 1
        %v3655 = vrot.slane %v3648, 1
        %v3656 = vsel %vm264, %v3654, %v3655
        %v3657 = vrot.slane %v3647, 1
        %v3658 = vrot.slane %v3649, 1
        %v3659 = vsel %vm264, %v3657, %v3658
        %3660 = vrot.lane.b32.xlu0 %v3656, 126
        %v3661 = vpop.permute.xlu0 %3660
        %3662 = vrot.lane.b32.xlu0 %v3659, 126
        %v3663 = vpop.permute.xlu0 %3662
        %v3664 = vsel %vm352, %v3661, %v3663
        %v3666 = vadd.f32 %v3643, %v3664
        %s3667 = sld [smem:[#allocation2 + $0x86]]
        %v3668 = vstv %s3667
        %v3669 = vmul.f32 %v3668, %v250
        %v3670 = vmul.f32 %v3668, %v251
        %v3671 = vmul.f32 %v3668, %v252
        %v3672 = vmul.f32 %v3668, %v253
        %v3677 = vrot.slane %v3669, 2
        %v3678 = vrot.slane %v3671, 2
        %v3679 = vsel %vm276, %v3677, %v3678
        %v3680 = vrot.slane %v3670, 2
        %v3681 = vrot.slane %v3672, 2
        %v3682 = vsel %vm276, %v3680, %v3681
        %3683 = vrot.lane.b32.xlu0 %v3679, 126
        %v3684 = vpop.permute.xlu0 %3683
        %3685 = vrot.lane.b32.xlu0 %v3682, 126
        %v3686 = vpop.permute.xlu0 %3685
        %v3687 = vsel %vm352, %v3684, %v3686
        %v3689 = vadd.f32 %v3666, %v3687
        %s3690 = sld [smem:[#allocation4 + $0xe]]
        %v3691 = vstv %s3690
        %v3692 = vadd.f32 %v3689, %v3691
        %v3693 = vmax.f32 %v3692, 0.0
        %v3694 = vld [vmem:[%s3 + $0x700] sm:$0xff]
        %v3695 = vld [vmem:[%s3 + $0x708] sm:$0xff]
        %v3696 = vld [vmem:[%s3 + $0x710] sm:$0xff]
        %v3697 = vld [vmem:[%s3 + $0x718] sm:$0xff]
        %v3698 = vld [vmem:[%s3 + $0x720] sm:$0xff]
        %v3699 = vld [vmem:[%s3 + $0x728] sm:$0xff]
        %v3700 = vld [vmem:[%s3 + $0x730] sm:$0xff]
        %v3701 = vld [vmem:[%s3 + $0x738] sm:$0xff]
        %v3702 = vld [vmem:[%s3 + $0x740] sm:$0xff]
        %v3703 = vld [vmem:[%s3 + $0x748] sm:$0xff]
        %v3704 = vld [vmem:[%s3 + $0x750] sm:$0xff]
        %v3705 = vld [vmem:[%s3 + $0x758] sm:$0xff]
        %v3706 = vld [vmem:[%s3 + $0x760] sm:$0xff]
        %v3707 = vld [vmem:[%s3 + $0x768] sm:$0xff]
        %v3708 = vld [vmem:[%s3 + $0x770] sm:$0xff]
        %v3709 = vld [vmem:[%s3 + $0x778] sm:$0xff]
        %3710 = vmatprep.subr.mxu0 0.0
        %3711 = vmatpush1.msra.mxu0 %v3694
        %3712 = vmatprep.subr.mxu0 0.0
        %3713 = vmatpush1.msra.mxu0 %v3695
        %3714 = vmatprep.subr.mxu0 0.0
        %3715 = vmatpush1.msra.mxu0 %v3696
        %3716 = vmatprep.subr.mxu0 0.0
        %3717 = vmatpush1.msra.mxu0 %v3697
        %3718 = vmatprep.subr.mxu0 0.0
        %3719 = vmatpush1.msra.mxu0 %v3698
        %3720 = vmatprep.subr.mxu0 0.0
        %3721 = vmatpush1.msra.mxu0 %v3699
        %3722 = vmatprep.subr.mxu0 0.0
        %3723 = vmatpush1.msra.mxu0 %v3700
        %3724 = vmatprep.subr.mxu0 0.0
        %3725 = vmatpush1.msra.mxu0 %v3701
        %3726 = vmatprep.subr.mxu0 0.0
        %3727 = vmatpush1.msra.mxu0 %v3702
        %3728 = vmatprep.subr.mxu0 0.0
        %3729 = vmatpush1.msra.mxu0 %v3703
        %3730 = vmatprep.subr.mxu0 0.0
        %3731 = vmatpush1.msra.mxu0 %v3704
        %3732 = vmatprep.subr.mxu0 0.0
        %3733 = vmatpush1.msra.mxu0 %v3705
        %3734 = vmatprep.subr.mxu0 0.0
        %3735 = vmatpush1.msra.mxu0 %v3706
        %3736 = vmatprep.subr.mxu0 0.0
        %3737 = vmatpush1.msra.mxu0 %v3707
        %3738 = vmatprep.subr.mxu0 0.0
        %3739 = vmatpush1.msra.mxu0 %v3708
        %3740 = vmatprep.subr.mxu0 0.0
        %3741 = vmatpush1.msra.mxu0 %v3709
        %3742 = vmatprep.subr.mxu0 0.0
        %3743 = vmatpush1.msra.mxu0 0.0
        %3744 = vmatprep.subr.mxu0 0.0
        %3745 = vmatpush1.msra.mxu0 0.0
        %3746 = vmatprep.subr.mxu0 0.0
        %3747 = vmatpush1.msra.mxu0 0.0
        %3748 = vmatprep.subr.mxu0 0.0
        %3749 = vmatpush1.msra.mxu0 0.0
        %3750 = vmatprep.subr.mxu0 0.0
        %3751 = vmatpush1.msra.mxu0 0.0
        %3752 = vmatprep.subr.mxu0 0.0
        %3753 = vmatpush1.msra.mxu0 0.0
        %3754 = vmatprep.subr.mxu0 0.0
        %3755 = vmatpush1.msra.mxu0 0.0
        %3756 = vmatprep.subr.mxu0 0.0
        %3757 = vmatpush1.msra.mxu0 0.0
        %3758 = vmatprep.subr.mxu0 0.0
        %3759 = vmatpush1.msra.mxu0 0.0
        %3760 = vmatprep.subr.mxu0 0.0
        %3761 = vmatpush1.msra.mxu0 0.0
        %3762 = vmatprep.subr.mxu0 0.0
        %3763 = vmatpush1.msra.mxu0 0.0
        %3764 = vmatprep.subr.mxu0 0.0
        %3765 = vmatpush1.msra.mxu0 0.0
        %3766 = vmatprep.subr.mxu0 0.0
        %3767 = vmatpush1.msra.mxu0 0.0
        %3768 = vmatprep.subr.mxu0 0.0
        %3769 = vmatpush1.msra.mxu0 0.0
        %3770 = vmatprep.subr.mxu0 0.0
        %3771 = vmatpush1.msra.mxu0 0.0
        %3772 = vmatprep.subr.mxu0 0.0
        %3773 = vmatpush1.msra.mxu0 0.0
        %3774 = vmatprep.mubr.f32.mxu0 0.0
        %3775 = vmatmul.mubr.f32.gmra.mrb[0].mxu0 %v3693
        %v3776 = vpop.f32.mrb[0].mxu0
        %v3777 = vadd.f32 0.0, %v3776
        %v3778 = vpop.f32.mrb[0].mxu0
        %3779 = vdwg.mxu0
        %v3780 = vadd.f32 %v3545, %v3777
        %s3781 = sld [smem:[#allocation2 + $0x87]]
        %v3782 = vstv %s3781
        %v3783 = vmul.f32 %v3782, %v250
        %v3784 = vadd.f32 %v3783, 0.0
        %s3785 = sld [smem:[#allocation2 + $0x88]]
        %v3786 = vstv %s3785
        %v3787 = vmul.f32 %v3786, %v250
        %v3788 = vmul.f32 %v3786, %v252
        %v3791 = vrot.slane %v3787, 1
        %v3792 = vrot.slane %v3788, 1
        %v3793 = vsel %vm264, %v3791, %v3792
        %v3795 = vadd.f32 %v3784, %v3793
        %s3796 = sld [smem:[#allocation2 + $0x89]]
        %v3797 = vstv %s3796
        %v3798 = vmul.f32 %v3797, %v250
        %v3799 = vmul.f32 %v3797, %v252
        %v3802 = vrot.slane %v3798, 2
        %v3803 = vrot.slane %v3799, 2
        %v3804 = vsel %vm276, %v3802, %v3803
        %v3806 = vadd.f32 %v3795, %v3804
        %s3807 = sld [smem:[#allocation2 + $0x8a]]
        %v3808 = vstv %s3807
        %v3809 = vmul.f32 %v3808, %v250
        %v3810 = vmul.f32 %v3808, %v251
        %3813 = vrot.lane.b32.xlu0 %v3809, 127
        %v3814 = vpop.permute.xlu0 %3813
        %3815 = vrot.lane.b32.xlu0 %v3810, 127
        %v3816 = vpop.permute.xlu0 %3815
        %v3817 = vsel %vm292, %v3814, %v3816
        %v3819 = vadd.f32 %v3806, %v3817
        %s3820 = sld [smem:[#allocation2 + $0x8b]]
        %v3821 = vstv %s3820
        %v3822 = vmul.f32 %v3821, %v250
        %v3823 = vmul.f32 %v3821, %v251
        %v3824 = vmul.f32 %v3821, %v252
        %v3825 = vmul.f32 %v3821, %v253
        %v3830 = vrot.slane %v3822, 1
        %v3831 = vrot.slane %v3824, 1
        %v3832 = vsel %vm264, %v3830, %v3831
        %v3833 = vrot.slane %v3823, 1
        %v3834 = vrot.slane %v3825, 1
        %v3835 = vsel %vm264, %v3833, %v3834
        %3836 = vrot.lane.b32.xlu0 %v3832, 127
        %v3837 = vpop.permute.xlu0 %3836
        %3838 = vrot.lane.b32.xlu0 %v3835, 127
        %v3839 = vpop.permute.xlu0 %3838
        %v3840 = vsel %vm292, %v3837, %v3839
        %v3842 = vadd.f32 %v3819, %v3840
        %s3843 = sld [smem:[#allocation2 + $0x8c]]
        %v3844 = vstv %s3843
        %v3845 = vmul.f32 %v3844, %v250
        %v3846 = vmul.f32 %v3844, %v251
        %v3847 = vmul.f32 %v3844, %v252
        %v3848 = vmul.f32 %v3844, %v253
        %v3853 = vrot.slane %v3845, 2
        %v3854 = vrot.slane %v3847, 2
        %v3855 = vsel %vm276, %v3853, %v3854
        %v3856 = vrot.slane %v3846, 2
        %v3857 = vrot.slane %v3848, 2
        %v3858 = vsel %vm276, %v3856, %v3857
        %3859 = vrot.lane.b32.xlu0 %v3855, 127
        %v3860 = vpop.permute.xlu0 %3859
        %3861 = vrot.lane.b32.xlu0 %v3858, 127
        %v3862 = vpop.permute.xlu0 %3861
        %v3863 = vsel %vm292, %v3860, %v3862
        %v3865 = vadd.f32 %v3842, %v3863
        %s3866 = sld [smem:[#allocation2 + $0x8d]]
        %v3867 = vstv %s3866
        %v3868 = vmul.f32 %v3867, %v250
        %v3869 = vmul.f32 %v3867, %v251
        %3872 = vrot.lane.b32.xlu0 %v3868, 126
        %v3873 = vpop.permute.xlu0 %3872
        %3874 = vrot.lane.b32.xlu0 %v3869, 126
        %v3875 = vpop.permute.xlu0 %3874
        %v3876 = vsel %vm352, %v3873, %v3875
        %v3878 = vadd.f32 %v3865, %v3876
        %s3879 = sld [smem:[#allocation2 + $0x8e]]
        %v3880 = vstv %s3879
        %v3881 = vmul.f32 %v3880, %v250
        %v3882 = vmul.f32 %v3880, %v251
        %v3883 = vmul.f32 %v3880, %v252
        %v3884 = vmul.f32 %v3880, %v253
        %v3889 = vrot.slane %v3881, 1
        %v3890 = vrot.slane %v3883, 1
        %v3891 = vsel %vm264, %v3889, %v3890
        %v3892 = vrot.slane %v3882, 1
        %v3893 = vrot.slane %v3884, 1
        %v3894 = vsel %vm264, %v3892, %v3893
        %3895 = vrot.lane.b32.xlu0 %v3891, 126
        %v3896 = vpop.permute.xlu0 %3895
        %3897 = vrot.lane.b32.xlu0 %v3894, 126
        %v3898 = vpop.permute.xlu0 %3897
        %v3899 = vsel %vm352, %v3896, %v3898
        %v3901 = vadd.f32 %v3878, %v3899
        %s3902 = sld [smem:[#allocation2 + $0x8f]]
        %v3903 = vstv %s3902
        %v3904 = vmul.f32 %v3903, %v250
        %v3905 = vmul.f32 %v3903, %v251
        %v3906 = vmul.f32 %v3903, %v252
        %v3907 = vmul.f32 %v3903, %v253
        %v3912 = vrot.slane %v3904, 2
        %v3913 = vrot.slane %v3906, 2
        %v3914 = vsel %vm276, %v3912, %v3913
        %v3915 = vrot.slane %v3905, 2
        %v3916 = vrot.slane %v3907, 2
        %v3917 = vsel %vm276, %v3915, %v3916
        %3918 = vrot.lane.b32.xlu0 %v3914, 126
        %v3919 = vpop.permute.xlu0 %3918
        %3920 = vrot.lane.b32.xlu0 %v3917, 126
        %v3921 = vpop.permute.xlu0 %3920
        %v3922 = vsel %vm352, %v3919, %v3921
        %v3924 = vadd.f32 %v3901, %v3922
        %s3925 = sld [smem:[#allocation4 + $0xf]]
        %v3926 = vstv %s3925
        %v3927 = vadd.f32 %v3924, %v3926
        %v3928 = vmax.f32 %v3927, 0.0
        %v3929 = vld [vmem:[%s3 + $0x780] sm:$0xff]
        %v3930 = vld [vmem:[%s3 + $0x788] sm:$0xff]
        %v3931 = vld [vmem:[%s3 + $0x790] sm:$0xff]
        %v3932 = vld [vmem:[%s3 + $0x798] sm:$0xff]
        %v3933 = vld [vmem:[%s3 + $0x7a0] sm:$0xff]
        %v3934 = vld [vmem:[%s3 + $0x7a8] sm:$0xff]
        %v3935 = vld [vmem:[%s3 + $0x7b0] sm:$0xff]
        %v3936 = vld [vmem:[%s3 + $0x7b8] sm:$0xff]
        %v3937 = vld [vmem:[%s3 + $0x7c0] sm:$0xff]
        %v3938 = vld [vmem:[%s3 + $0x7c8] sm:$0xff]
        %v3939 = vld [vmem:[%s3 + $0x7d0] sm:$0xff]
        %v3940 = vld [vmem:[%s3 + $0x7d8] sm:$0xff]
        %v3941 = vld [vmem:[%s3 + $0x7e0] sm:$0xff]
        %v3942 = vld [vmem:[%s3 + $0x7e8] sm:$0xff]
        %v3943 = vld [vmem:[%s3 + $0x7f0] sm:$0xff]
        %v3944 = vld [vmem:[%s3 + $0x7f8] sm:$0xff]
        %3945 = vmatprep.subr.mxu0 0.0
        %3946 = vmatpush1.msra.mxu0 %v3929
        %3947 = vmatprep.subr.mxu0 0.0
        %3948 = vmatpush1.msra.mxu0 %v3930
        %3949 = vmatprep.subr.mxu0 0.0
        %3950 = vmatpush1.msra.mxu0 %v3931
        %3951 = vmatprep.subr.mxu0 0.0
        %3952 = vmatpush1.msra.mxu0 %v3932
        %3953 = vmatprep.subr.mxu0 0.0
        %3954 = vmatpush1.msra.mxu0 %v3933
        %3955 = vmatprep.subr.mxu0 0.0
        %3956 = vmatpush1.msra.mxu0 %v3934
        %3957 = vmatprep.subr.mxu0 0.0
        %3958 = vmatpush1.msra.mxu0 %v3935
        %3959 = vmatprep.subr.mxu0 0.0
        %3960 = vmatpush1.msra.mxu0 %v3936
        %3961 = vmatprep.subr.mxu0 0.0
        %3962 = vmatpush1.msra.mxu0 %v3937
        %3963 = vmatprep.subr.mxu0 0.0
        %3964 = vmatpush1.msra.mxu0 %v3938
        %3965 = vmatprep.subr.mxu0 0.0
        %3966 = vmatpush1.msra.mxu0 %v3939
        %3967 = vmatprep.subr.mxu0 0.0
        %3968 = vmatpush1.msra.mxu0 %v3940
        %3969 = vmatprep.subr.mxu0 0.0
        %3970 = vmatpush1.msra.mxu0 %v3941
        %3971 = vmatprep.subr.mxu0 0.0
        %3972 = vmatpush1.msra.mxu0 %v3942
        %3973 = vmatprep.subr.mxu0 0.0
        %3974 = vmatpush1.msra.mxu0 %v3943
        %3975 = vmatprep.subr.mxu0 0.0
        %3976 = vmatpush1.msra.mxu0 %v3944
        %3977 = vmatprep.subr.mxu0 0.0
        %3978 = vmatpush1.msra.mxu0 0.0
        %3979 = vmatprep.subr.mxu0 0.0
        %3980 = vmatpush1.msra.mxu0 0.0
        %3981 = vmatprep.subr.mxu0 0.0
        %3982 = vmatpush1.msra.mxu0 0.0
        %3983 = vmatprep.subr.mxu0 0.0
        %3984 = vmatpush1.msra.mxu0 0.0
        %3985 = vmatprep.subr.mxu0 0.0
        %3986 = vmatpush1.msra.mxu0 0.0
        %3987 = vmatprep.subr.mxu0 0.0
        %3988 = vmatpush1.msra.mxu0 0.0
        %3989 = vmatprep.subr.mxu0 0.0
        %3990 = vmatpush1.msra.mxu0 0.0
        %3991 = vmatprep.subr.mxu0 0.0
        %3992 = vmatpush1.msra.mxu0 0.0
        %3993 = vmatprep.subr.mxu0 0.0
        %3994 = vmatpush1.msra.mxu0 0.0
        %3995 = vmatprep.subr.mxu0 0.0
        %3996 = vmatpush1.msra.mxu0 0.0
        %3997 = vmatprep.subr.mxu0 0.0
        %3998 = vmatpush1.msra.mxu0 0.0
        %3999 = vmatprep.subr.mxu0 0.0
        %4000 = vmatpush1.msra.mxu0 0.0
        %4001 = vmatprep.subr.mxu0 0.0
        %4002 = vmatpush1.msra.mxu0 0.0
        %4003 = vmatprep.subr.mxu0 0.0
        %4004 = vmatpush1.msra.mxu0 0.0
        %4005 = vmatprep.subr.mxu0 0.0
        %4006 = vmatpush1.msra.mxu0 0.0
        %4007 = vmatprep.subr.mxu0 0.0
        %4008 = vmatpush1.msra.mxu0 0.0
        %4009 = vmatprep.mubr.f32.mxu0 0.0
        %4010 = vmatmul.mubr.f32.gmra.mrb[0].mxu0 %v3928
        %v4011 = vpop.f32.mrb[0].mxu0
        %v4012 = vadd.f32 0.0, %v4011
        %v4013 = vpop.f32.mrb[0].mxu0
        %4014 = vdwg.mxu0
        %v4015 = vadd.f32 %v3780, %v4012
        %v4016 = vld [vmem:[%s4] sm:$0x1]
        %v4018 = vlaneseq
        %v4019 = vshrl.u32 %v4018, 7
        %v4020 = vsub.s32 0, %v4019
        %v4021 = vrot.slane %v4016, %v4020
        %v4023 = vadd.f32 %v4015, %v4021
        %4024 = vst [vmem:[%s249] sm:$0xff] %v4023
        %p4025 = scmp.lt.s32.totalorder %s18, 1
        %s4026 = scalar_select %p4025, %s18, 1
        %s4027 = smul.addr %s4026, 8
        %s4028 = scalar_lea.vmem %s5, %s4027
        // Predicated region
        $region49: #{mi_modelo_forward.2} parent=39 // pred_check
          %p4029 = pneg %p146
        $region50: #{mi_modelo_forward.2} parent=39 // pred_check_branch
          %4031 = sbr.rel (%p4029) target = $region52
        $region51: #{mi_modelo_forward.2} parent=39 // pred_region
          _
        $region52: #{mi_modelo_forward.2} parent=39 // pred_fallthru
          _
      $region40: #{mi_modelo_forward.2} parent=5 // pred_fallthru
        _
      %p4032 = scmp.le.s32.totalorder 2, %s13
      // Predicated region
      $region53: #{mi_modelo_forward.2} parent=5 // pred_check
        %p4033 = pneg %p4032
      $region54: #{mi_modelo_forward.2} parent=5 // pred_check_branch
        %4035 = sbr.rel (%p4033) target = $region56
      $region55: #{mi_modelo_forward.2} parent=5 // pred_region
        %s4036 = ssub.s32 %s13, 2
        // Predicated region
        $region57: #{mi_modelo_forward.2} parent=55 // pred_check
          %p4037 = pneg %p152
        $region58: #{mi_modelo_forward.2} parent=55 // pred_check_branch
          %4039 = sbr.rel (%p4037) target = $region60
        $region59: #{mi_modelo_forward.2} parent=55 // pred_region
          %p4040 = scmp.lt.s32.totalorder %s19, 1
          %s4041 = scalar_select %p4040, %s19, 1
          %s4042 = smul.addr %s4041, 8
          %s4043 = scalar_lea.vmem %s5, %s4042
        $region60: #{mi_modelo_forward.2} parent=55 // pred_fallthru
          _
      $region56: #{mi_modelo_forward.2} parent=5 // pred_fallthru
        _
    $region6: #{mi_modelo_forward.2} parent=1 // loop_footer
      %s17 = sadd.s32 1, %s13
    $region7: #{mi_modelo_forward.2} parent=1 // loop_footer_branch
      %12 = sbr.rel target = $region3
    $region8: #{mi_modelo_forward.2} parent=1 // loop_exit
      _
    %4044 = vsyncpa [#allocation3], 1
    %s4045 = scalar_lea.sflag [#allocation3], 1
    %4046 = vsyncpa %s4045, 1
    %4047 = vsyncpa [#allocation5], 1

</llo_original>
